<compile_context>
chip_gen: v7x
topology: tpu7x:2x2x1
jax: 0.10.0
libtpu: 0.0.40
codegen_flags: <defaults>
</compile_context>

<pallas_src>
import math
import functools

import jax
import jax.numpy as jnp
from jax import lax
from jax.experimental import pallas as pl
from jax.experimental.pallas import tpu as pltpu


def _layernorm(z, g, b, eps=1e-5):
    mu = jnp.mean(z, axis=-1, keepdims=True)
    var = jnp.mean((z - mu) ** 2, axis=-1, keepdims=True)
    return (z - mu) * lax.rsqrt(var + eps) * g + b


def waveform_transformer_kernel(
    x_ref, pe_ref, w_in_ref, b_in_ref,
    wqkv_ref, wo_ref, w1_ref, w2_ref, vec_ref,
    lng_ref, lnb_ref, wcls_ref, bcls_ref,
    out_ref, h_ref,
    *, block_s, bsz, num_heads,
):
    l = pl.program_id(1)
    n_layers = pl.num_programs(1)
    D = w_in_ref.shape[1]
    Hd = w1_ref.shape[2]
    H = num_heads
    dh = D // H
    R = block_s * bsz
    bf16 = jnp.bfloat16
    f32 = jnp.float32

    # ---- first layer step: input projection (Linear(1,D)) + positional encoding ----
    @pl.when(l == 0)
    def _init():
        x = x_ref[0]                                            # (block_s, bsz)
        h0 = (x[:, :, None] * w_in_ref[...][None, :, :]
              + b_in_ref[...][None, :, :]
              + pe_ref[0][:, None, :])                          # (block_s, bsz, D)
        h_ref[...] = h0.reshape(R, D)

    h = h_ref[...]                                              # (R, D) f32, row = s*bsz + b

    # packed per-layer vectors (single DMA per layer): rows = [bqkv,bo,b1,b2,g1,be1,g2,be2]
    vecs = vec_ref[0]                                           # (8, P) f32
    bqkv = vecs[0:1, :3 * D]
    bo   = vecs[1:2, :D]
    b1   = vecs[2:3, :Hd]
    b2   = vecs[3:4, :D]
    g1   = vecs[4:5, :D]
    be1  = vecs[5:6, :D]
    g2   = vecs[6:7, :D]
    be2  = vecs[7:8, :D]

    # ---- multi-head self-attention (post-norm TransformerEncoderLayer) ----
    # 1/sqrt(dh) is folded into the Q columns of wqkv / bqkv on the host.
    qkv = jnp.dot(h.astype(bf16), wqkv_ref[0], preferred_element_type=f32) + bqkv
    qkv_b = qkv.astype(bf16).reshape(block_s, bsz, 3 * D)       # single cast of largest temp
    wo = wo_ref[0]                                              # (D, D) bf16

    attn = None
    for hh in range(H):                                         # small static loop over heads
        c0 = hh * dh
        q = qkv_b[:, :, c0:c0 + dh]                             # bf16 lane-slices (no casts)
        k = qkv_b[:, :, D + c0:D + c0 + dh]
        v = qkv_b[:, :, 2 * D + c0:2 * D + c0 + dh]
        sc = jnp.einsum("sbe,sce->sbc", q, k,
                        preferred_element_type=f32)             # (block_s, bsz, bsz)
        sc = sc - jnp.max(sc, axis=-1, keepdims=True)
        p = jnp.exp(sc)
        p = p * pl.reciprocal(jnp.sum(p, axis=-1, keepdims=True), approx=True)
        ctx = jnp.einsum("sbc,sce->sbe", p.astype(bf16), v,
                         preferred_element_type=f32)            # (block_s, bsz, dh)
        # project through this head's rows of W_o and accumulate (== concat(ctx) @ W_o,
        # without the lane-axis concatenate / relayout).
        part = jnp.dot(ctx.reshape(R, dh).astype(bf16), wo[c0:c0 + dh, :],
                       preferred_element_type=f32)              # (R, D)
        attn = part if attn is None else attn + part
    attn = attn + bo
    h = _layernorm(h + attn, g1, be1)

    # ---- feed forward ----
    ff = jnp.dot(h.astype(bf16), w1_ref[0], preferred_element_type=f32) + b1
    ff = jnp.maximum(ff, 0.0)
    ff = jnp.dot(ff.astype(bf16), w2_ref[0], preferred_element_type=f32) + b2
    h = _layernorm(h + ff, g2, be2)
    h_ref[...] = h

    # ---- last layer step: final LayerNorm + classifier (sum over s folded first) ----
    @pl.when(l == n_layers - 1)
    def _final():
        z = _layernorm(h, lng_ref[...], lnb_ref[...])           # (R, D)
        zsum = jnp.sum(z.reshape(block_s, bsz, D), axis=0)      # (bsz, D)
        logits = (jnp.dot(zsum.astype(bf16), wcls_ref[...],
                          preferred_element_type=f32)
                  + block_s * bcls_ref[...])                    # (bsz, C), partial over this s-block
        out_ref[...] = logits.reshape(1, bsz, logits.shape[-1]).astype(out_ref.dtype)


def _auto_config(S, B, D, Hd, H, C):
    """Per-TPU-generation (block_s, vmem_limit_bytes)."""
    kind = ""
    try:
        kind = jax.devices()[0].device_kind.lower()
    except Exception:
        pass
    if ("v7" in kind) or ("7x" in kind):
        vmem_cap = 40 * 1024 * 1024   # 64 MiB/TC physical -> leave headroom
        min_nsb = 2                   # keep >=2 s-blocks so the 'parallel' axis feeds both TCs
    elif ("v6" in kind) or ("v5" in kind):
        vmem_cap = 64 * 1024 * 1024   # 128 MiB physical -> allow big blocks, prefer nsb=1
        min_nsb = 1
    else:
        vmem_cap = 32 * 1024 * 1024   # conservative default for unknown chips
        min_nsb = 1

    P = max(3 * D, Hd)

    def vmem_bytes(block_s):
        R = block_s * B
        wts = 2 * (2 * (3 * D * D + D * D + 2 * D * Hd) + 4 * 8 * P)     # dbl-buffered layer params
        io = 2 * 4 * (block_s * B + block_s * D) + 2 * 4 * B * C
        scratch = 4 * R * D
        # rough peak of transients: qkv f32+bf16, scores, ffn, layernorm temps
        act = R * 3 * D * 6 + 8 * block_s * H * B * B + R * Hd * 6 + 16 * R * D
        return wts + io + scratch + act

    block_s = 1
    for nsb in range(1, S + 1):
        if (S % nsb) or (nsb < min_nsb):
            continue
        block_s = S // nsb
        if vmem_bytes(block_s) <= vmem_cap:
            break
    return block_s, vmem_cap


def waveform_transformer(x, params, num_heads, *, block_s=None, vmem_limit_bytes=None):
    """x: (B, S) float32 waveform.  Returns (B, num_classes)."""
    B, S = x.shape
    D = params["w_in"].shape[1]
    Hd = params["w1"].shape[2]
    L = params["wqkv"].shape[0]
    C = params["w_cls"].shape[1]
    dh = D // num_heads
    scale = 1.0 / math.sqrt(dh)

    auto_bs, auto_vmem = _auto_config(S, B, D, Hd, num_heads, C)
    if block_s is None:
        block_s = auto_bs
    if vmem_limit_bytes is None:
        vmem_limit_bytes = auto_vmem
    assert S % block_s == 0
    nsb = S // block_s

    bf16 = jnp.bfloat16

    # ---- one-time host-side param prep (outside the hot path) ----
    # fold the 1/sqrt(dh) attention scale into the Q columns of the QKV projection
    wqkv = params["wqkv"].at[:, :, :D].multiply(scale).astype(bf16)
    bqkv = params["bqkv"].at[:, :, :D].multiply(scale)

    # pack the 8 small per-layer vectors into one (L, 8, P) slab -> 1 DMA/layer instead of 8
    P = max(3 * D, Hd)

    def _row(a):
        a2 = a.reshape(L, -1).astype(jnp.float32)
        return jnp.pad(a2, ((0, 0), (0, P - a2.shape[-1])))

    vecs = jnp.stack([_row(bqkv), _row(params["bo"]), _row(params["b1"]),
                      _row(params["b2"]), _row(params["g1"]), _row(params["be1"]),
                      _row(params["g2"]), _row(params["be2"])], axis=1)     # (L, 8, P)

    # glue (host-side reshapes only): s-major blocks of the (S, B) layout; pe stays (S, D)
    x_t = jnp.transpose(x).reshape(nsb, block_s, B).astype(jnp.float32)
    pe = params["pe"][:S].reshape(nsb, block_s, D).astype(jnp.float32)

    args = (x_t, pe, params["w_in"], params["b_in"],
            wqkv, params["wo"].astype(bf16),
            params["w1"].astype(bf16), params["w2"].astype(bf16),
            vecs,
            params["lng"], params["lnb"],
            params["w_cls"].astype(bf16), params["b_cls"])

    in_specs = [
        pl.BlockSpec((1, block_s, B), lambda sb, l: (sb, 0, 0)),   # x (s-block)
        pl.BlockSpec((1, block_s, D), lambda sb, l: (sb, 0, 0)),   # pe (s-block)
        pl.BlockSpec((1, D), lambda sb, l: (0, 0)),                # w_in
        pl.BlockSpec((1, D), lambda sb, l: (0, 0)),                # b_in
        pl.BlockSpec((1, D, 3 * D), lambda sb, l: (l, 0, 0)),      # wqkv  (streamed per layer)
        pl.BlockSpec((1, D, D), lambda sb, l: (l, 0, 0)),          # wo
        pl.BlockSpec((1, D, Hd), lambda sb, l: (l, 0, 0)),         # w1
        pl.BlockSpec((1, Hd, D), lambda sb, l: (l, 0, 0)),         # w2
        pl.BlockSpec((1, 8, P), lambda sb, l: (l, 0, 0)),          # packed per-layer vectors
        pl.BlockSpec((1, D), lambda sb, l: (0, 0)),                # lng
        pl.BlockSpec((1, D), lambda sb, l: (0, 0)),                # lnb
        pl.BlockSpec((D, C), lambda sb, l: (0, 0)),                # w_cls
        pl.BlockSpec((1, C), lambda sb, l: (0, 0)),                # b_cls
    ]
    out_spec = pl.BlockSpec((1, B, C), lambda sb, l: (sb, 0, 0))

    kernel = functools.partial(waveform_transformer_kernel,
                               block_s=block_s, bsz=B, num_heads=num_heads)

    partial_logits = pl.pallas_call(
        kernel,
        out_shape=jax.ShapeDtypeStruct((nsb, B, C), jnp.float32),
        grid_spec=pltpu.PrefetchScalarGridSpec(
            num_scalar_prefetch=0,
            grid=(nsb, L),
            in_specs=in_specs,
            out_specs=out_spec,
            scratch_shapes=[pltpu.VMEM((block_s * B, D), jnp.float32)],
        ),
        compiler_params=pltpu.CompilerParams(
            dimension_semantics=("parallel", "arbitrary"),
            vmem_limit_bytes=int(vmem_limit_bytes),
        ),
    )(*args)

    # tiny epilogue: combine per-s-block partial logits, then ReLU (must follow the full sum)
    return jnp.maximum(jnp.sum(partial_logits, axis=0), 0.0)


def reference_forward(x, params, num_heads):
    """Pure-JAX f32 reference mirroring the PyTorch eval-mode forward."""
    B, S = x.shape
    D = params["w_in"].shape[1]
    L = params["wqkv"].shape[0]
    H = num_heads
    dh = D // H
    h = x[:, :, None] * params["w_in"][0] + params["b_in"][0]          # (B, S, D)
    h = h + params["pe"][:S][None, :, :]
    for l in range(L):
        qkv = h @ params["wqkv"][l] + params["bqkv"][l][0]             # (B, S, 3D)
        q, k, v = qkv[..., :D], qkv[..., D:2 * D], qkv[..., 2 * D:]
        qh = q.reshape(B, S, H, dh)
        kh = k.reshape(B, S, H, dh)
        vh = v.reshape(B, S, H, dh)
        sc = jnp.einsum("bshe,cshe->shbc", qh, kh) / math.sqrt(dh)     # attn over dim 0 (=B)
        p = jax.nn.softmax(sc, axis=-1)
        ctx = jnp.einsum("shbc,cshe->bshe", p, vh).reshape(B, S, D)
        attn = ctx @ params["wo"][l] + params["bo"][l][0]
        h = _layernorm(h + attn, params["g1"][l][0], params["be1"][l][0])
        ff = jnp.maximum(h @ params["w1"][l] + params["b1"][l][0], 0.0)
        ff = ff @ params["w2"][l] + params["b2"][l][0]
        h = _layernorm(h + ff, params["g2"][l][0], params["be2"][l][0])
    z = _layernorm(h, params["lng"][0], params["lnb"][0])
    logits = z @ params["w_cls"] + params["b_cls"][0]                  # (B, S, C)
    return jnp.maximum(logits.sum(axis=1), 0.0)


def init_params(key, *, d_model, num_layers, hidden_dim, num_classes, max_len):
    ks = iter(jax.random.split(key, 16))

    def nrm(shape, sc=0.05):
        return sc * jax.random.normal(next(ks), shape, jnp.float32)

    L, D, H = num_layers, d_model, hidden_dim
    p = {}
    # input_projection = nn.Linear(1, d_model); weights stored pre-transposed
    p["w_in"] = nrm((1, D))
    p["b_in"] = nrm((1, D))
    # positional encoding table (sin/cos), identical to PositionalEncoding
    pos = jnp.arange(max_len, dtype=jnp.float32)[:, None]
    div = jnp.exp(jnp.arange(0, D, 2, dtype=jnp.float32) * (-math.log(10000.0) / D))
    pe = jnp.zeros((max_len, D), jnp.float32)
    pe = pe.at[:, 0::2].set(jnp.sin(pos * div))
    pe = pe.at[:, 1::2].set(jnp.cos(pos * div))
    p["pe"] = pe
    # per-layer TransformerEncoderLayer params, stacked on a leading layer dim
    p["wqkv"] = nrm((L, D, 3 * D))     # in_proj_weight^T
    p["bqkv"] = nrm((L, 1, 3 * D))
    p["wo"] = nrm((L, D, D))           # out_proj.weight^T
    p["bo"] = nrm((L, 1, D))
    p["w1"] = nrm((L, D, H))           # linear1.weight^T
    p["b1"] = nrm((L, 1, H))
    p["w2"] = nrm((L, H, D))           # linear2.weight^T
    p["b2"] = nrm((L, 1, D))
    p["g1"] = jnp.ones((L, 1, D), jnp.float32)
    p["be1"] = jnp.zeros((L, 1, D), jnp.float32)
    p["g2"] = jnp.ones((L, 1, D), jnp.float32)
    p["be2"] = jnp.zeros((L, 1, D), jnp.float32)
    # final LayerNorm + peak_finding_classifier
    p["lng"] = jnp.ones((1, D), jnp.float32)
    p["lnb"] = jnp.zeros((1, D), jnp.float32)
    p["w_cls"] = nrm((D, num_classes))
    p["b_cls"] = nrm((1, num_classes))
    return p


if __name__ == "__main__":
    B, S = 2, 8
    d_model, num_heads, num_layers = 32, 4, 2
    hidden_dim, num_classes, max_len = 64, 4, 16
    # TODO(synk): for production configs pad d_model / hidden_dim to multiples of 128 on the
    # host — with D=32 every vector op is 4x lane-padded regardless of kernel structure.

    key = jax.random.PRNGKey(0)
    pkey, xkey = jax.random.split(key)
    params = init_params(pkey, d_model=d_model, num_layers=num_layers,
                         hidden_dim=hidden_dim, num_classes=num_classes,
                         max_len=max_len)
    x = jax.random.normal(xkey, (B, S), jnp.float32)

    ref = reference_forward(x, params, num_heads)

    # 1) auto-configured path (per-generation block_s / VMEM cap)
    out_auto = jax.block_until_ready(waveform_transformer(x, params, num_heads))
    # 2) forced block_s=4 -> 2 s-blocks: exercises the "parallel" s-block axis + partial sums
    out_blk = jax.block_until_ready(waveform_transformer(x, params, num_heads, block_s=4))

    for out in (out_auto, out_blk):
        assert out.shape == (B, num_classes), out.shape
        assert bool(jnp.all(out >= 0.0))   # relu output
        err = float(jnp.max(jnp.abs(out - ref)))
        assert bool(jnp.allclose(out, ref, rtol=5e-2, atol=5e-2)), f"max abs err {err}"
    print("KERNEL_OK")
</pallas_src>

<mosaic_0001>
module attributes {stable_mosaic.version = 11 : i64} {
  func.func @waveform_transformer_kernel(%arg0: i32, %arg1: i32, %arg2: memref<1x8x2xf32, #tpu.memory_space<vmem>>, %arg3: memref<1x8x32xf32, #tpu.memory_space<vmem>>, %arg4: memref<1x32xf32, #tpu.memory_space<vmem>>, %arg5: memref<1x32xf32, #tpu.memory_space<vmem>>, %arg6: memref<1x32x96xbf16, #tpu.memory_space<vmem>>, %arg7: memref<1x32x32xbf16, #tpu.memory_space<vmem>>, %arg8: memref<1x32x64xbf16, #tpu.memory_space<vmem>>, %arg9: memref<1x64x32xbf16, #tpu.memory_space<vmem>>, %arg10: memref<1x8x96xf32, #tpu.memory_space<vmem>>, %arg11: memref<1x32xf32, #tpu.memory_space<vmem>>, %arg12: memref<1x32xf32, #tpu.memory_space<vmem>>, %arg13: memref<32x4xbf16, #tpu.memory_space<vmem>>, %arg14: memref<1x4xf32, #tpu.memory_space<vmem>>, %arg15: memref<1x2x4xf32, #tpu.memory_space<vmem>>, %arg16: memref<16x32xf32, #tpu.memory_space<vmem>>) attributes {dimension_semantics = [#tpu.dimension_semantics<parallel>, #tpu.dimension_semantics<arbitrary>], iteration_bounds = array<i64: 1, 2>, scalar_prefetch = 0 : i64, scratch_operands = 1 : i64, tpu.core_type = #tpu.core_type<tc>, window_params = [{transform_indices = @transform_0, window_bounds = array<i64: 1, 8, 2>}, {transform_indices = @transform_1, window_bounds = array<i64: 1, 8, 32>}, {pipeline_mode = #tpu.pipeline_mode<synchronous>, transform_indices = @transform_2, window_bounds = array<i64: 1, 32>}, {pipeline_mode = #tpu.pipeline_mode<synchronous>, transform_indices = @transform_3, window_bounds = array<i64: 1, 32>}, {transform_indices = @transform_4, window_bounds = array<i64: 1, 32, 96>}, {transform_indices = @transform_5, window_bounds = array<i64: 1, 32, 32>}, {transform_indices = @transform_6, window_bounds = array<i64: 1, 32, 64>}, {transform_indices = @transform_7, window_bounds = array<i64: 1, 64, 32>}, {transform_indices = @transform_8, window_bounds = array<i64: 1, 8, 96>}, {pipeline_mode = #tpu.pipeline_mode<synchronous>, transform_indices = @transform_9, window_bounds = array<i64: 1, 32>}, {pipeline_mode = #tpu.pipeline_mode<synchronous>, transform_indices = @transform_10, window_bounds = array<i64: 1, 32>}, {pipeline_mode = #tpu.pipeline_mode<synchronous>, transform_indices = @transform_11, window_bounds = array<i64: 32, 4>}, {pipeline_mode = #tpu.pipeline_mode<synchronous>, transform_indices = @transform_12, window_bounds = array<i64: 1, 4>}, {transform_indices = @transform_13, window_bounds = array<i64: 1, 2, 4>}]} {
    %c0_i32 = arith.constant 0 : i32
    %0 = arith.cmpi eq, %arg1, %c0_i32 : i32
    %1 = arith.extui %0 : i1 to i32
    %c0_i32_0 = arith.constant 0 : i32
    %2 = arith.cmpi ne, %1, %c0_i32_0 : i32
    scf.if %2 {
      %c0_53 = arith.constant 0 : index
      %c0_54 = arith.constant 0 : index
      %c0_55 = arith.constant 0 : index
      %173 = vector.load %arg2[%c0_53, %c0_54, %c0_55] : memref<1x8x2xf32, #tpu.memory_space<vmem>>, vector<1x8x2xf32>
      %174 = vector.shape_cast %173 : vector<1x8x2xf32> to vector<8x2xf32>
      %175 = vector.shape_cast %174 : vector<8x2xf32> to vector<8x2x1xf32>
      %c0_56 = arith.constant 0 : index
      %c0_57 = arith.constant 0 : index
      %176 = vector.load %arg4[%c0_56, %c0_57] : memref<1x32xf32, #tpu.memory_space<vmem>>, vector<1x32xf32>
      %177 = vector.shape_cast %176 : vector<1x32xf32> to vector<1x1x32xf32>
      %178 = vector.broadcast %175 : vector<8x2x1xf32> to vector<8x2x32xf32>
      %179 = vector.broadcast %177 : vector<1x1x32xf32> to vector<8x2x32xf32>
      %180 = arith.mulf %178, %179 : vector<8x2x32xf32>
      %c0_58 = arith.constant 0 : index
      %c0_59 = arith.constant 0 : index
      %181 = vector.load %arg5[%c0_58, %c0_59] : memref<1x32xf32, #tpu.memory_space<vmem>>, vector<1x32xf32>
      %182 = vector.shape_cast %181 : vector<1x32xf32> to vector<1x1x32xf32>
      %183 = vector.broadcast %182 : vector<1x1x32xf32> to vector<8x2x32xf32>
      %184 = arith.addf %180, %183 : vector<8x2x32xf32>
      %c0_60 = arith.constant 0 : index
      %c0_61 = arith.constant 0 : index
      %c0_62 = arith.constant 0 : index
      %185 = vector.load %arg3[%c0_60, %c0_61, %c0_62] : memref<1x8x32xf32, #tpu.memory_space<vmem>>, vector<1x8x32xf32>
      %186 = vector.shape_cast %185 : vector<1x8x32xf32> to vector<8x32xf32>
      %187 = vector.shape_cast %186 : vector<8x32xf32> to vector<8x1x32xf32>
      %188 = vector.broadcast %187 : vector<8x1x32xf32> to vector<8x2x32xf32>
      %189 = arith.addf %184, %188 : vector<8x2x32xf32>
      %190 = vector.shape_cast %189 : vector<8x2x32xf32> to vector<16x32xf32>
      %c0_63 = arith.constant 0 : index
      %c0_64 = arith.constant 0 : index
      %191 = vector.load %arg16[%c0_63, %c0_64] : memref<16x32xf32, #tpu.memory_space<vmem>>, vector<16x32xf32>
      tpu.vector_store %arg16[%c0_63, %c0_64], %190 {strides = array<i32>} : memref<16x32xf32, #tpu.memory_space<vmem>>, vector<16x32xf32>,
    } else {
    }
    %c0 = arith.constant 0 : index
    %c0_1 = arith.constant 0 : index
    %3 = vector.load %arg16[%c0, %c0_1] : memref<16x32xf32, #tpu.memory_space<vmem>>, vector<16x32xf32>
    %c0_2 = arith.constant 0 : index
    %c0_3 = arith.constant 0 : index
    %c0_4 = arith.constant 0 : index
    %4 = vector.load %arg10[%c0_2, %c0_3, %c0_4] : memref<1x8x96xf32, #tpu.memory_space<vmem>>, vector<1x8x96xf32>
    %5 = vector.shape_cast %4 : vector<1x8x96xf32> to vector<8x96xf32>
    %6 = vector.extract_strided_slice %5 {offsets = [0, 0], sizes = [1, 96], strides = [1, 1]} : vector<8x96xf32> to vector<1x96xf32>
    %7 = vector.extract_strided_slice %5 {offsets = [1, 0], sizes = [1, 32], strides = [1, 1]} : vector<8x96xf32> to vector<1x32xf32>
    %8 = vector.extract_strided_slice %5 {offsets = [2, 0], sizes = [1, 64], strides = [1, 1]} : vector<8x96xf32> to vector<1x64xf32>
    %9 = vector.extract_strided_slice %5 {offsets = [3, 0], sizes = [1, 32], strides = [1, 1]} : vector<8x96xf32> to vector<1x32xf32>
    %10 = vector.extract_strided_slice %5 {offsets = [4, 0], sizes = [1, 32], strides = [1, 1]} : vector<8x96xf32> to vector<1x32xf32>
    %11 = vector.extract_strided_slice %5 {offsets = [5, 0], sizes = [1, 32], strides = [1, 1]} : vector<8x96xf32> to vector<1x32xf32>
    %12 = vector.extract_strided_slice %5 {offsets = [6, 0], sizes = [1, 32], strides = [1, 1]} : vector<8x96xf32> to vector<1x32xf32>
    %13 = vector.extract_strided_slice %5 {offsets = [7, 0], sizes = [1, 32], strides = [1, 1]} : vector<8x96xf32> to vector<1x32xf32>
    %14 = arith.truncf %3 : vector<16x32xf32> to vector<16x32xbf16>
    %c0_5 = arith.constant 0 : index
    %c0_6 = arith.constant 0 : index
    %c0_7 = arith.constant 0 : index
    %15 = vector.load %arg6[%c0_5, %c0_6, %c0_7] : memref<1x32x96xbf16, #tpu.memory_space<vmem>>, vector<1x32x96xbf16>
    %16 = vector.shape_cast %15 : vector<1x32x96xbf16> to vector<32x96xbf16>
    %cst = arith.constant dense<0.000000e+00> : vector<16x96xf32>
    %17 = tpu.matmul %14, %16, %cst {dimension_numbers = #tpu.dot_dimension_numbers<[1], [0], [0], [1], [0, 0, 1, 1], [], []>} : vector<16x32xbf16>, vector<32x96xbf16>, vector<16x96xf32> -> vector<16x96xf32>
    %18 = vector.broadcast %6 : vector<1x96xf32> to vector<16x96xf32>
    %19 = arith.addf %17, %18 : vector<16x96xf32>
    %20 = arith.truncf %19 : vector<16x96xf32> to vector<16x96xbf16>
    %21 = vector.shape_cast %20 : vector<16x96xbf16> to vector<8x2x96xbf16>
    %c0_8 = arith.constant 0 : index
    %c0_9 = arith.constant 0 : index
    %c0_10 = arith.constant 0 : index
    %22 = vector.load %arg7[%c0_8, %c0_9, %c0_10] : memref<1x32x32xbf16, #tpu.memory_space<vmem>>, vector<1x32x32xbf16>
    %23 = vector.shape_cast %22 : vector<1x32x32xbf16> to vector<32x32xbf16>
    %24 = vector.extract_strided_slice %21 {offsets = [0, 0, 0], sizes = [8, 2, 8], strides = [1, 1, 1]} : vector<8x2x96xbf16> to vector<8x2x8xbf16>
    %25 = vector.extract_strided_slice %21 {offsets = [0, 0, 32], sizes = [8, 2, 8], strides = [1, 1, 1]} : vector<8x2x96xbf16> to vector<8x2x8xbf16>
    %26 = vector.extract_strided_slice %21 {offsets = [0, 0, 64], sizes = [8, 2, 8], strides = [1, 1, 1]} : vector<8x2x96xbf16> to vector<8x2x8xbf16>
    "tpu.trace_start"() <{level = 10 : i32, message = "sbe,sce->sbc"}> : () -> ()
    %cst_11 = arith.constant dense<0.000000e+00> : vector<8x2x2xf32>
    %27 = tpu.matmul %24, %25, %cst_11 {dimension_numbers = #tpu.dot_dimension_numbers<[2], [2], [1], [1], [0, 0, 0, 1, 1, 1], [0], [0]>} : vector<8x2x8xbf16>, vector<8x2x8xbf16>, vector<8x2x2xf32> -> vector<8x2x2xf32>
    "tpu.trace_stop"() : () -> ()
    %cst_12 = arith.constant dense<0xFF800000> : vector<8x2xf32>
    %28 = vector.multi_reduction <maximumf>, %27, %cst_12 [2] : vector<8x2x2xf32> to vector<8x2xf32>
    %29 = vector.shape_cast %28 : vector<8x2xf32> to vector<8x2x1xf32>
    %30 = vector.broadcast %29 : vector<8x2x1xf32> to vector<8x2x2xf32>
    %31 = arith.subf %27, %30 : vector<8x2x2xf32>
    %32 = math.exp %31 : vector<8x2x2xf32>
    %cst_13 = arith.constant dense<0.000000e+00> : vector<8x2xf32>
    %33 = vector.multi_reduction <add>, %32, %cst_13 [2] : vector<8x2x2xf32> to vector<8x2xf32>
    %34 = vector.shape_cast %33 : vector<8x2xf32> to vector<8x2x1xf32>
    %35 = tpu.reciprocal %34 {approx = true} : vector<8x2x1xf32> -> vector<8x2x1xf32>
    %36 = vector.broadcast %35 : vector<8x2x1xf32> to vector<8x2x2xf32>
    %37 = arith.mulf %32, %36 : vector<8x2x2xf32>
    %38 = arith.truncf %37 : vector<8x2x2xf32> to vector<8x2x2xbf16>
    "tpu.trace_start"() <{level = 10 : i32, message = "sbc,sce->sbe"}> : () -> ()
    %cst_14 = arith.constant dense<0.000000e+00> : vector<8x2x8xf32>
    %39 = tpu.matmul %38, %26, %cst_14 {dimension_numbers = #tpu.dot_dimension_numbers<[2], [1], [1], [2], [0, 0, 0, 1, 1, 2], [0], [0]>} : vector<8x2x2xbf16>, vector<8x2x8xbf16>, vector<8x2x8xf32> -> vector<8x2x8xf32>
    "tpu.trace_stop"() : () -> ()
    %40 = vector.shape_cast %39 : vector<8x2x8xf32> to vector<16x8xf32>
    %41 = arith.truncf %40 : vector<16x8xf32> to vector<16x8xbf16>
    %42 = vector.extract_strided_slice %23 {offsets = [0, 0], sizes = [8, 32], strides = [1, 1]} : vector<32x32xbf16> to vector<8x32xbf16>
    %cst_15 = arith.constant dense<0.000000e+00> : vector<16x32xf32>
    %43 = tpu.matmul %41, %42, %cst_15 {dimension_numbers = #tpu.dot_dimension_numbers<[1], [0], [0], [1], [0, 0, 1, 1], [], []>} : vector<16x8xbf16>, vector<8x32xbf16>, vector<16x32xf32> -> vector<16x32xf32>
    %44 = vector.extract_strided_slice %21 {offsets = [0, 0, 8], sizes = [8, 2, 8], strides = [1, 1, 1]} : vector<8x2x96xbf16> to vector<8x2x8xbf16>
    %45 = vector.extract_strided_slice %21 {offsets = [0, 0, 40], sizes = [8, 2, 8], strides = [1, 1, 1]} : vector<8x2x96xbf16> to vector<8x2x8xbf16>
    %46 = vector.extract_strided_slice %21 {offsets = [0, 0, 72], sizes = [8, 2, 8], strides = [1, 1, 1]} : vector<8x2x96xbf16> to vector<8x2x8xbf16>
    "tpu.trace_start"() <{level = 10 : i32, message = "sbe,sce->sbc"}> : () -> ()
    %cst_16 = arith.constant dense<0.000000e+00> : vector<8x2x2xf32>
    %47 = tpu.matmul %44, %45, %cst_16 {dimension_numbers = #tpu.dot_dimension_numbers<[2], [2], [1], [1], [0, 0, 0, 1, 1, 1], [0], [0]>} : vector<8x2x8xbf16>, vector<8x2x8xbf16>, vector<8x2x2xf32> -> vector<8x2x2xf32>
    "tpu.trace_stop"() : () -> ()
    %cst_17 = arith.constant dense<0xFF800000> : vector<8x2xf32>
    %48 = vector.multi_reduction <maximumf>, %47, %cst_17 [2] : vector<8x2x2xf32> to vector<8x2xf32>
    %49 = vector.shape_cast %48 : vector<8x2xf32> to vector<8x2x1xf32>
    %50 = vector.broadcast %49 : vector<8x2x1xf32> to vector<8x2x2xf32>
    %51 = arith.subf %47, %50 : vector<8x2x2xf32>
    %52 = math.exp %51 : vector<8x2x2xf32>
    %cst_18 = arith.constant dense<0.000000e+00> : vector<8x2xf32>
    %53 = vector.multi_reduction <add>, %52, %cst_18 [2] : vector<8x2x2xf32> to vector<8x2xf32>
    %54 = vector.shape_cast %53 : vector<8x2xf32> to vector<8x2x1xf32>
    %55 = tpu.reciprocal %54 {approx = true} : vector<8x2x1xf32> -> vector<8x2x1xf32>
    %56 = vector.broadcast %55 : vector<8x2x1xf32> to vector<8x2x2xf32>
    %57 = arith.mulf %52, %56 : vector<8x2x2xf32>
    %58 = arith.truncf %57 : vector<8x2x2xf32> to vector<8x2x2xbf16>
    "tpu.trace_start"() <{level = 10 : i32, message = "sbc,sce->sbe"}> : () -> ()
    %cst_19 = arith.constant dense<0.000000e+00> : vector<8x2x8xf32>
    %59 = tpu.matmul %58, %46, %cst_19 {dimension_numbers = #tpu.dot_dimension_numbers<[2], [1], [1], [2], [0, 0, 0, 1, 1, 2], [0], [0]>} : vector<8x2x2xbf16>, vector<8x2x8xbf16>, vector<8x2x8xf32> -> vector<8x2x8xf32>
    "tpu.trace_stop"() : () -> ()
    %60 = vector.shape_cast %59 : vector<8x2x8xf32> to vector<16x8xf32>
    %61 = arith.truncf %60 : vector<16x8xf32> to vector<16x8xbf16>
    %62 = vector.extract_strided_slice %23 {offsets = [8, 0], sizes = [8, 32], strides = [1, 1]} : vector<32x32xbf16> to vector<8x32xbf16>
    %cst_20 = arith.constant dense<0.000000e+00> : vector<16x32xf32>
    %63 = tpu.matmul %61, %62, %cst_20 {dimension_numbers = #tpu.dot_dimension_numbers<[1], [0], [0], [1], [0, 0, 1, 1], [], []>} : vector<16x8xbf16>, vector<8x32xbf16>, vector<16x32xf32> -> vector<16x32xf32>
    %64 = arith.addf %43, %63 : vector<16x32xf32>
    %65 = vector.extract_strided_slice %21 {offsets = [0, 0, 16], sizes = [8, 2, 8], strides = [1, 1, 1]} : vector<8x2x96xbf16> to vector<8x2x8xbf16>
    %66 = vector.extract_strided_slice %21 {offsets = [0, 0, 48], sizes = [8, 2, 8], strides = [1, 1, 1]} : vector<8x2x96xbf16> to vector<8x2x8xbf16>
    %67 = vector.extract_strided_slice %21 {offsets = [0, 0, 80], sizes = [8, 2, 8], strides = [1, 1, 1]} : vector<8x2x96xbf16> to vector<8x2x8xbf16>
    "tpu.trace_start"() <{level = 10 : i32, message = "sbe,sce->sbc"}> : () -> ()
    %cst_21 = arith.constant dense<0.000000e+00> : vector<8x2x2xf32>
    %68 = tpu.matmul %65, %66, %cst_21 {dimension_numbers = #tpu.dot_dimension_numbers<[2], [2], [1], [1], [0, 0, 0, 1, 1, 1], [0], [0]>} : vector<8x2x8xbf16>, vector<8x2x8xbf16>, vector<8x2x2xf32> -> vector<8x2x2xf32>
    "tpu.trace_stop"() : () -> ()
    %cst_22 = arith.constant dense<0xFF800000> : vector<8x2xf32>
    %69 = vector.multi_reduction <maximumf>, %68, %cst_22 [2] : vector<8x2x2xf32> to vector<8x2xf32>
    %70 = vector.shape_cast %69 : vector<8x2xf32> to vector<8x2x1xf32>
    %71 = vector.broadcast %70 : vector<8x2x1xf32> to vector<8x2x2xf32>
    %72 = arith.subf %68, %71 : vector<8x2x2xf32>
    %73 = math.exp %72 : vector<8x2x2xf32>
    %cst_23 = arith.constant dense<0.000000e+00> : vector<8x2xf32>
    %74 = vector.multi_reduction <add>, %73, %cst_23 [2] : vector<8x2x2xf32> to vector<8x2xf32>
    %75 = vector.shape_cast %74 : vector<8x2xf32> to vector<8x2x1xf32>
    %76 = tpu.reciprocal %75 {approx = true} : vector<8x2x1xf32> -> vector<8x2x1xf32>
    %77 = vector.broadcast %76 : vector<8x2x1xf32> to vector<8x2x2xf32>
    %78 = arith.mulf %73, %77 : vector<8x2x2xf32>
    %79 = arith.truncf %78 : vector<8x2x2xf32> to vector<8x2x2xbf16>
    "tpu.trace_start"() <{level = 10 : i32, message = "sbc,sce->sbe"}> : () -> ()
    %cst_24 = arith.constant dense<0.000000e+00> : vector<8x2x8xf32>
    %80 = tpu.matmul %79, %67, %cst_24 {dimension_numbers = #tpu.dot_dimension_numbers<[2], [1], [1], [2], [0, 0, 0, 1, 1, 2], [0], [0]>} : vector<8x2x2xbf16>, vector<8x2x8xbf16>, vector<8x2x8xf32> -> vector<8x2x8xf32>
    "tpu.trace_stop"() : () -> ()
    %81 = vector.shape_cast %80 : vector<8x2x8xf32> to vector<16x8xf32>
    %82 = arith.truncf %81 : vector<16x8xf32> to vector<16x8xbf16>
    %83 = vector.extract_strided_slice %23 {offsets = [16, 0], sizes = [8, 32], strides = [1, 1]} : vector<32x32xbf16> to vector<8x32xbf16>
    %cst_25 = arith.constant dense<0.000000e+00> : vector<16x32xf32>
    %84 = tpu.matmul %82, %83, %cst_25 {dimension_numbers = #tpu.dot_dimension_numbers<[1], [0], [0], [1], [0, 0, 1, 1], [], []>} : vector<16x8xbf16>, vector<8x32xbf16>, vector<16x32xf32> -> vector<16x32xf32>
    %85 = arith.addf %64, %84 : vector<16x32xf32>
    %86 = vector.extract_strided_slice %21 {offsets = [0, 0, 24], sizes = [8, 2, 8], strides = [1, 1, 1]} : vector<8x2x96xbf16> to vector<8x2x8xbf16>
    %87 = vector.extract_strided_slice %21 {offsets = [0, 0, 56], sizes = [8, 2, 8], strides = [1, 1, 1]} : vector<8x2x96xbf16> to vector<8x2x8xbf16>
    %88 = vector.extract_strided_slice %21 {offsets = [0, 0, 88], sizes = [8, 2, 8], strides = [1, 1, 1]} : vector<8x2x96xbf16> to vector<8x2x8xbf16>
    "tpu.trace_start"() <{level = 10 : i32, message = "sbe,sce->sbc"}> : () -> ()
    %cst_26 = arith.constant dense<0.000000e+00> : vector<8x2x2xf32>
    %89 = tpu.matmul %86, %87, %cst_26 {dimension_numbers = #tpu.dot_dimension_numbers<[2], [2], [1], [1], [0, 0, 0, 1, 1, 1], [0], [0]>} : vector<8x2x8xbf16>, vector<8x2x8xbf16>, vector<8x2x2xf32> -> vector<8x2x2xf32>
    "tpu.trace_stop"() : () -> ()
    %cst_27 = arith.constant dense<0xFF800000> : vector<8x2xf32>
    %90 = vector.multi_reduction <maximumf>, %89, %cst_27 [2] : vector<8x2x2xf32> to vector<8x2xf32>
    %91 = vector.shape_cast %90 : vector<8x2xf32> to vector<8x2x1xf32>
    %92 = vector.broadcast %91 : vector<8x2x1xf32> to vector<8x2x2xf32>
    %93 = arith.subf %89, %92 : vector<8x2x2xf32>
    %94 = math.exp %93 : vector<8x2x2xf32>
    %cst_28 = arith.constant dense<0.000000e+00> : vector<8x2xf32>
    %95 = vector.multi_reduction <add>, %94, %cst_28 [2] : vector<8x2x2xf32> to vector<8x2xf32>
    %96 = vector.shape_cast %95 : vector<8x2xf32> to vector<8x2x1xf32>
    %97 = tpu.reciprocal %96 {approx = true} : vector<8x2x1xf32> -> vector<8x2x1xf32>
    %98 = vector.broadcast %97 : vector<8x2x1xf32> to vector<8x2x2xf32>
    %99 = arith.mulf %94, %98 : vector<8x2x2xf32>
    %100 = arith.truncf %99 : vector<8x2x2xf32> to vector<8x2x2xbf16>
    "tpu.trace_start"() <{level = 10 : i32, message = "sbc,sce->sbe"}> : () -> ()
    %cst_29 = arith.constant dense<0.000000e+00> : vector<8x2x8xf32>
    %101 = tpu.matmul %100, %88, %cst_29 {dimension_numbers = #tpu.dot_dimension_numbers<[2], [1], [1], [2], [0, 0, 0, 1, 1, 2], [0], [0]>} : vector<8x2x2xbf16>, vector<8x2x8xbf16>, vector<8x2x8xf32> -> vector<8x2x8xf32>
    "tpu.trace_stop"() : () -> ()
    %102 = vector.shape_cast %101 : vector<8x2x8xf32> to vector<16x8xf32>
    %103 = arith.truncf %102 : vector<16x8xf32> to vector<16x8xbf16>
    %104 = vector.extract_strided_slice %23 {offsets = [24, 0], sizes = [8, 32], strides = [1, 1]} : vector<32x32xbf16> to vector<8x32xbf16>
    %cst_30 = arith.constant dense<0.000000e+00> : vector<16x32xf32>
    %105 = tpu.matmul %103, %104, %cst_30 {dimension_numbers = #tpu.dot_dimension_numbers<[1], [0], [0], [1], [0, 0, 1, 1], [], []>} : vector<16x8xbf16>, vector<8x32xbf16>, vector<16x32xf32> -> vector<16x32xf32>
    %106 = arith.addf %85, %105 : vector<16x32xf32>
    %107 = vector.broadcast %7 : vector<1x32xf32> to vector<16x32xf32>
    %108 = arith.addf %106, %107 : vector<16x32xf32>
    %109 = arith.addf %3, %108 : vector<16x32xf32>
    %cst_31 = arith.constant dense<0.000000e+00> : vector<16xf32>
    %110 = vector.multi_reduction <add>, %109, %cst_31 [1] : vector<16x32xf32> to vector<16xf32>
    %111 = vector.shape_cast %110 : vector<16xf32> to vector<16x1xf32>
    %cst_32 = arith.constant 3.200000e+01 : f32
    %112 = vector.broadcast %cst_32 : f32 to vector<16x1xf32>
    %113 = arith.divf %111, %112 : vector<16x1xf32>
    %114 = vector.broadcast %113 : vector<16x1xf32> to vector<16x32xf32>
    %115 = arith.subf %109, %114 : vector<16x32xf32>
    %116 = arith.mulf %115, %115 : vector<16x32xf32>
    %cst_33 = arith.constant dense<0.000000e+00> : vector<16xf32>
    %117 = vector.multi_reduction <add>, %116, %cst_33 [1] : vector<16x32xf32> to vector<16xf32>
    %118 = vector.shape_cast %117 : vector<16xf32> to vector<16x1xf32>
    %cst_34 = arith.constant 3.200000e+01 : f32
    %119 = vector.broadcast %cst_34 : f32 to vector<16x1xf32>
    %120 = arith.divf %118, %119 : vector<16x1xf32>
    %121 = vector.broadcast %113 : vector<16x1xf32> to vector<16x32xf32>
    %122 = arith.subf %109, %121 : vector<16x32xf32>
    %cst_35 = arith.constant 9.99999974E-6 : f32
    %123 = vector.broadcast %cst_35 : f32 to vector<16x1xf32>
    %124 = arith.addf %120, %123 : vector<16x1xf32>
    %125 = math.rsqrt %124 : vector<16x1xf32>
    %126 = vector.broadcast %125 : vector<16x1xf32> to vector<16x32xf32>
    %127 = arith.mulf %122, %126 : vector<16x32xf32>
    %128 = vector.broadcast %10 : vector<1x32xf32> to vector<16x32xf32>
    %129 = arith.mulf %127, %128 : vector<16x32xf32>
    %130 = vector.broadcast %11 : vector<1x32xf32> to vector<16x32xf32>
    %131 = arith.addf %129, %130 : vector<16x32xf32>
    %132 = arith.truncf %131 : vector<16x32xf32> to vector<16x32xbf16>
    %c0_36 = arith.constant 0 : index
    %c0_37 = arith.constant 0 : index
    %c0_38 = arith.constant 0 : index
    %133 = vector.load %arg8[%c0_36, %c0_37, %c0_38] : memref<1x32x64xbf16, #tpu.memory_space<vmem>>, vector<1x32x64xbf16>
    %134 = vector.shape_cast %133 : vector<1x32x64xbf16> to vector<32x64xbf16>
    %cst_39 = arith.constant dense<0.000000e+00> : vector<16x64xf32>
    %135 = tpu.matmul %132, %134, %cst_39 {dimension_numbers = #tpu.dot_dimension_numbers<[1], [0], [0], [1], [0, 0, 1, 1], [], []>} : vector<16x32xbf16>, vector<32x64xbf16>, vector<16x64xf32> -> vector<16x64xf32>
    %136 = vector.broadcast %8 : vector<1x64xf32> to vector<16x64xf32>
    %137 = arith.addf %135, %136 : vector<16x64xf32>
    %cst_40 = arith.constant 0.000000e+00 : f32
    %138 = vector.broadcast %cst_40 : f32 to vector<16x64xf32>
    %139 = arith.maximumf %137, %138 : vector<16x64xf32>
    %140 = arith.truncf %139 : vector<16x64xf32> to vector<16x64xbf16>
    %c0_41 = arith.constant 0 : index
    %c0_42 = arith.constant 0 : index
    %c0_43 = arith.constant 0 : index
    %141 = vector.load %arg9[%c0_41, %c0_42, %c0_43] : memref<1x64x32xbf16, #tpu.memory_space<vmem>>, vector<1x64x32xbf16>
    %142 = vector.shape_cast %141 : vector<1x64x32xbf16> to vector<64x32xbf16>
    %cst_44 = arith.constant dense<0.000000e+00> : vector<16x32xf32>
    %143 = tpu.matmul %140, %142, %cst_44 {dimension_numbers = #tpu.dot_dimension_numbers<[1], [0], [0], [1], [0, 0, 1, 1], [], []>} : vector<16x64xbf16>, vector<64x32xbf16>, vector<16x32xf32> -> vector<16x32xf32>
    %144 = vector.broadcast %9 : vector<1x32xf32> to vector<16x32xf32>
    %145 = arith.addf %143, %144 : vector<16x32xf32>
    %146 = arith.addf %131, %145 : vector<16x32xf32>
    %cst_45 = arith.constant dense<0.000000e+00> : vector<16xf32>
    %147 = vector.multi_reduction <add>, %146, %cst_45 [1] : vector<16x32xf32> to vector<16xf32>
    %148 = vector.shape_cast %147 : vector<16xf32> to vector<16x1xf32>
    %cst_46 = arith.constant 3.200000e+01 : f32
    %149 = vector.broadcast %cst_46 : f32 to vector<16x1xf32>
    %150 = arith.divf %148, %149 : vector<16x1xf32>
    %151 = vector.broadcast %150 : vector<16x1xf32> to vector<16x32xf32>
    %152 = arith.subf %146, %151 : vector<16x32xf32>
    %153 = arith.mulf %152, %152 : vector<16x32xf32>
    %cst_47 = arith.constant dense<0.000000e+00> : vector<16xf32>
    %154 = vector.multi_reduction <add>, %153, %cst_47 [1] : vector<16x32xf32> to vector<16xf32>
    %155 = vector.shape_cast %154 : vector<16xf32> to vector<16x1xf32>
    %cst_48 = arith.constant 3.200000e+01 : f32
    %156 = vector.broadcast %cst_48 : f32 to vector<16x1xf32>
    %157 = arith.divf %155, %156 : vector<16x1xf32>
    %158 = vector.broadcast %150 : vector<16x1xf32> to vector<16x32xf32>
    %159 = arith.subf %146, %158 : vector<16x32xf32>
    %cst_49 = arith.constant 9.99999974E-6 : f32
    %160 = vector.broadcast %cst_49 : f32 to vector<16x1xf32>
    %161 = arith.addf %157, %160 : vector<16x1xf32>
    %162 = math.rsqrt %161 : vector<16x1xf32>
    %163 = vector.broadcast %162 : vector<16x1xf32> to vector<16x32xf32>
    %164 = arith.mulf %159, %163 : vector<16x32xf32>
    %165 = vector.broadcast %12 : vector<1x32xf32> to vector<16x32xf32>
    %166 = arith.mulf %164, %165 : vector<16x32xf32>
    %167 = vector.broadcast %13 : vector<1x32xf32> to vector<16x32xf32>
    %168 = arith.addf %166, %167 : vector<16x32xf32>
    %c0_50 = arith.constant 0 : index
    %c0_51 = arith.constant 0 : index
    %169 = vector.load %arg16[%c0_50, %c0_51] : memref<16x32xf32, #tpu.memory_space<vmem>>, vector<16x32xf32>
    tpu.vector_store %arg16[%c0_50, %c0_51], %168 {strides = array<i32>} : memref<16x32xf32, #tpu.memory_space<vmem>>, vector<16x32xf32>,
    %c1_i32 = arith.constant 1 : i32
    %170 = arith.cmpi eq, %arg1, %c1_i32 : i32
    %171 = arith.extui %170 : i1 to i32
    %c0_i32_52 = arith.constant 0 : i32
    %172 = arith.cmpi ne, %171, %c0_i32_52 : i32
    scf.if %172 {
      %c0_53 = arith.constant 0 : index
      %c0_54 = arith.constant 0 : index
      %173 = vector.load %arg11[%c0_53, %c0_54] : memref<1x32xf32, #tpu.memory_space<vmem>>, vector<1x32xf32>
      %c0_55 = arith.constant 0 : index
      %c0_56 = arith.constant 0 : index
      %174 = vector.load %arg12[%c0_55, %c0_56] : memref<1x32xf32, #tpu.memory_space<vmem>>, vector<1x32xf32>
      %cst_57 = arith.constant dense<0.000000e+00> : vector<16xf32>
      %175 = vector.multi_reduction <add>, %168, %cst_57 [1] : vector<16x32xf32> to vector<16xf32>
      %176 = vector.shape_cast %175 : vector<16xf32> to vector<16x1xf32>
      %cst_58 = arith.constant 3.200000e+01 : f32
      %177 = vector.broadcast %cst_58 : f32 to vector<16x1xf32>
      %178 = arith.divf %176, %177 : vector<16x1xf32>
      %179 = vector.broadcast %178 : vector<16x1xf32> to vector<16x32xf32>
      %180 = arith.subf %168, %179 : vector<16x32xf32>
      %181 = arith.mulf %180, %180 : vector<16x32xf32>
      %cst_59 = arith.constant dense<0.000000e+00> : vector<16xf32>
      %182 = vector.multi_reduction <add>, %181, %cst_59 [1] : vector<16x32xf32> to vector<16xf32>
      %183 = vector.shape_cast %182 : vector<16xf32> to vector<16x1xf32>
      %cst_60 = arith.constant 3.200000e+01 : f32
      %184 = vector.broadcast %cst_60 : f32 to vector<16x1xf32>
      %185 = arith.divf %183, %184 : vector<16x1xf32>
      %186 = vector.broadcast %178 : vector<16x1xf32> to vector<16x32xf32>
      %187 = arith.subf %168, %186 : vector<16x32xf32>
      %cst_61 = arith.constant 9.99999974E-6 : f32
      %188 = vector.broadcast %cst_61 : f32 to vector<16x1xf32>
      %189 = arith.addf %185, %188 : vector<16x1xf32>
      %190 = math.rsqrt %189 : vector<16x1xf32>
      %191 = vector.broadcast %190 : vector<16x1xf32> to vector<16x32xf32>
      %192 = arith.mulf %187, %191 : vector<16x32xf32>
      %193 = vector.broadcast %173 : vector<1x32xf32> to vector<16x32xf32>
      %194 = arith.mulf %192, %193 : vector<16x32xf32>
      %195 = vector.broadcast %174 : vector<1x32xf32> to vector<16x32xf32>
      %196 = arith.addf %194, %195 : vector<16x32xf32>
      %197 = vector.shape_cast %196 : vector<16x32xf32> to vector<8x2x32xf32>
      %cst_62 = arith.constant dense<0.000000e+00> : vector<2x32xf32>
      %198 = vector.multi_reduction <add>, %197, %cst_62 [0] : vector<8x2x32xf32> to vector<2x32xf32>
      %199 = arith.truncf %198 : vector<2x32xf32> to vector<2x32xbf16>
      %c0_63 = arith.constant 0 : index
      %c0_64 = arith.constant 0 : index
      %200 = vector.load %arg13[%c0_63, %c0_64] : memref<32x4xbf16, #tpu.memory_space<vmem>>, vector<32x4xbf16>
      %cst_65 = arith.constant dense<0.000000e+00> : vector<2x4xf32>
      %201 = tpu.matmul %199, %200, %cst_65 {dimension_numbers = #tpu.dot_dimension_numbers<[1], [0], [0], [1], [0, 0, 1, 1], [], []>} : vector<2x32xbf16>, vector<32x4xbf16>, vector<2x4xf32> -> vector<2x4xf32>
      %c0_66 = arith.constant 0 : index
      %c0_67 = arith.constant 0 : index
      %202 = vector.load %arg14[%c0_66, %c0_67] : memref<1x4xf32, #tpu.memory_space<vmem>>, vector<1x4xf32>
      %cst_68 = arith.constant 8.000000e+00 : f32
      %203 = vector.broadcast %cst_68 : f32 to vector<1x4xf32>
      %204 = arith.mulf %203, %202 : vector<1x4xf32>
      %205 = vector.broadcast %204 : vector<1x4xf32> to vector<2x4xf32>
      %206 = arith.addf %201, %205 : vector<2x4xf32>
      %207 = vector.shape_cast %206 : vector<2x4xf32> to vector<1x2x4xf32>
      %c0_69 = arith.constant 0 : index
      %c0_70 = arith.constant 0 : index
      %c0_71 = arith.constant 0 : index
      %208 = vector.load %arg15[%c0_69, %c0_70, %c0_71] : memref<1x2x4xf32, #tpu.memory_space<vmem>>, vector<1x2x4xf32>
      tpu.vector_store %arg15[%c0_69, %c0_70, %c0_71], %207 {strides = array<i32>} : memref<1x2x4xf32, #tpu.memory_space<vmem>>, vector<1x2x4xf32>,
    } else {
    }
    return
  }
  func.func @transform_0(%arg0: i32, %arg1: i32) -> (i32, i32, i32) {
    %c0_i32 = arith.constant 0 : i32
    %c0_i32_0 = arith.constant 0 : i32
    %c0_i32_1 = arith.constant 0 : i32
    return %arg0, %c0_i32, %c0_i32_0 : i32, i32, i32
  }
  func.func @transform_1(%arg0: i32, %arg1: i32) -> (i32, i32, i32) {
    %c0_i32 = arith.constant 0 : i32
    %c0_i32_0 = arith.constant 0 : i32
    %c0_i32_1 = arith.constant 0 : i32
    return %arg0, %c0_i32, %c0_i32_0 : i32, i32, i32
  }
  func.func @transform_2(%arg0: i32, %arg1: i32) -> (i32, i32) {
    %c0_i32 = arith.constant 0 : i32
    %c0_i32_0 = arith.constant 0 : i32
    %c0_i32_1 = arith.constant 0 : i32
    return %c0_i32, %c0_i32_0 : i32, i32
  }
  func.func @transform_3(%arg0: i32, %arg1: i32) -> (i32, i32) {
    %c0_i32 = arith.constant 0 : i32
    %c0_i32_0 = arith.constant 0 : i32
    %c0_i32_1 = arith.constant 0 : i32
    return %c0_i32, %c0_i32_0 : i32, i32
  }
  func.func @transform_4(%arg0: i32, %arg1: i32) -> (i32, i32, i32) {
    %c0_i32 = arith.constant 0 : i32
    %c0_i32_0 = arith.constant 0 : i32
    %c0_i32_1 = arith.constant 0 : i32
    return %arg1, %c0_i32, %c0_i32_0 : i32, i32, i32
  }
  func.func @transform_5(%arg0: i32, %arg1: i32) -> (i32, i32, i32) {
    %c0_i32 = arith.constant 0 : i32
    %c0_i32_0 = arith.constant 0 : i32
    %c0_i32_1 = arith.constant 0 : i32
    return %arg1, %c0_i32, %c0_i32_0 : i32, i32, i32
  }
  func.func @transform_6(%arg0: i32, %arg1: i32) -> (i32, i32, i32) {
    %c0_i32 = arith.constant 0 : i32
    %c0_i32_0 = arith.constant 0 : i32
    %c0_i32_1 = arith.constant 0 : i32
    return %arg1, %c0_i32, %c0_i32_0 : i32, i32, i32
  }
  func.func @transform_7(%arg0: i32, %arg1: i32) -> (i32, i32, i32) {
    %c0_i32 = arith.constant 0 : i32
    %c0_i32_0 = arith.constant 0 : i32
    %c0_i32_1 = arith.constant 0 : i32
    return %arg1, %c0_i32, %c0_i32_0 : i32, i32, i32
  }
  func.func @transform_8(%arg0: i32, %arg1: i32) -> (i32, i32, i32) {
    %c0_i32 = arith.constant 0 : i32
    %c0_i32_0 = arith.constant 0 : i32
    %c0_i32_1 = arith.constant 0 : i32
    return %arg1, %c0_i32, %c0_i32_0 : i32, i32, i32
  }
  func.func @transform_9(%arg0: i32, %arg1: i32) -> (i32, i32) {
    %c0_i32 = arith.constant 0 : i32
    %c0_i32_0 = arith.constant 0 : i32
    %c0_i32_1 = arith.constant 0 : i32
    return %c0_i32, %c0_i32_0 : i32, i32
  }
  func.func @transform_10(%arg0: i32, %arg1: i32) -> (i32, i32) {
    %c0_i32 = arith.constant 0 : i32
    %c0_i32_0 = arith.constant 0 : i32
    %c0_i32_1 = arith.constant 0 : i32
    return %c0_i32, %c0_i32_0 : i32, i32
  }
  func.func @transform_11(%arg0: i32, %arg1: i32) -> (i32, i32) {
    %c0_i32 = arith.constant 0 : i32
    %c0_i32_0 = arith.constant 0 : i32
    %c0_i32_1 = arith.constant 0 : i32
    return %c0_i32, %c0_i32_0 : i32, i32
  }
  func.func @transform_12(%arg0: i32, %arg1: i32) -> (i32, i32) {
    %c0_i32 = arith.constant 0 : i32
    %c0_i32_0 = arith.constant 0 : i32
    %c0_i32_1 = arith.constant 0 : i32
    return %c0_i32, %c0_i32_0 : i32, i32
  }
  func.func @transform_13(%arg0: i32, %arg1: i32) -> (i32, i32, i32) {
    %c0_i32 = arith.constant 0 : i32
    %c0_i32_0 = arith.constant 0 : i32
    %c0_i32_1 = arith.constant 0 : i32
    return %arg0, %c0_i32, %c0_i32_0 : i32, i32, i32
  }
}

</mosaic_0001>

<llo_original>
// kernel: tpu_custom_call.1
$region0: #{tpu_custom_call.1}
  #allocation0 [shape = 'u32[]', space=smem, size = 0x4, offset = 0x4, fixed_abs, tag = 'smem constant byte address 0x4 - core index']
  #allocation1 [shape = 'u32[144,128]{1,0:T(1,128)}', space=vmem, size = 0x12000, scoped, tag = 'internal scratch']
  #allocation2 [shape = 'f32[16,32]{1,0:T(8,128)}', space=vmem, size = 0x2000, scoped, tag = 'scratch operand']
  %s0 = inlined_call_operand.vmem [shape: f32[1,8,2], index: 0, kind: input, shape index: {}]
  %s1 = inlined_call_operand.hbm [shape: f32[1,8,32], index: 1, kind: input, shape index: {}]
  %s2 = inlined_call_operand.vmem [shape: f32[1,32], index: 2, kind: input, shape index: {}]
  %s3 = inlined_call_operand.vmem [shape: f32[1,32], index: 3, kind: input, shape index: {}]
  %s4 = inlined_call_operand.vmem [shape: bf16[2,32,96], index: 4, kind: input, shape index: {}]
  %s5 = inlined_call_operand.vmem [shape: bf16[2,32,32], index: 5, kind: input, shape index: {}]
  %s6 = inlined_call_operand.vmem [shape: bf16[2,32,64], index: 6, kind: input, shape index: {}]
  %s7 = inlined_call_operand.vmem [shape: bf16[2,64,32], index: 7, kind: input, shape index: {}]
  %s8 = inlined_call_operand.vmem [shape: f32[2,8,96], index: 8, kind: input, shape index: {}]
  %s9 = inlined_call_operand.vmem [shape: f32[1,32], index: 9, kind: input, shape index: {}]
  %s10 = inlined_call_operand.vmem [shape: f32[1,32], index: 10, kind: input, shape index: {}]
  %s11 = inlined_call_operand.vmem [shape: bf16[32,4], index: 11, kind: input, shape index: {}]
  %s12 = inlined_call_operand.vmem [shape: f32[1,4], index: 12, kind: input, shape index: {}]
  %s13 = inlined_call_operand.hbm [shape: f32[1,2,4], index: 13, kind: output, shape index: {}]
  %s14 = sld [smem:[#allocation0]]
  $region97: #{tpu_custom_call.1} parent=0
    _
  %s16 = ssub.s32 1, %s14
  %s17 = scalar_select 0, %s16, %s14
  $region1: #{tpu_custom_call.1} parent=0
    #allocation3 [shape = 'u8[4096]{0}', space=vmem, size = 0x1000, scoped, tag = 'input window, operand 1, single buffered']
    #allocation4 [shape = 's32[2]{0}', space=sflag, size = 0x8, scoped, tag = 'scoped memory for tpu_custom_call.1']
    #allocation5 [shape = 's32[2]{0}', space=sflag, size = 0x8, scoped, tag = 'scoped memory for tpu_custom_call.1']
    #allocation6 [shape = 'u8[1024]{0}', space=vmem, size = 0x400, scoped, tag = 'output window, operand 0, single buffered']
    %18 = vsyncpa [#allocation4], 0
    %19 = vsyncpa [#allocation5], 0
    loop: start=0, step=1, limit=4
    $region2: #{tpu_custom_call.1} parent=1 // loop_pre_header
      _
    $region3: #{tpu_custom_call.1} parent=1 // loop_header
      %s21 = sphi 0, %s25
      %p22 = scmp.ge.s32.totalorder %s21, 4
      %s28 = sphi 0, %s40
      %s29 = sphi 0, %s36
      %s30 = sphi 0, %s28
      %s31 = sphi 0, %s29
      %s32 = sphi 0, %s30
      %s33 = sphi 0, %s31
      %s43 = sphi 0, %s45
      %s46 = sphi 0, %s43
      %s47 = sphi 0, %s46
      %s63 = sphi 0, %s47
      %s69 = sphi 0, %s71
      %s72 = sphi 0, %s69
      %s73 = sphi 0, %s72
      %s89 = sphi 0, %s73
      %s93 = sphi 0, %s93
      %s95 = sphi 0, %s93
      %s96 = sphi 0, %s95
      %s110 = sphi 0, %s96
      %s114 = sphi 0, %s114
      %s116 = sphi 0, %s114
      %s117 = sphi 0, %s116
      %s131 = sphi 0, %s117
      %s137 = sphi 0, %s139
      %s140 = sphi 0, %s137
      %s141 = sphi 0, %s140
      %s157 = sphi 0, %s141
      %s163 = sphi 0, %s165
      %s166 = sphi 0, %s163
      %s167 = sphi 0, %s166
      %s183 = sphi 0, %s167
      %s189 = sphi 0, %s191
      %s192 = sphi 0, %s189
      %s193 = sphi 0, %s192
      %s209 = sphi 0, %s193
      %s215 = sphi 0, %s217
      %s218 = sphi 0, %s215
      %s219 = sphi 0, %s218
      %s235 = sphi 0, %s219
      %s241 = sphi 0, %s243
      %s244 = sphi 0, %s241
      %s245 = sphi 0, %s244
      %s261 = sphi 0, %s245
      %s265 = sphi 0, %s265
      %s267 = sphi 0, %s265
      %s268 = sphi 0, %s267
      %s282 = sphi 0, %s268
      %s286 = sphi 0, %s286
      %s288 = sphi 0, %s286
      %s289 = sphi 0, %s288
      %s303 = sphi 0, %s289
      %s307 = sphi 0, %s307
      %s309 = sphi 0, %s307
      %s310 = sphi 0, %s309
      %s324 = sphi 0, %s310
      %s328 = sphi 0, %s328
      %s330 = sphi 0, %s328
      %s331 = sphi 0, %s330
      %s345 = sphi 0, %s331
      %s351 = sphi 0, %s353
      %s354 = sphi 0, %s351
      %s355 = sphi 0, %s354
      %s371 = sphi 0, %s355
    $region4: #{tpu_custom_call.1} parent=1 // loop_header_branch
      %24 = sbr.rel (%p22) target = $region8
    $region5: #{tpu_custom_call.1} parent=1 // loop_body
      %s26 = ssub.s32 %s21, 1
      %s27 = ssub.s32 %s21, 2
      %s34 = sadd.s32 1, %s29
      %p35 = scmp.ge.s32.totalorder %s34, 2
      %s36 = scalar_select %p35, 0, %s34
      %s37 = sadd.s32 1, %s28
      %s38 = scalar_select %p35, %s37, %s28
      %p39 = scmp.ge.s32.totalorder %s38, 1
      %s40 = scalar_select %p39, 0, %s38
      %s41 = ssub.s32 %s28, %s40
      %p42 = scmp.eq.s32.totalorder %s41, 0
      %s44 = sadd.s32 %s43, 1
      %s45 = scalar_select %p42, %s43, %s44
      %p48 = pneg %p42
      %p49 = scmp.eq.s32.totalorder %s21, 1
      %p50 = por %p48, %p49
      %p51 = scmp.ne.s32.totalorder %s43, %s46
      %p52 = scmp.eq.s32.totalorder %s21, 0
      %p53 = por %p51, %p52
      %p54 = scmp.ne.s32.totalorder %s43, %s46
      %p55 = scmp.eq.s32.totalorder %s26, 1
      %p56 = por %p54, %p55
      %p57 = scmp.ne.s32.totalorder %s46, %s47
      %p58 = scmp.eq.s32.totalorder %s26, 0
      %p59 = por %p57, %p58
      %p60 = scmp.ne.s32.totalorder %s46, %s47
      %p61 = scmp.eq.s32.totalorder %s27, 1
      %p62 = por %p60, %p61
      %p64 = scmp.ne.s32.totalorder %s47, %s63
      %p65 = scmp.eq.s32.totalorder %s27, 0
      %p66 = por %p64, %p65
      %s67 = ssub.s32 %s28, %s40
      %p68 = scmp.eq.s32.totalorder %s67, 0
      %s70 = sadd.s32 %s69, 1
      %s71 = scalar_select %p68, %s69, %s70
      %p74 = pneg %p68
      %p75 = scmp.eq.s32.totalorder %s21, 1
      %p76 = por %p74, %p75
      %p77 = scmp.ne.s32.totalorder %s69, %s72
      %p78 = scmp.eq.s32.totalorder %s21, 0
      %p79 = por %p77, %p78
      %p80 = scmp.ne.s32.totalorder %s69, %s72
      %p81 = scmp.eq.s32.totalorder %s26, 1
      %p82 = por %p80, %p81
      %p83 = scmp.ne.s32.totalorder %s72, %s73
      %p84 = scmp.eq.s32.totalorder %s26, 0
      %p85 = por %p83, %p84
      %p86 = scmp.ne.s32.totalorder %s72, %s73
      %p87 = scmp.eq.s32.totalorder %s27, 1
      %p88 = por %p86, %p87
      %p90 = scmp.ne.s32.totalorder %s73, %s89
      %p91 = scmp.eq.s32.totalorder %s27, 0
      %p92 = por %p90, %p91
      %s94 = sadd.s32 %s93, 1
      %p97 = scmp.eq.s32.totalorder %s21, 1
      %p98 = scmp.ne.s32.totalorder %s93, %s95
      %p99 = scmp.eq.s32.totalorder %s21, 0
      %p100 = por %p98, %p99
      %p101 = scmp.ne.s32.totalorder %s93, %s95
      %p102 = scmp.eq.s32.totalorder %s26, 1
      %p103 = por %p101, %p102
      %p104 = scmp.ne.s32.totalorder %s95, %s96
      %p105 = scmp.eq.s32.totalorder %s26, 0
      %p106 = por %p104, %p105
      %p107 = scmp.ne.s32.totalorder %s95, %s96
      %p108 = scmp.eq.s32.totalorder %s27, 1
      %p109 = por %p107, %p108
      %p111 = scmp.ne.s32.totalorder %s96, %s110
      %p112 = scmp.eq.s32.totalorder %s27, 0
      %p113 = por %p111, %p112
      %s115 = sadd.s32 %s114, 1
      %p118 = scmp.eq.s32.totalorder %s21, 1
      %p119 = scmp.ne.s32.totalorder %s114, %s116
      %p120 = scmp.eq.s32.totalorder %s21, 0
      %p121 = por %p119, %p120
      %p122 = scmp.ne.s32.totalorder %s114, %s116
      %p123 = scmp.eq.s32.totalorder %s26, 1
      %p124 = por %p122, %p123
      %p125 = scmp.ne.s32.totalorder %s116, %s117
      %p126 = scmp.eq.s32.totalorder %s26, 0
      %p127 = por %p125, %p126
      %p128 = scmp.ne.s32.totalorder %s116, %s117
      %p129 = scmp.eq.s32.totalorder %s27, 1
      %p130 = por %p128, %p129
      %p132 = scmp.ne.s32.totalorder %s117, %s131
      %p133 = scmp.eq.s32.totalorder %s27, 0
      %p134 = por %p132, %p133
      %s135 = ssub.s32 %s29, %s36
      %p136 = scmp.eq.s32.totalorder %s135, 0
      %s138 = sadd.s32 %s137, 1
      %s139 = scalar_select %p136, %s137, %s138
      %p142 = pneg %p136
      %p143 = scmp.eq.s32.totalorder %s21, 1
      %p144 = por %p142, %p143
      %p145 = scmp.ne.s32.totalorder %s137, %s140
      %p146 = scmp.eq.s32.totalorder %s21, 0
      %p147 = por %p145, %p146
      %p148 = scmp.ne.s32.totalorder %s137, %s140
      %p149 = scmp.eq.s32.totalorder %s26, 1
      %p150 = por %p148, %p149
      %p151 = scmp.ne.s32.totalorder %s140, %s141
      %p152 = scmp.eq.s32.totalorder %s26, 0
      %p153 = por %p151, %p152
      %p154 = scmp.ne.s32.totalorder %s140, %s141
      %p155 = scmp.eq.s32.totalorder %s27, 1
      %p156 = por %p154, %p155
      %p158 = scmp.ne.s32.totalorder %s141, %s157
      %p159 = scmp.eq.s32.totalorder %s27, 0
      %p160 = por %p158, %p159
      %s161 = ssub.s32 %s29, %s36
      %p162 = scmp.eq.s32.totalorder %s161, 0
      %s164 = sadd.s32 %s163, 1
      %s165 = scalar_select %p162, %s163, %s164
      %p168 = pneg %p162
      %p169 = scmp.eq.s32.totalorder %s21, 1
      %p170 = por %p168, %p169
      %p171 = scmp.ne.s32.totalorder %s163, %s166
      %p172 = scmp.eq.s32.totalorder %s21, 0
      %p173 = por %p171, %p172
      %p174 = scmp.ne.s32.totalorder %s163, %s166
      %p175 = scmp.eq.s32.totalorder %s26, 1
      %p176 = por %p174, %p175
      %p177 = scmp.ne.s32.totalorder %s166, %s167
      %p178 = scmp.eq.s32.totalorder %s26, 0
      %p179 = por %p177, %p178
      %p180 = scmp.ne.s32.totalorder %s166, %s167
      %p181 = scmp.eq.s32.totalorder %s27, 1
      %p182 = por %p180, %p181
      %p184 = scmp.ne.s32.totalorder %s167, %s183
      %p185 = scmp.eq.s32.totalorder %s27, 0
      %p186 = por %p184, %p185
      %s187 = ssub.s32 %s29, %s36
      %p188 = scmp.eq.s32.totalorder %s187, 0
      %s190 = sadd.s32 %s189, 1
      %s191 = scalar_select %p188, %s189, %s190
      %p194 = pneg %p188
      %p195 = scmp.eq.s32.totalorder %s21, 1
      %p196 = por %p194, %p195
      %p197 = scmp.ne.s32.totalorder %s189, %s192
      %p198 = scmp.eq.s32.totalorder %s21, 0
      %p199 = por %p197, %p198
      %p200 = scmp.ne.s32.totalorder %s189, %s192
      %p201 = scmp.eq.s32.totalorder %s26, 1
      %p202 = por %p200, %p201
      %p203 = scmp.ne.s32.totalorder %s192, %s193
      %p204 = scmp.eq.s32.totalorder %s26, 0
      %p205 = por %p203, %p204
      %p206 = scmp.ne.s32.totalorder %s192, %s193
      %p207 = scmp.eq.s32.totalorder %s27, 1
      %p208 = por %p206, %p207
      %p210 = scmp.ne.s32.totalorder %s193, %s209
      %p211 = scmp.eq.s32.totalorder %s27, 0
      %p212 = por %p210, %p211
      %s213 = ssub.s32 %s29, %s36
      %p214 = scmp.eq.s32.totalorder %s213, 0
      %s216 = sadd.s32 %s215, 1
      %s217 = scalar_select %p214, %s215, %s216
      %p220 = pneg %p214
      %p221 = scmp.eq.s32.totalorder %s21, 1
      %p222 = por %p220, %p221
      %p223 = scmp.ne.s32.totalorder %s215, %s218
      %p224 = scmp.eq.s32.totalorder %s21, 0
      %p225 = por %p223, %p224
      %p226 = scmp.ne.s32.totalorder %s215, %s218
      %p227 = scmp.eq.s32.totalorder %s26, 1
      %p228 = por %p226, %p227
      %p229 = scmp.ne.s32.totalorder %s218, %s219
      %p230 = scmp.eq.s32.totalorder %s26, 0
      %p231 = por %p229, %p230
      %p232 = scmp.ne.s32.totalorder %s218, %s219
      %p233 = scmp.eq.s32.totalorder %s27, 1
      %p234 = por %p232, %p233
      %p236 = scmp.ne.s32.totalorder %s219, %s235
      %p237 = scmp.eq.s32.totalorder %s27, 0
      %p238 = por %p236, %p237
      %s239 = ssub.s32 %s29, %s36
      %p240 = scmp.eq.s32.totalorder %s239, 0
      %s242 = sadd.s32 %s241, 1
      %s243 = scalar_select %p240, %s241, %s242
      %p246 = pneg %p240
      %p247 = scmp.eq.s32.totalorder %s21, 1
      %p248 = por %p246, %p247
      %p249 = scmp.ne.s32.totalorder %s241, %s244
      %p250 = scmp.eq.s32.totalorder %s21, 0
      %p251 = por %p249, %p250
      %p252 = scmp.ne.s32.totalorder %s241, %s244
      %p253 = scmp.eq.s32.totalorder %s26, 1
      %p254 = por %p252, %p253
      %p255 = scmp.ne.s32.totalorder %s244, %s245
      %p256 = scmp.eq.s32.totalorder %s26, 0
      %p257 = por %p255, %p256
      %p258 = scmp.ne.s32.totalorder %s244, %s245
      %p259 = scmp.eq.s32.totalorder %s27, 1
      %p260 = por %p258, %p259
      %p262 = scmp.ne.s32.totalorder %s245, %s261
      %p263 = scmp.eq.s32.totalorder %s27, 0
      %p264 = por %p262, %p263
      %s266 = sadd.s32 %s265, 1
      %p269 = scmp.eq.s32.totalorder %s21, 1
      %p270 = scmp.ne.s32.totalorder %s265, %s267
      %p271 = scmp.eq.s32.totalorder %s21, 0
      %p272 = por %p270, %p271
      %p273 = scmp.ne.s32.totalorder %s265, %s267
      %p274 = scmp.eq.s32.totalorder %s26, 1
      %p275 = por %p273, %p274
      %p276 = scmp.ne.s32.totalorder %s267, %s268
      %p277 = scmp.eq.s32.totalorder %s26, 0
      %p278 = por %p276, %p277
      %p279 = scmp.ne.s32.totalorder %s267, %s268
      %p280 = scmp.eq.s32.totalorder %s27, 1
      %p281 = por %p279, %p280
      %p283 = scmp.ne.s32.totalorder %s268, %s282
      %p284 = scmp.eq.s32.totalorder %s27, 0
      %p285 = por %p283, %p284
      %s287 = sadd.s32 %s286, 1
      %p290 = scmp.eq.s32.totalorder %s21, 1
      %p291 = scmp.ne.s32.totalorder %s286, %s288
      %p292 = scmp.eq.s32.totalorder %s21, 0
      %p293 = por %p291, %p292
      %p294 = scmp.ne.s32.totalorder %s286, %s288
      %p295 = scmp.eq.s32.totalorder %s26, 1
      %p296 = por %p294, %p295
      %p297 = scmp.ne.s32.totalorder %s288, %s289
      %p298 = scmp.eq.s32.totalorder %s26, 0
      %p299 = por %p297, %p298
      %p300 = scmp.ne.s32.totalorder %s288, %s289
      %p301 = scmp.eq.s32.totalorder %s27, 1
      %p302 = por %p300, %p301
      %p304 = scmp.ne.s32.totalorder %s289, %s303
      %p305 = scmp.eq.s32.totalorder %s27, 0
      %p306 = por %p304, %p305
      %s308 = sadd.s32 %s307, 1
      %p311 = scmp.eq.s32.totalorder %s21, 1
      %p312 = scmp.ne.s32.totalorder %s307, %s309
      %p313 = scmp.eq.s32.totalorder %s21, 0
      %p314 = por %p312, %p313
      %p315 = scmp.ne.s32.totalorder %s307, %s309
      %p316 = scmp.eq.s32.totalorder %s26, 1
      %p317 = por %p315, %p316
      %p318 = scmp.ne.s32.totalorder %s309, %s310
      %p319 = scmp.eq.s32.totalorder %s26, 0
      %p320 = por %p318, %p319
      %p321 = scmp.ne.s32.totalorder %s309, %s310
      %p322 = scmp.eq.s32.totalorder %s27, 1
      %p323 = por %p321, %p322
      %p325 = scmp.ne.s32.totalorder %s310, %s324
      %p326 = scmp.eq.s32.totalorder %s27, 0
      %p327 = por %p325, %p326
      %s329 = sadd.s32 %s328, 1
      %p332 = scmp.eq.s32.totalorder %s21, 1
      %p333 = scmp.ne.s32.totalorder %s328, %s330
      %p334 = scmp.eq.s32.totalorder %s21, 0
      %p335 = por %p333, %p334
      %p336 = scmp.ne.s32.totalorder %s328, %s330
      %p337 = scmp.eq.s32.totalorder %s26, 1
      %p338 = por %p336, %p337
      %p339 = scmp.ne.s32.totalorder %s330, %s331
      %p340 = scmp.eq.s32.totalorder %s26, 0
      %p341 = por %p339, %p340
      %p342 = scmp.ne.s32.totalorder %s330, %s331
      %p343 = scmp.eq.s32.totalorder %s27, 1
      %p344 = por %p342, %p343
      %p346 = scmp.ne.s32.totalorder %s331, %s345
      %p347 = scmp.eq.s32.totalorder %s27, 0
      %p348 = por %p346, %p347
      %s349 = ssub.s32 %s28, %s40
      %p350 = scmp.eq.s32.totalorder %s349, 0
      %s352 = sadd.s32 %s351, 1
      %s353 = scalar_select %p350, %s351, %s352
      %p356 = pneg %p350
      %p357 = scmp.eq.s32.totalorder %s21, 1
      %p358 = por %p356, %p357
      %p359 = scmp.ne.s32.totalorder %s351, %s354
      %p360 = scmp.eq.s32.totalorder %s21, 0
      %p361 = por %p359, %p360
      %p362 = scmp.ne.s32.totalorder %s351, %s354
      %p363 = scmp.eq.s32.totalorder %s26, 1
      %p364 = por %p362, %p363
      %p365 = scmp.ne.s32.totalorder %s354, %s355
      %p366 = scmp.eq.s32.totalorder %s26, 0
      %p367 = por %p365, %p366
      %p368 = scmp.ne.s32.totalorder %s354, %s355
      %p369 = scmp.eq.s32.totalorder %s27, 1
      %p370 = por %p368, %p369
      %p372 = scmp.ne.s32.totalorder %s355, %s371
      %p373 = scmp.eq.s32.totalorder %s27, 0
      %p374 = por %p372, %p373
      %p375 = scmp.le.s32.totalorder 1, %s21
      %p376 = scmp.lt.s32.totalorder %s21, 3
      %p377 = pnand %p375, %p376
      %p378 = pneg %p377
      // Predicated region
      $region9: #{tpu_custom_call.1} parent=5 // pred_check
        _
      $region10: #{tpu_custom_call.1} parent=5 // pred_check_branch
        %380 = sbr.rel (%p377) target = $region12
      $region11: #{tpu_custom_call.1} parent=5 // pred_region
        %s381 = ssub.s32 %s21, 1
        // Predicated region
        $region13: #{tpu_custom_call.1} parent=11 // pred_check
          %p382 = pneg %p59
        $region14: #{tpu_custom_call.1} parent=11 // pred_check_branch
          %384 = sbr.rel (%p382) target = $region16
        $region15: #{tpu_custom_call.1} parent=11 // pred_region
          %p385 = scmp.lt.s32.totalorder %s30, 0
          %s386 = scalar_select %p385, %s30, 0
          %s387 = smul.addr %s386, 8
          %s388 = scalar_lea.vmem %s0, %s387
        $region16: #{tpu_custom_call.1} parent=11 // pred_fallthru
          _
        // Predicated region
        $region17: #{tpu_custom_call.1} parent=11 // pred_check
          %p389 = pneg %p85
        $region18: #{tpu_custom_call.1} parent=11 // pred_check_branch
          %391 = sbr.rel (%p389) target = $region20
        $region19: #{tpu_custom_call.1} parent=11 // pred_region
          %s393 = ssub.s32 128, 128
          %394 = vsyncadd [#allocation4], %s393
          %s395 = smul.addr %s30, 128
          %s396 = scalar_lea.hbm %s1, %s395
          %s398 = sshll.u32 [#allocation3], 4
          %s399 = int_to_ptr.vmem [resolvable:$true] %s398
          %401 = dma.hbm_to_vmem [thread:$0]  %s396, 128, %s399, [#allocation4]
        $region20: #{tpu_custom_call.1} parent=11 // pred_fallthru
          _
        // Predicated region
        $region21: #{tpu_custom_call.1} parent=11 // pred_check
          %p402 = pneg %p106
        $region22: #{tpu_custom_call.1} parent=11 // pred_check_branch
          %404 = sbr.rel (%p402) target = $region24
        $region23: #{tpu_custom_call.1} parent=11 // pred_region
          _
        $region24: #{tpu_custom_call.1} parent=11 // pred_fallthru
          _
        // Predicated region
        $region25: #{tpu_custom_call.1} parent=11 // pred_check
          %p405 = pneg %p127
        $region26: #{tpu_custom_call.1} parent=11 // pred_check_branch
          %407 = sbr.rel (%p405) target = $region28
        $region27: #{tpu_custom_call.1} parent=11 // pred_region
          _
        $region28: #{tpu_custom_call.1} parent=11 // pred_fallthru
          _
        // Predicated region
        $region29: #{tpu_custom_call.1} parent=11 // pred_check
          %p408 = pneg %p278
        $region30: #{tpu_custom_call.1} parent=11 // pred_check_branch
          %410 = sbr.rel (%p408) target = $region32
        $region31: #{tpu_custom_call.1} parent=11 // pred_region
          _
        $region32: #{tpu_custom_call.1} parent=11 // pred_fallthru
          _
        // Predicated region
        $region33: #{tpu_custom_call.1} parent=11 // pred_check
          %p411 = pneg %p299
        $region34: #{tpu_custom_call.1} parent=11 // pred_check_branch
          %413 = sbr.rel (%p411) target = $region36
        $region35: #{tpu_custom_call.1} parent=11 // pred_region
          _
        $region36: #{tpu_custom_call.1} parent=11 // pred_fallthru
          _
        // Predicated region
        $region37: #{tpu_custom_call.1} parent=11 // pred_check
          %p414 = pneg %p320
        $region38: #{tpu_custom_call.1} parent=11 // pred_check_branch
          %416 = sbr.rel (%p414) target = $region40
        $region39: #{tpu_custom_call.1} parent=11 // pred_region
          _
        $region40: #{tpu_custom_call.1} parent=11 // pred_fallthru
          _
        // Predicated region
        $region41: #{tpu_custom_call.1} parent=11 // pred_check
          %p417 = pneg %p341
        $region42: #{tpu_custom_call.1} parent=11 // pred_check_branch
          %419 = sbr.rel (%p417) target = $region44
        $region43: #{tpu_custom_call.1} parent=11 // pred_region
          _
        $region44: #{tpu_custom_call.1} parent=11 // pred_fallthru
          _
      $region12: #{tpu_custom_call.1} parent=5 // pred_fallthru
        _
      %p420 = scmp.lt.s32.totalorder %s21, 2
      // Predicated region
      $region45: #{tpu_custom_call.1} parent=5 // pred_check
        %p421 = pneg %p420
      $region46: #{tpu_custom_call.1} parent=5 // pred_check_branch
        %423 = sbr.rel (%p421) target = $region48
      $region47: #{tpu_custom_call.1} parent=5 // pred_region
        // Predicated region
        $region49: #{tpu_custom_call.1} parent=47 // pred_check
          %p424 = pneg %p147
        $region50: #{tpu_custom_call.1} parent=47 // pred_check_branch
          %426 = sbr.rel (%p424) target = $region52
        $region51: #{tpu_custom_call.1} parent=47 // pred_region
          %p427 = scmp.lt.s32.totalorder %s29, 1
          %s428 = scalar_select %p427, %s29, 1
          %s429 = smul.addr %s428, 4
          %s430 = smul.addr %s429, 4
          %s431 = scalar_lea.vmem %s4, %s430
        $region52: #{tpu_custom_call.1} parent=47 // pred_fallthru
          _
        // Predicated region
        $region53: #{tpu_custom_call.1} parent=47 // pred_check
          %p432 = pneg %p173
        $region54: #{tpu_custom_call.1} parent=47 // pred_check_branch
          %434 = sbr.rel (%p432) target = $region56
        $region55: #{tpu_custom_call.1} parent=47 // pred_region
          %p435 = scmp.lt.s32.totalorder %s29, 1
          %s436 = scalar_select %p435, %s29, 1
          %s437 = smul.addr %s436, 4
          %s438 = smul.addr %s437, 4
          %s439 = scalar_lea.vmem %s5, %s438
        $region56: #{tpu_custom_call.1} parent=47 // pred_fallthru
          _
        // Predicated region
        $region57: #{tpu_custom_call.1} parent=47 // pred_check
          %p440 = pneg %p199
        $region58: #{tpu_custom_call.1} parent=47 // pred_check_branch
          %442 = sbr.rel (%p440) target = $region60
        $region59: #{tpu_custom_call.1} parent=47 // pred_region
          %p443 = scmp.lt.s32.totalorder %s29, 1
          %s444 = scalar_select %p443, %s29, 1
          %s445 = smul.addr %s444, 4
          %s446 = smul.addr %s445, 4
          %s447 = scalar_lea.vmem %s6, %s446
        $region60: #{tpu_custom_call.1} parent=47 // pred_fallthru
          _
        // Predicated region
        $region61: #{tpu_custom_call.1} parent=47 // pred_check
          %p448 = pneg %p225
        $region62: #{tpu_custom_call.1} parent=47 // pred_check_branch
          %450 = sbr.rel (%p448) target = $region64
        $region63: #{tpu_custom_call.1} parent=47 // pred_region
          %p451 = scmp.lt.s32.totalorder %s29, 1
          %s452 = scalar_select %p451, %s29, 1
          %s453 = smul.addr %s452, 8
          %s454 = smul.addr %s453, 4
          %s455 = scalar_lea.vmem %s7, %s454
        $region64: #{tpu_custom_call.1} parent=47 // pred_fallthru
          _
        // Predicated region
        $region65: #{tpu_custom_call.1} parent=47 // pred_check
          %p456 = pneg %p251
        $region66: #{tpu_custom_call.1} parent=47 // pred_check_branch
          %458 = sbr.rel (%p456) target = $region68
        $region67: #{tpu_custom_call.1} parent=47 // pred_region
          %p459 = scmp.lt.s32.totalorder %s29, 1
          %s460 = scalar_select %p459, %s29, 1
          %s461 = smul.addr %s460, 8
          %s462 = scalar_lea.vmem %s8, %s461
        $region68: #{tpu_custom_call.1} parent=47 // pred_fallthru
          _
      $region48: #{tpu_custom_call.1} parent=5 // pred_fallthru
        _
      %p463 = scmp.le.s32.totalorder 1, %s21
      %p464 = scmp.lt.s32.totalorder %s21, 3
      %p465 = pnand %p463, %p464
      %p466 = pneg %p465
      // Predicated region
      $region69: #{tpu_custom_call.1} parent=5 // pred_check
        _
      $region70: #{tpu_custom_call.1} parent=5 // pred_check_branch
        %468 = sbr.rel (%p465) target = $region72
      $region71: #{tpu_custom_call.1} parent=5 // pred_region
        %s469 = ssub.s32 %s21, 1
        // Predicated region
        $region73: #{tpu_custom_call.1} parent=71 // pred_check
          %p470 = pneg %p85
        $region74: #{tpu_custom_call.1} parent=71 // pred_check_branch
          %472 = sbr.rel (%p470) target = $region76
        $region75: #{tpu_custom_call.1} parent=71 // pred_region
          %473 = dma.done [#allocation4], 128
        $region76: #{tpu_custom_call.1} parent=71 // pred_fallthru
          _
        %p474 = scmp.lt.s32.totalorder %s30, 0
        %s475 = scalar_select %p474, %s30, 0
        %s476 = smul.addr %s475, 8
        %s477 = scalar_lea.vmem %s0, %s476
        %p478 = pneg %p59
        %p479 = pneg %p56
        %p480 = pneg %p85
        %p481 = pneg %p82
        %p482 = pneg %p106
        %p483 = pneg %p103
        %p484 = pneg %p127
        %p485 = pneg %p124
        %p486 = scmp.lt.s32.totalorder %s31, 1
        %s487 = scalar_select %p486, %s31, 1
        %s488 = smul.addr %s487, 4
        %s489 = smul.addr %s488, 4
        %s490 = scalar_lea.vmem %s4, %s489
        %p491 = pneg %p153
        %p492 = pneg %p150
        %p493 = scmp.lt.s32.totalorder %s31, 1
        %s494 = scalar_select %p493, %s31, 1
        %s495 = smul.addr %s494, 4
        %s496 = smul.addr %s495, 4
        %s497 = scalar_lea.vmem %s5, %s496
        %p498 = pneg %p179
        %p499 = pneg %p176
        %p500 = scmp.lt.s32.totalorder %s31, 1
        %s501 = scalar_select %p500, %s31, 1
        %s502 = smul.addr %s501, 4
        %s503 = smul.addr %s502, 4
        %s504 = scalar_lea.vmem %s6, %s503
        %p505 = pneg %p205
        %p506 = pneg %p202
        %p507 = scmp.lt.s32.totalorder %s31, 1
        %s508 = scalar_select %p507, %s31, 1
        %s509 = smul.addr %s508, 8
        %s510 = smul.addr %s509, 4
        %s511 = scalar_lea.vmem %s7, %s510
        %p512 = pneg %p231
        %p513 = pneg %p228
        %p514 = scmp.lt.s32.totalorder %s31, 1
        %s515 = scalar_select %p514, %s31, 1
        %s516 = smul.addr %s515, 8
        %s517 = scalar_lea.vmem %s8, %s516
        %p518 = pneg %p257
        %p519 = pneg %p254
        %p520 = pneg %p278
        %p521 = pneg %p275
        %p522 = pneg %p299
        %p523 = pneg %p296
        %p524 = pneg %p320
        %p525 = pneg %p317
        %p526 = pneg %p341
        %p527 = pneg %p338
        %p528 = pneg %p367
        %p529 = pneg %p364
        %p530 = scmp.lt.s32.totalorder %s30, 0
        %s531 = scalar_select %p530, %s30, 0
        %s532 = smul.addr %s531, 8
        %s533 = scalar_lea.vmem %s0, %s532
        %p534 = scmp.lt.s32.totalorder %s31, 1
        %s535 = scalar_select %p534, %s31, 1
        %s536 = smul.addr %s535, 4
        %s537 = smul.addr %s536, 4
        %s538 = scalar_lea.vmem %s4, %s537
        %p539 = scmp.lt.s32.totalorder %s31, 1
        %s540 = scalar_select %p539, %s31, 1
        %s541 = smul.addr %s540, 4
        %s542 = smul.addr %s541, 4
        %s543 = scalar_lea.vmem %s5, %s542
        %p544 = scmp.lt.s32.totalorder %s31, 1
        %s545 = scalar_select %p544, %s31, 1
        %s546 = smul.addr %s545, 4
        %s547 = smul.addr %s546, 4
        %s548 = scalar_lea.vmem %s6, %s547
        %p549 = scmp.lt.s32.totalorder %s31, 1
        %s550 = scalar_select %p549, %s31, 1
        %s551 = smul.addr %s550, 8
        %s552 = smul.addr %s551, 4
        %s553 = scalar_lea.vmem %s7, %s552
        %p554 = scmp.lt.s32.totalorder %s31, 1
        %s555 = scalar_select %p554, %s31, 1
        %s556 = smul.addr %s555, 8
        %s557 = scalar_lea.vmem %s8, %s556
        %p559 = scmp.eq.s32.totalorder %s31, 0
        // Predicated region
        $region77: #{tpu_custom_call.1} parent=71 // pred_check
          %p560 = pneg %p559
        $region78: #{tpu_custom_call.1} parent=71 // pred_check_branch
          %562 = sbr.rel (%p560) target = $region80
        $region79: #{tpu_custom_call.1} parent=71 // pred_region
          %v563 = vld [vmem:[%s533] sm:$0xff]
          %v564 = vlaneseq
          %v565 = vshrl.u32 %v564, 7
          %v566 = vsub.s32 0, %v565
          %v567 = vrot.slane %v563, %v566
          %569 = vbcast.lane.b32.xlu0 %v567, 256
          %v570 = vpop.permute.xlu0 %569
          %v571 = vlaneseq
          %v572 = vshrl.u32 %v571, 7
          %v573 = vsub.s32 1, %v572
          %v574 = vrot.slane %v563, %v573
          %576 = vbcast.lane.b32.xlu0 %v574, 256
          %v577 = vpop.permute.xlu0 %576
          %v578 = vlaneseq
          %v579 = vshrl.u32 %v578, 7
          %v580 = vsub.s32 2, %v579
          %v581 = vrot.slane %v563, %v580
          %583 = vbcast.lane.b32.xlu0 %v581, 256
          %v584 = vpop.permute.xlu0 %583
          %v585 = vlaneseq
          %v586 = vshrl.u32 %v585, 7
          %v587 = vsub.s32 3, %v586
          %v588 = vrot.slane %v563, %v587
          %590 = vbcast.lane.b32.xlu0 %v588, 256
          %v591 = vpop.permute.xlu0 %590
          %v592 = vlaneseq
          %v593 = vshrl.u32 %v592, 7
          %v594 = vsub.s32 4, %v593
          %v595 = vrot.slane %v563, %v594
          %597 = vbcast.lane.b32.xlu0 %v595, 256
          %v598 = vpop.permute.xlu0 %597
          %v599 = vlaneseq
          %v600 = vshrl.u32 %v599, 7
          %v601 = vsub.s32 5, %v600
          %v602 = vrot.slane %v563, %v601
          %604 = vbcast.lane.b32.xlu0 %v602, 256
          %v605 = vpop.permute.xlu0 %604
          %v606 = vlaneseq
          %v607 = vshrl.u32 %v606, 7
          %v608 = vsub.s32 6, %v607
          %v609 = vrot.slane %v563, %v608
          %611 = vbcast.lane.b32.xlu0 %v609, 256
          %v612 = vpop.permute.xlu0 %611
          %v613 = vlaneseq
          %v614 = vshrl.u32 %v613, 7
          %v615 = vsub.s32 7, %v614
          %v616 = vrot.slane %v563, %v615
          %618 = vbcast.lane.b32.xlu0 %v616, 256
          %v619 = vpop.permute.xlu0 %618
          %v620 = vld [vmem:[%s2] sm:$0x1]
          %v622 = vlaneseq
          %v623 = vshrl.u32 %v622, 7
          %v624 = vsub.s32 0, %v623
          %v625 = vrot.slane %v620, %v624
          %v627 = vmul.f32 %v570, %v625
          %v628 = vmul.f32 %v577, %v625
          %v629 = vmul.f32 %v584, %v625
          %v630 = vmul.f32 %v591, %v625
          %v631 = vmul.f32 %v598, %v625
          %v632 = vmul.f32 %v605, %v625
          %v633 = vmul.f32 %v612, %v625
          %v634 = vmul.f32 %v619, %v625
          %v635 = vld [vmem:[%s3] sm:$0x1]
          %v637 = vlaneseq
          %v638 = vshrl.u32 %v637, 7
          %v639 = vsub.s32 0, %v638
          %v640 = vrot.slane %v635, %v639
          %v642 = vadd.f32 %v627, %v640
          %v643 = vadd.f32 %v628, %v640
          %v644 = vadd.f32 %v629, %v640
          %v645 = vadd.f32 %v630, %v640
          %v646 = vadd.f32 %v631, %v640
          %v647 = vadd.f32 %v632, %v640
          %v648 = vadd.f32 %v633, %v640
          %v649 = vadd.f32 %v634, %v640
          %v650 = vld [vmem:[#allocation3] sm:$0xff]
          %v652 = vcombine.high %v650, %v650
          %v654 = vunpack.c.l.s4 1966171168
          %v655 = vunpack.c.0.s8 %v654
          %v656 = vlaneseq
          %v657 = vshrl.u32 %v656, 7
          %v658 = vsub.s32 %v655, %v657
          %v659 = vrot.slane %v650, %v658
          %v661 = vunpack.c.l.s4 1966171168
          %v662 = vunpack.c.0.s8 %v661
          %v663 = vlaneseq
          %v664 = vshrl.u32 %v663, 7
          %v665 = vsub.s32 %v662, %v664
          %v666 = vrot.slane %v652, %v665
          %v667 = vcombine.high %v659, %v659
          %v668 = vcombine.high %v666, %v666
          %v670 = vunpack.c.l.s4 1966171168
          %v671 = vunpack.c.0.s8 %v670
          %v672 = vlaneseq
          %v673 = vshrl.u32 %v672, 7
          %v674 = vsub.s32 %v671, %v673
          %v675 = vrot.slane %v659, %v674
          %v677 = vunpack.c.l.s4 1966171168
          %v678 = vunpack.c.0.s8 %v677
          %v679 = vlaneseq
          %v680 = vshrl.u32 %v679, 7
          %v681 = vsub.s32 %v678, %v680
          %v682 = vrot.slane %v666, %v681
          %v684 = vunpack.c.l.s4 1966171168
          %v685 = vunpack.c.0.s8 %v684
          %v686 = vlaneseq
          %v687 = vshrl.u32 %v686, 7
          %v688 = vsub.s32 %v685, %v687
          %v689 = vrot.slane %v667, %v688
          %v691 = vunpack.c.l.s4 1966171168
          %v692 = vunpack.c.0.s8 %v691
          %v693 = vlaneseq
          %v694 = vshrl.u32 %v693, 7
          %v695 = vsub.s32 %v692, %v694
          %v696 = vrot.slane %v668, %v695
          %v697 = vcombine.high %v675, %v675
          %v698 = vcombine.high %v682, %v682
          %v699 = vcombine.high %v689, %v689
          %v700 = vcombine.high %v696, %v696
          %v701 = vlaneseq
          %v702 = vshrl.u32 %v701, 7
          %v703 = vsub.s32 0, %v702
          %v704 = vrot.slane %v675, %v703
          %v705 = vlaneseq
          %v706 = vshrl.u32 %v705, 7
          %v707 = vsub.s32 0, %v706
          %v708 = vrot.slane %v689, %v707
          %v709 = vlaneseq
          %v710 = vshrl.u32 %v709, 7
          %v711 = vsub.s32 0, %v710
          %v712 = vrot.slane %v697, %v711
          %v713 = vlaneseq
          %v714 = vshrl.u32 %v713, 7
          %v715 = vsub.s32 0, %v714
          %v716 = vrot.slane %v699, %v715
          %v717 = vlaneseq
          %v718 = vshrl.u32 %v717, 7
          %v719 = vsub.s32 0, %v718
          %v720 = vrot.slane %v682, %v719
          %v721 = vlaneseq
          %v722 = vshrl.u32 %v721, 7
          %v723 = vsub.s32 0, %v722
          %v724 = vrot.slane %v696, %v723
          %v725 = vlaneseq
          %v726 = vshrl.u32 %v725, 7
          %v727 = vsub.s32 0, %v726
          %v728 = vrot.slane %v698, %v727
          %v729 = vlaneseq
          %v730 = vshrl.u32 %v729, 7
          %v731 = vsub.s32 0, %v730
          %v732 = vrot.slane %v700, %v731
          %v741 = vadd.f32 %v642, %v704
          %v742 = vadd.f32 %v643, %v708
          %v743 = vadd.f32 %v644, %v712
          %v744 = vadd.f32 %v645, %v716
          %v745 = vadd.f32 %v646, %v720
          %v746 = vadd.f32 %v647, %v724
          %v747 = vadd.f32 %v648, %v728
          %v748 = vadd.f32 %v649, %v732
          %v757 = vcombine.low %v741, %v742
          %v758 = vcombine.low %v743, %v744
          %v760 = vunpack.c.l.s4 1983009808
          %v761 = vunpack.c.0.s8 %v760
          %v762 = vlaneseq
          %v763 = vshrl.u32 %v762, 7
          %v764 = vsub.s32 %v761, %v763
          %v765 = vrot.slane %v757, %v764
          %v767 = vunpack.c.l.s4 1983009808
          %v768 = vunpack.c.0.s8 %v767
          %v769 = vlaneseq
          %v770 = vshrl.u32 %v769, 7
          %v771 = vsub.s32 %v768, %v770
          %v772 = vrot.slane %v758, %v771
          %v773 = vcombine.low %v765, %v772
          %v774 = vcombine.low %v745, %v746
          %v775 = vcombine.low %v747, %v748
          %v777 = vunpack.c.l.s4 1983009808
          %v778 = vunpack.c.0.s8 %v777
          %v779 = vlaneseq
          %v780 = vshrl.u32 %v779, 7
          %v781 = vsub.s32 %v778, %v780
          %v782 = vrot.slane %v774, %v781
          %v784 = vunpack.c.l.s4 1983009808
          %v785 = vunpack.c.0.s8 %v784
          %v786 = vlaneseq
          %v787 = vshrl.u32 %v786, 7
          %v788 = vsub.s32 %v785, %v787
          %v789 = vrot.slane %v775, %v788
          %v790 = vcombine.low %v782, %v789
          %vm793 = vcmask 261120
          %794 = vst.msk [vmem:[#allocation2] sm:$0xff] %vm793, %v773
          %795 = vst.msk [vmem:[#allocation2 + $0x8] sm:$0xff] %vm793, %v790
        $region80: #{tpu_custom_call.1} parent=71 // pred_fallthru
          _
        %v796 = vld [vmem:[#allocation2] sm:$0xff]
        %v797 = vld [vmem:[#allocation2 + $0x8] sm:$0xff]
        %v798 = vld [vmem:[%s557] sm:$0xff]
        %v799 = vpack.c.bf16 %v797, %v796
        %v800 = vld [vmem:[%s538] sm:$0xf]
        %v801 = vld [vmem:[%s538 + $0x4] sm:$0xf]
        %v802 = vld [vmem:[%s538 + $0x8] sm:$0xf]
        %v803 = vld [vmem:[%s538 + $0xc] sm:$0xf]
        %v804 = vlaneseq
        %v805 = vshrl.u32 %v804, 7
        %v806 = vsub.s32 0, %v805
        %v807 = vrot.slane %v798, %v806
        %v812 = vunpack.c.l.b16 %v800
        %v813 = vunpack.c.l.b16 %v801
        %v814 = vunpack.c.l.b16 %v802
        %v815 = vunpack.c.l.b16 %v803
        %v816 = vpack.c.b16 %v813, %v812
        %v817 = vpack.c.b16 %v815, %v814
        %vm820 = vcmask 261120
        %v822 = vsel %vm820, %v799, 0
        %824 = vmatprep.subr.bf16.mxu0 0
        %825 = vmatpush1.bf16.msra.mxu0 %v816
        %826 = vmatprep.subr.bf16.mxu0 0
        %827 = vmatpush1.bf16.msra.mxu0 %v817
        %828 = vmatprep.subr.bf16.mxu0 0
        %829 = vmatpush1.bf16.msra.mxu0 0
        %830 = vmatprep.subr.bf16.mxu0 0
        %831 = vmatpush1.bf16.msra.mxu0 0
        %832 = vmatprep.subr.bf16.mxu0 0
        %833 = vmatpush1.bf16.msra.mxu0 0
        %834 = vmatprep.subr.bf16.mxu0 0
        %835 = vmatpush1.bf16.msra.mxu0 0
        %836 = vmatprep.subr.bf16.mxu0 0
        %837 = vmatpush1.bf16.msra.mxu0 0
        %838 = vmatprep.subr.bf16.mxu0 0
        %839 = vmatpush1.bf16.msra.mxu0 0
        %840 = vmatprep.subr.bf16.mxu0 0
        %841 = vmatpush1.bf16.msra.mxu0 0
        %842 = vmatprep.subr.bf16.mxu0 0
        %843 = vmatpush1.bf16.msra.mxu0 0
        %844 = vmatprep.subr.bf16.mxu0 0
        %845 = vmatpush1.bf16.msra.mxu0 0
        %846 = vmatprep.subr.bf16.mxu0 0
        %847 = vmatpush1.bf16.msra.mxu0 0
        %848 = vmatprep.subr.bf16.mxu0 0
        %849 = vmatpush1.bf16.msra.mxu0 0
        %850 = vmatprep.subr.bf16.mxu0 0
        %851 = vmatpush1.bf16.msra.mxu0 0
        %852 = vmatprep.subr.bf16.mxu0 0
        %853 = vmatpush1.bf16.msra.mxu0 0
        %854 = vmatprep.subr.bf16.mxu0 0
        %855 = vmatpush1.bf16.msra.mxu0 0
        %856 = vmatprep.mubr.bf16.mxu0 0
        %857 = vmatmul.mubr.bf16.gmra.mrb[0].mxu0 %v822
        %v858 = vpop.f32.mrb[0].mxu0
        %v859 = vadd.f32 %v807, %v858
        %v860 = vpop.f32.mrb[0].mxu0
        %v861 = vpop.f32.mrb[0].mxu0
        %v862 = vadd.f32 %v807, %v861
        %v863 = vpop.f32.mrb[0].mxu0
        %864 = vdwg.mxu0
        %v865 = vpack.c.bf16 %v862, %v859
        %v867 = vcombine.high %v865, %v865
        %v869 = vunpack.c.l.s4 1966171168
        %v870 = vunpack.c.0.s8 %v869
        %v871 = vlaneseq
        %v872 = vshrl.u32 %v871, 7
        %v873 = vsub.s32 %v870, %v872
        %v874 = vrot.slane %v865, %v873
        %v876 = vunpack.c.l.s4 1966171168
        %v877 = vunpack.c.0.s8 %v876
        %v878 = vlaneseq
        %v879 = vshrl.u32 %v878, 7
        %v880 = vsub.s32 %v877, %v879
        %v881 = vrot.slane %v867, %v880
        %v882 = vcombine.high %v874, %v874
        %v883 = vcombine.high %v881, %v881
        %v885 = vunpack.c.l.s4 1966171168
        %v886 = vunpack.c.0.s8 %v885
        %v887 = vlaneseq
        %v888 = vshrl.u32 %v887, 7
        %v889 = vsub.s32 %v886, %v888
        %v890 = vrot.slane %v874, %v889
        %v892 = vunpack.c.l.s4 1966171168
        %v893 = vunpack.c.0.s8 %v892
        %v894 = vlaneseq
        %v895 = vshrl.u32 %v894, 7
        %v896 = vsub.s32 %v893, %v895
        %v897 = vrot.slane %v881, %v896
        %v899 = vunpack.c.l.s4 1966171168
        %v900 = vunpack.c.0.s8 %v899
        %v901 = vlaneseq
        %v902 = vshrl.u32 %v901, 7
        %v903 = vsub.s32 %v900, %v902
        %v904 = vrot.slane %v882, %v903
        %v906 = vunpack.c.l.s4 1966171168
        %v907 = vunpack.c.0.s8 %v906
        %v908 = vlaneseq
        %v909 = vshrl.u32 %v908, 7
        %v910 = vsub.s32 %v907, %v909
        %v911 = vrot.slane %v883, %v910
        %v912 = vcombine.high %v890, %v890
        %v913 = vcombine.high %v897, %v897
        %v914 = vcombine.high %v904, %v904
        %v915 = vcombine.high %v911, %v911
        %v916 = vld [vmem:[%s543] sm:$0xf]
        %v917 = vld [vmem:[%s543 + $0x4] sm:$0xf]
        %v918 = vld [vmem:[%s543 + $0x8] sm:$0xf]
        %v919 = vld [vmem:[%s543 + $0xc] sm:$0xf]
        %v921 = vunpack.c.l.s4 1966171168
        %v922 = vunpack.c.0.s8 %v921
        %v923 = vlaneseq
        %v924 = vshrl.u32 %v923, 7
        %v925 = vsub.s32 %v922, %v924
        %v926 = vrot.slane %v890, %v925
        %v928 = vunpack.c.l.s4 1966171168
        %v929 = vunpack.c.0.s8 %v928
        %v930 = vlaneseq
        %v931 = vshrl.u32 %v930, 7
        %v932 = vsub.s32 %v929, %v931
        %v933 = vrot.slane %v926, %v932
        %934 = vrot.lane.b32.xlu0 %v933, 96
        %v935 = vpop.permute.xlu0 %934
        %vm936 = vcmask 64512
        %v938 = vsel %vm936, %v890, 0
        %v941 = vsel %vm936, %v935, 0
        %943 = vmatprep.subr.bf16.mxu0 0
        %944 = vmatpush1.bf16.xpose.msra.mxu0 %v941
        %945 = vmatprep.subr.bf16.mxu0 0
        %946 = vmatpush1.bf16.xpose.msra.mxu0 0
        %947 = vmatprep.subr.bf16.mxu0 0
        %948 = vmatpush1.bf16.xpose.msra.mxu0 0
        %949 = vmatprep.subr.bf16.mxu0 0
        %950 = vmatpush1.bf16.xpose.msra.mxu0 0
        %951 = vmatprep.subr.bf16.mxu0 0
        %952 = vmatpush1.bf16.xpose.msra.mxu0 0
        %953 = vmatprep.subr.bf16.mxu0 0
        %954 = vmatpush1.bf16.xpose.msra.mxu0 0
        %955 = vmatprep.subr.bf16.mxu0 0
        %956 = vmatpush1.bf16.xpose.msra.mxu0 0
        %957 = vmatprep.subr.bf16.mxu0 0
        %958 = vmatpush1.bf16.xpose.msra.mxu0 0
        %959 = vmatprep.subr.bf16.mxu0 0
        %960 = vmatpush1.bf16.xpose.msra.mxu0 0
        %961 = vmatprep.subr.bf16.mxu0 0
        %962 = vmatpush1.bf16.xpose.msra.mxu0 0
        %963 = vmatprep.subr.bf16.mxu0 0
        %964 = vmatpush1.bf16.xpose.msra.mxu0 0
        %965 = vmatprep.subr.bf16.mxu0 0
        %966 = vmatpush1.bf16.xpose.msra.mxu0 0
        %967 = vmatprep.subr.bf16.mxu0 0
        %968 = vmatpush1.bf16.xpose.msra.mxu0 0
        %969 = vmatprep.subr.bf16.mxu0 0
        %970 = vmatpush1.bf16.xpose.msra.mxu0 0
        %971 = vmatprep.subr.bf16.mxu0 0
        %972 = vmatpush1.bf16.xpose.msra.mxu0 0
        %973 = vmatprep.subr.bf16.mxu0 0
        %974 = vmatpush1.bf16.xpose.msra.mxu0 0
        %975 = vmatprep.mubr.bf16.mxu0 0
        %976 = vmatmul.mubr.bf16.gmra.mrb[0].mxu0 %v938
        %v977 = vpop.f32.mrb[0].mxu0
        %v978 = vadd.f32 0.0, %v977
        %v979 = vpop.f32.mrb[0].mxu0
        %v980 = vpop.f32.mrb[0].mxu0
        %v981 = vpop.f32.mrb[0].mxu0
        %982 = vdwg.mxu0
        %v984 = vunpack.c.l.s4 1966171168
        %v985 = vunpack.c.0.s8 %v984
        %v986 = vlaneseq
        %v987 = vshrl.u32 %v986, 7
        %v988 = vsub.s32 %v985, %v987
        %v989 = vrot.slane %v904, %v988
        %v991 = vunpack.c.l.s4 1966171168
        %v992 = vunpack.c.0.s8 %v991
        %v993 = vlaneseq
        %v994 = vshrl.u32 %v993, 7
        %v995 = vsub.s32 %v992, %v994
        %v996 = vrot.slane %v989, %v995
        %997 = vrot.lane.b32.xlu0 %v996, 96
        %v998 = vpop.permute.xlu0 %997
        %v1000 = vsel %vm936, %v904, 0
        %v1003 = vsel %vm936, %v998, 0
        %1005 = vmatprep.subr.bf16.mxu0 0
        %1006 = vmatpush1.bf16.xpose.msra.mxu0 %v1003
        %1007 = vmatprep.subr.bf16.mxu0 0
        %1008 = vmatpush1.bf16.xpose.msra.mxu0 0
        %1009 = vmatprep.subr.bf16.mxu0 0
        %1010 = vmatpush1.bf16.xpose.msra.mxu0 0
        %1011 = vmatprep.subr.bf16.mxu0 0
        %1012 = vmatpush1.bf16.xpose.msra.mxu0 0
        %1013 = vmatprep.subr.bf16.mxu0 0
        %1014 = vmatpush1.bf16.xpose.msra.mxu0 0
        %1015 = vmatprep.subr.bf16.mxu0 0
        %1016 = vmatpush1.bf16.xpose.msra.mxu0 0
        %1017 = vmatprep.subr.bf16.mxu0 0
        %1018 = vmatpush1.bf16.xpose.msra.mxu0 0
        %1019 = vmatprep.subr.bf16.mxu0 0
        %1020 = vmatpush1.bf16.xpose.msra.mxu0 0
        %1021 = vmatprep.subr.bf16.mxu0 0
        %1022 = vmatpush1.bf16.xpose.msra.mxu0 0
        %1023 = vmatprep.subr.bf16.mxu0 0
        %1024 = vmatpush1.bf16.xpose.msra.mxu0 0
        %1025 = vmatprep.subr.bf16.mxu0 0
        %1026 = vmatpush1.bf16.xpose.msra.mxu0 0
        %1027 = vmatprep.subr.bf16.mxu0 0
        %1028 = vmatpush1.bf16.xpose.msra.mxu0 0
        %1029 = vmatprep.subr.bf16.mxu0 0
        %1030 = vmatpush1.bf16.xpose.msra.mxu0 0
        %1031 = vmatprep.subr.bf16.mxu0 0
        %1032 = vmatpush1.bf16.xpose.msra.mxu0 0
        %1033 = vmatprep.subr.bf16.mxu0 0
        %1034 = vmatpush1.bf16.xpose.msra.mxu0 0
        %1035 = vmatprep.subr.bf16.mxu0 0
        %1036 = vmatpush1.bf16.xpose.msra.mxu0 0
        %1037 = vmatprep.mubr.bf16.mxu0 0
        %1038 = vmatmul.mubr.bf16.gmra.mrb[0].mxu0 %v1000
        %v1039 = vpop.f32.mrb[0].mxu0
        %v1040 = vadd.f32 0.0, %v1039
        %v1041 = vpop.f32.mrb[0].mxu0
        %v1042 = vpop.f32.mrb[0].mxu0
        %v1043 = vpop.f32.mrb[0].mxu0
        %1044 = vdwg.mxu0
        %v1046 = vunpack.c.l.s4 1966171168
        %v1047 = vunpack.c.0.s8 %v1046
        %v1048 = vlaneseq
        %v1049 = vshrl.u32 %v1048, 7
        %v1050 = vsub.s32 %v1047, %v1049
        %v1051 = vrot.slane %v912, %v1050
        %v1053 = vunpack.c.l.s4 1966171168
        %v1054 = vunpack.c.0.s8 %v1053
        %v1055 = vlaneseq
        %v1056 = vshrl.u32 %v1055, 7
        %v1057 = vsub.s32 %v1054, %v1056
        %v1058 = vrot.slane %v1051, %v1057
        %1059 = vrot.lane.b32.xlu0 %v1058, 96
        %v1060 = vpop.permute.xlu0 %1059
        %v1062 = vsel %vm936, %v912, 0
        %v1065 = vsel %vm936, %v1060, 0
        %1067 = vmatprep.subr.bf16.mxu0 0
        %1068 = vmatpush1.bf16.xpose.msra.mxu0 %v1065
        %1069 = vmatprep.subr.bf16.mxu0 0
        %1070 = vmatpush1.bf16.xpose.msra.mxu0 0
        %1071 = vmatprep.subr.bf16.mxu0 0
        %1072 = vmatpush1.bf16.xpose.msra.mxu0 0
        %1073 = vmatprep.subr.bf16.mxu0 0
        %1074 = vmatpush1.bf16.xpose.msra.mxu0 0
        %1075 = vmatprep.subr.bf16.mxu0 0
        %1076 = vmatpush1.bf16.xpose.msra.mxu0 0
        %1077 = vmatprep.subr.bf16.mxu0 0
        %1078 = vmatpush1.bf16.xpose.msra.mxu0 0
        %1079 = vmatprep.subr.bf16.mxu0 0
        %1080 = vmatpush1.bf16.xpose.msra.mxu0 0
        %1081 = vmatprep.subr.bf16.mxu0 0
        %1082 = vmatpush1.bf16.xpose.msra.mxu0 0
        %1083 = vmatprep.subr.bf16.mxu0 0
        %1084 = vmatpush1.bf16.xpose.msra.mxu0 0
        %1085 = vmatprep.subr.bf16.mxu0 0
        %1086 = vmatpush1.bf16.xpose.msra.mxu0 0
        %1087 = vmatprep.subr.bf16.mxu0 0
        %1088 = vmatpush1.bf16.xpose.msra.mxu0 0
        %1089 = vmatprep.subr.bf16.mxu0 0
        %1090 = vmatpush1.bf16.xpose.msra.mxu0 0
        %1091 = vmatprep.subr.bf16.mxu0 0
        %1092 = vmatpush1.bf16.xpose.msra.mxu0 0
        %1093 = vmatprep.subr.bf16.mxu0 0
        %1094 = vmatpush1.bf16.xpose.msra.mxu0 0
        %1095 = vmatprep.subr.bf16.mxu0 0
        %1096 = vmatpush1.bf16.xpose.msra.mxu0 0
        %1097 = vmatprep.subr.bf16.mxu0 0
        %1098 = vmatpush1.bf16.xpose.msra.mxu0 0
        %1099 = vmatprep.mubr.bf16.mxu0 0
        %1100 = vmatmul.mubr.bf16.gmra.mrb[0].mxu0 %v1062
        %v1101 = vpop.f32.mrb[0].mxu0
        %v1102 = vadd.f32 0.0, %v1101
        %v1103 = vpop.f32.mrb[0].mxu0
        %v1104 = vpop.f32.mrb[0].mxu0
        %v1105 = vpop.f32.mrb[0].mxu0
        %1106 = vdwg.mxu0
        %v1108 = vunpack.c.l.s4 1966171168
        %v1109 = vunpack.c.0.s8 %v1108
        %v1110 = vlaneseq
        %v1111 = vshrl.u32 %v1110, 7
        %v1112 = vsub.s32 %v1109, %v1111
        %v1113 = vrot.slane %v914, %v1112
        %v1115 = vunpack.c.l.s4 1966171168
        %v1116 = vunpack.c.0.s8 %v1115
        %v1117 = vlaneseq
        %v1118 = vshrl.u32 %v1117, 7
        %v1119 = vsub.s32 %v1116, %v1118
        %v1120 = vrot.slane %v1113, %v1119
        %1121 = vrot.lane.b32.xlu0 %v1120, 96
        %v1122 = vpop.permute.xlu0 %1121
        %v1124 = vsel %vm936, %v914, 0
        %v1127 = vsel %vm936, %v1122, 0
        %1129 = vmatprep.subr.bf16.mxu0 0
        %1130 = vmatpush1.bf16.xpose.msra.mxu0 %v1127
        %1131 = vmatprep.subr.bf16.mxu0 0
        %1132 = vmatpush1.bf16.xpose.msra.mxu0 0
        %1133 = vmatprep.subr.bf16.mxu0 0
        %1134 = vmatpush1.bf16.xpose.msra.mxu0 0
        %1135 = vmatprep.subr.bf16.mxu0 0
        %1136 = vmatpush1.bf16.xpose.msra.mxu0 0
        %1137 = vmatprep.subr.bf16.mxu0 0
        %1138 = vmatpush1.bf16.xpose.msra.mxu0 0
        %1139 = vmatprep.subr.bf16.mxu0 0
        %1140 = vmatpush1.bf16.xpose.msra.mxu0 0
        %1141 = vmatprep.subr.bf16.mxu0 0
        %1142 = vmatpush1.bf16.xpose.msra.mxu0 0
        %1143 = vmatprep.subr.bf16.mxu0 0
        %1144 = vmatpush1.bf16.xpose.msra.mxu0 0
        %1145 = vmatprep.subr.bf16.mxu0 0
        %1146 = vmatpush1.bf16.xpose.msra.mxu0 0
        %1147 = vmatprep.subr.bf16.mxu0 0
        %1148 = vmatpush1.bf16.xpose.msra.mxu0 0
        %1149 = vmatprep.subr.bf16.mxu0 0
        %1150 = vmatpush1.bf16.xpose.msra.mxu0 0
        %1151 = vmatprep.subr.bf16.mxu0 0
        %1152 = vmatpush1.bf16.xpose.msra.mxu0 0
        %1153 = vmatprep.subr.bf16.mxu0 0
        %1154 = vmatpush1.bf16.xpose.msra.mxu0 0
        %1155 = vmatprep.subr.bf16.mxu0 0
        %1156 = vmatpush1.bf16.xpose.msra.mxu0 0
        %1157 = vmatprep.subr.bf16.mxu0 0
        %1158 = vmatpush1.bf16.xpose.msra.mxu0 0
        %1159 = vmatprep.subr.bf16.mxu0 0
        %1160 = vmatpush1.bf16.xpose.msra.mxu0 0
        %1161 = vmatprep.mubr.bf16.mxu0 0
        %1162 = vmatmul.mubr.bf16.gmra.mrb[0].mxu0 %v1124
        %v1163 = vpop.f32.mrb[0].mxu0
        %v1164 = vadd.f32 0.0, %v1163
        %v1165 = vpop.f32.mrb[0].mxu0
        %v1166 = vpop.f32.mrb[0].mxu0
        %v1167 = vpop.f32.mrb[0].mxu0
        %1168 = vdwg.mxu0
        %v1170 = vunpack.c.l.s4 1966171168
        %v1171 = vunpack.c.0.s8 %v1170
        %v1172 = vlaneseq
        %v1173 = vshrl.u32 %v1172, 7
        %v1174 = vsub.s32 %v1171, %v1173
        %v1175 = vrot.slane %v897, %v1174
        %v1177 = vunpack.c.l.s4 1966171168
        %v1178 = vunpack.c.0.s8 %v1177
        %v1179 = vlaneseq
        %v1180 = vshrl.u32 %v1179, 7
        %v1181 = vsub.s32 %v1178, %v1180
        %v1182 = vrot.slane %v1175, %v1181
        %1183 = vrot.lane.b32.xlu0 %v1182, 96
        %v1184 = vpop.permute.xlu0 %1183
        %v1186 = vsel %vm936, %v897, 0
        %v1189 = vsel %vm936, %v1184, 0
        %1191 = vmatprep.subr.bf16.mxu0 0
        %1192 = vmatpush1.bf16.xpose.msra.mxu0 %v1189
        %1193 = vmatprep.subr.bf16.mxu0 0
        %1194 = vmatpush1.bf16.xpose.msra.mxu0 0
        %1195 = vmatprep.subr.bf16.mxu0 0
        %1196 = vmatpush1.bf16.xpose.msra.mxu0 0
        %1197 = vmatprep.subr.bf16.mxu0 0
        %1198 = vmatpush1.bf16.xpose.msra.mxu0 0
        %1199 = vmatprep.subr.bf16.mxu0 0
        %1200 = vmatpush1.bf16.xpose.msra.mxu0 0
        %1201 = vmatprep.subr.bf16.mxu0 0
        %1202 = vmatpush1.bf16.xpose.msra.mxu0 0
        %1203 = vmatprep.subr.bf16.mxu0 0
        %1204 = vmatpush1.bf16.xpose.msra.mxu0 0
        %1205 = vmatprep.subr.bf16.mxu0 0
        %1206 = vmatpush1.bf16.xpose.msra.mxu0 0
        %1207 = vmatprep.subr.bf16.mxu0 0
        %1208 = vmatpush1.bf16.xpose.msra.mxu0 0
        %1209 = vmatprep.subr.bf16.mxu0 0
        %1210 = vmatpush1.bf16.xpose.msra.mxu0 0
        %1211 = vmatprep.subr.bf16.mxu0 0
        %1212 = vmatpush1.bf16.xpose.msra.mxu0 0
        %1213 = vmatprep.subr.bf16.mxu0 0
        %1214 = vmatpush1.bf16.xpose.msra.mxu0 0
        %1215 = vmatprep.subr.bf16.mxu0 0
        %1216 = vmatpush1.bf16.xpose.msra.mxu0 0
        %1217 = vmatprep.subr.bf16.mxu0 0
        %1218 = vmatpush1.bf16.xpose.msra.mxu0 0
        %1219 = vmatprep.subr.bf16.mxu0 0
        %1220 = vmatpush1.bf16.xpose.msra.mxu0 0
        %1221 = vmatprep.subr.bf16.mxu0 0
        %1222 = vmatpush1.bf16.xpose.msra.mxu0 0
        %1223 = vmatprep.mubr.bf16.mxu0 0
        %1224 = vmatmul.mubr.bf16.gmra.mrb[0].mxu0 %v1186
        %v1225 = vpop.f32.mrb[0].mxu0
        %v1226 = vadd.f32 0.0, %v1225
        %v1227 = vpop.f32.mrb[0].mxu0
        %v1228 = vpop.f32.mrb[0].mxu0
        %v1229 = vpop.f32.mrb[0].mxu0
        %1230 = vdwg.mxu0
        %v1232 = vunpack.c.l.s4 1966171168
        %v1233 = vunpack.c.0.s8 %v1232
        %v1234 = vlaneseq
        %v1235 = vshrl.u32 %v1234, 7
        %v1236 = vsub.s32 %v1233, %v1235
        %v1237 = vrot.slane %v911, %v1236
        %v1239 = vunpack.c.l.s4 1966171168
        %v1240 = vunpack.c.0.s8 %v1239
        %v1241 = vlaneseq
        %v1242 = vshrl.u32 %v1241, 7
        %v1243 = vsub.s32 %v1240, %v1242
        %v1244 = vrot.slane %v1237, %v1243
        %1245 = vrot.lane.b32.xlu0 %v1244, 96
        %v1246 = vpop.permute.xlu0 %1245
        %v1248 = vsel %vm936, %v911, 0
        %v1251 = vsel %vm936, %v1246, 0
        %1253 = vmatprep.subr.bf16.mxu0 0
        %1254 = vmatpush1.bf16.xpose.msra.mxu0 %v1251
        %1255 = vmatprep.subr.bf16.mxu0 0
        %1256 = vmatpush1.bf16.xpose.msra.mxu0 0
        %1257 = vmatprep.subr.bf16.mxu0 0
        %1258 = vmatpush1.bf16.xpose.msra.mxu0 0
        %1259 = vmatprep.subr.bf16.mxu0 0
        %1260 = vmatpush1.bf16.xpose.msra.mxu0 0
        %1261 = vmatprep.subr.bf16.mxu0 0
        %1262 = vmatpush1.bf16.xpose.msra.mxu0 0
        %1263 = vmatprep.subr.bf16.mxu0 0
        %1264 = vmatpush1.bf16.xpose.msra.mxu0 0
        %1265 = vmatprep.subr.bf16.mxu0 0
        %1266 = vmatpush1.bf16.xpose.msra.mxu0 0
        %1267 = vmatprep.subr.bf16.mxu0 0
        %1268 = vmatpush1.bf16.xpose.msra.mxu0 0
        %1269 = vmatprep.subr.bf16.mxu0 0
        %1270 = vmatpush1.bf16.xpose.msra.mxu0 0
        %1271 = vmatprep.subr.bf16.mxu0 0
        %1272 = vmatpush1.bf16.xpose.msra.mxu0 0
        %1273 = vmatprep.subr.bf16.mxu0 0
        %1274 = vmatpush1.bf16.xpose.msra.mxu0 0
        %1275 = vmatprep.subr.bf16.mxu0 0
        %1276 = vmatpush1.bf16.xpose.msra.mxu0 0
        %1277 = vmatprep.subr.bf16.mxu0 0
        %1278 = vmatpush1.bf16.xpose.msra.mxu0 0
        %1279 = vmatprep.subr.bf16.mxu0 0
        %1280 = vmatpush1.bf16.xpose.msra.mxu0 0
        %1281 = vmatprep.subr.bf16.mxu0 0
        %1282 = vmatpush1.bf16.xpose.msra.mxu0 0
        %1283 = vmatprep.subr.bf16.mxu0 0
        %1284 = vmatpush1.bf16.xpose.msra.mxu0 0
        %1285 = vmatprep.mubr.bf16.mxu0 0
        %1286 = vmatmul.mubr.bf16.gmra.mrb[0].mxu0 %v1248
        %v1287 = vpop.f32.mrb[0].mxu0
        %v1288 = vadd.f32 0.0, %v1287
        %v1289 = vpop.f32.mrb[0].mxu0
        %v1290 = vpop.f32.mrb[0].mxu0
        %v1291 = vpop.f32.mrb[0].mxu0
        %1292 = vdwg.mxu0
        %v1294 = vunpack.c.l.s4 1966171168
        %v1295 = vunpack.c.0.s8 %v1294
        %v1296 = vlaneseq
        %v1297 = vshrl.u32 %v1296, 7
        %v1298 = vsub.s32 %v1295, %v1297
        %v1299 = vrot.slane %v913, %v1298
        %v1301 = vunpack.c.l.s4 1966171168
        %v1302 = vunpack.c.0.s8 %v1301
        %v1303 = vlaneseq
        %v1304 = vshrl.u32 %v1303, 7
        %v1305 = vsub.s32 %v1302, %v1304
        %v1306 = vrot.slane %v1299, %v1305
        %1307 = vrot.lane.b32.xlu0 %v1306, 96
        %v1308 = vpop.permute.xlu0 %1307
        %v1310 = vsel %vm936, %v913, 0
        %v1313 = vsel %vm936, %v1308, 0
        %1315 = vmatprep.subr.bf16.mxu0 0
        %1316 = vmatpush1.bf16.xpose.msra.mxu0 %v1313
        %1317 = vmatprep.subr.bf16.mxu0 0
        %1318 = vmatpush1.bf16.xpose.msra.mxu0 0
        %1319 = vmatprep.subr.bf16.mxu0 0
        %1320 = vmatpush1.bf16.xpose.msra.mxu0 0
        %1321 = vmatprep.subr.bf16.mxu0 0
        %1322 = vmatpush1.bf16.xpose.msra.mxu0 0
        %1323 = vmatprep.subr.bf16.mxu0 0
        %1324 = vmatpush1.bf16.xpose.msra.mxu0 0
        %1325 = vmatprep.subr.bf16.mxu0 0
        %1326 = vmatpush1.bf16.xpose.msra.mxu0 0
        %1327 = vmatprep.subr.bf16.mxu0 0
        %1328 = vmatpush1.bf16.xpose.msra.mxu0 0
        %1329 = vmatprep.subr.bf16.mxu0 0
        %1330 = vmatpush1.bf16.xpose.msra.mxu0 0
        %1331 = vmatprep.subr.bf16.mxu0 0
        %1332 = vmatpush1.bf16.xpose.msra.mxu0 0
        %1333 = vmatprep.subr.bf16.mxu0 0
        %1334 = vmatpush1.bf16.xpose.msra.mxu0 0
        %1335 = vmatprep.subr.bf16.mxu0 0
        %1336 = vmatpush1.bf16.xpose.msra.mxu0 0
        %1337 = vmatprep.subr.bf16.mxu0 0
        %1338 = vmatpush1.bf16.xpose.msra.mxu0 0
        %1339 = vmatprep.subr.bf16.mxu0 0
        %1340 = vmatpush1.bf16.xpose.msra.mxu0 0
        %1341 = vmatprep.subr.bf16.mxu0 0
        %1342 = vmatpush1.bf16.xpose.msra.mxu0 0
        %1343 = vmatprep.subr.bf16.mxu0 0
        %1344 = vmatpush1.bf16.xpose.msra.mxu0 0
        %1345 = vmatprep.subr.bf16.mxu0 0
        %1346 = vmatpush1.bf16.xpose.msra.mxu0 0
        %1347 = vmatprep.mubr.bf16.mxu0 0
        %1348 = vmatmul.mubr.bf16.gmra.mrb[0].mxu0 %v1310
        %v1349 = vpop.f32.mrb[0].mxu0
        %v1350 = vadd.f32 0.0, %v1349
        %v1351 = vpop.f32.mrb[0].mxu0
        %v1352 = vpop.f32.mrb[0].mxu0
        %v1353 = vpop.f32.mrb[0].mxu0
        %1354 = vdwg.mxu0
        %v1356 = vunpack.c.l.s4 1966171168
        %v1357 = vunpack.c.0.s8 %v1356
        %v1358 = vlaneseq
        %v1359 = vshrl.u32 %v1358, 7
        %v1360 = vsub.s32 %v1357, %v1359
        %v1361 = vrot.slane %v915, %v1360
        %v1363 = vunpack.c.l.s4 1966171168
        %v1364 = vunpack.c.0.s8 %v1363
        %v1365 = vlaneseq
        %v1366 = vshrl.u32 %v1365, 7
        %v1367 = vsub.s32 %v1364, %v1366
        %v1368 = vrot.slane %v1361, %v1367
        %1369 = vrot.lane.b32.xlu0 %v1368, 96
        %v1370 = vpop.permute.xlu0 %1369
        %v1372 = vsel %vm936, %v915, 0
        %v1375 = vsel %vm936, %v1370, 0
        %1377 = vmatprep.subr.bf16.mxu0 0
        %1378 = vmatpush1.bf16.xpose.msra.mxu0 %v1375
        %1379 = vmatprep.subr.bf16.mxu0 0
        %1380 = vmatpush1.bf16.xpose.msra.mxu0 0
        %1381 = vmatprep.subr.bf16.mxu0 0
        %1382 = vmatpush1.bf16.xpose.msra.mxu0 0
        %1383 = vmatprep.subr.bf16.mxu0 0
        %1384 = vmatpush1.bf16.xpose.msra.mxu0 0
        %1385 = vmatprep.subr.bf16.mxu0 0
        %1386 = vmatpush1.bf16.xpose.msra.mxu0 0
        %1387 = vmatprep.subr.bf16.mxu0 0
        %1388 = vmatpush1.bf16.xpose.msra.mxu0 0
        %1389 = vmatprep.subr.bf16.mxu0 0
        %1390 = vmatpush1.bf16.xpose.msra.mxu0 0
        %1391 = vmatprep.subr.bf16.mxu0 0
        %1392 = vmatpush1.bf16.xpose.msra.mxu0 0
        %1393 = vmatprep.subr.bf16.mxu0 0
        %1394 = vmatpush1.bf16.xpose.msra.mxu0 0
        %1395 = vmatprep.subr.bf16.mxu0 0
        %1396 = vmatpush1.bf16.xpose.msra.mxu0 0
        %1397 = vmatprep.subr.bf16.mxu0 0
        %1398 = vmatpush1.bf16.xpose.msra.mxu0 0
        %1399 = vmatprep.subr.bf16.mxu0 0
        %1400 = vmatpush1.bf16.xpose.msra.mxu0 0
        %1401 = vmatprep.subr.bf16.mxu0 0
        %1402 = vmatpush1.bf16.xpose.msra.mxu0 0
        %1403 = vmatprep.subr.bf16.mxu0 0
        %1404 = vmatpush1.bf16.xpose.msra.mxu0 0
        %1405 = vmatprep.subr.bf16.mxu0 0
        %1406 = vmatpush1.bf16.xpose.msra.mxu0 0
        %1407 = vmatprep.subr.bf16.mxu0 0
        %1408 = vmatpush1.bf16.xpose.msra.mxu0 0
        %1409 = vmatprep.mubr.bf16.mxu0 0
        %1410 = vmatmul.mubr.bf16.gmra.mrb[0].mxu0 %v1372
        %v1411 = vpop.f32.mrb[0].mxu0
        %v1412 = vadd.f32 0.0, %v1411
        %v1413 = vpop.f32.mrb[0].mxu0
        %v1414 = vpop.f32.mrb[0].mxu0
        %v1415 = vpop.f32.mrb[0].mxu0
        %1416 = vdwg.mxu0
        %vm1417 = vcmask 9216
        %v1418 = vsel %vm1417, %v978, -inf
        %1419 = vmax.xlane.f32.xlu0 %v1418
        %v1420 = vpop.xlane.xlu0 %1419
        %v1421 = vsel %vm1417, %v1040, -inf
        %1422 = vmax.xlane.f32.xlu0 %v1421
        %v1423 = vpop.xlane.xlu0 %1422
        %v1424 = vsel %vm1417, %v1102, -inf
        %1425 = vmax.xlane.f32.xlu0 %v1424
        %v1426 = vpop.xlane.xlu0 %1425
        %v1427 = vsel %vm1417, %v1164, -inf
        %1428 = vmax.xlane.f32.xlu0 %v1427
        %v1429 = vpop.xlane.xlu0 %1428
        %v1430 = vsel %vm1417, %v1226, -inf
        %1431 = vmax.xlane.f32.xlu0 %v1430
        %v1432 = vpop.xlane.xlu0 %1431
        %v1433 = vsel %vm1417, %v1288, -inf
        %1434 = vmax.xlane.f32.xlu0 %v1433
        %v1435 = vpop.xlane.xlu0 %1434
        %v1436 = vsel %vm1417, %v1350, -inf
        %1437 = vmax.xlane.f32.xlu0 %v1436
        %v1438 = vpop.xlane.xlu0 %1437
        %v1439 = vsel %vm1417, %v1412, -inf
        %1440 = vmax.xlane.f32.xlu0 %v1439
        %v1441 = vpop.xlane.xlu0 %1440
        %v1442 = vsub.f32 %v978, %v1420
        %v1443 = vsub.f32 %v1040, %v1423
        %v1444 = vsub.f32 %v1102, %v1426
        %v1445 = vsub.f32 %v1164, %v1429
        %v1446 = vsub.f32 %v1226, %v1432
        %v1447 = vsub.f32 %v1288, %v1435
        %v1448 = vsub.f32 %v1350, %v1438
        %v1449 = vsub.f32 %v1412, %v1441
        %v1450 = vmul.f32 %v1442, 1.442695
        %v1451 = vpow.pop %v1450
        %v1452 = vmul.f32 %v1443, 1.442695
        %v1453 = vpow.pop %v1452
        %v1454 = vmul.f32 %v1444, 1.442695
        %v1455 = vpow.pop %v1454
        %v1456 = vmul.f32 %v1445, 1.442695
        %v1457 = vpow.pop %v1456
        %v1458 = vmul.f32 %v1446, 1.442695
        %v1459 = vpow.pop %v1458
        %v1460 = vmul.f32 %v1447, 1.442695
        %v1461 = vpow.pop %v1460
        %v1462 = vmul.f32 %v1448, 1.442695
        %v1463 = vpow.pop %v1462
        %v1464 = vmul.f32 %v1449, 1.442695
        %v1465 = vpow.pop %v1464
        %v1466 = vsel %vm1417, %v1451, 0.0
        %1467 = vadd.xlane.f32.xlu0 %v1466
        %v1468 = vpop.xlane.xlu0 %1467
        %v1469 = vsel %vm1417, %v1453, 0.0
        %1470 = vadd.xlane.f32.xlu0 %v1469
        %v1471 = vpop.xlane.xlu0 %1470
        %v1472 = vsel %vm1417, %v1455, 0.0
        %1473 = vadd.xlane.f32.xlu0 %v1472
        %v1474 = vpop.xlane.xlu0 %1473
        %v1475 = vsel %vm1417, %v1457, 0.0
        %1476 = vadd.xlane.f32.xlu0 %v1475
        %v1477 = vpop.xlane.xlu0 %1476
        %v1478 = vsel %vm1417, %v1459, 0.0
        %1479 = vadd.xlane.f32.xlu0 %v1478
        %v1480 = vpop.xlane.xlu0 %1479
        %v1481 = vsel %vm1417, %v1461, 0.0
        %1482 = vadd.xlane.f32.xlu0 %v1481
        %v1483 = vpop.xlane.xlu0 %1482
        %v1484 = vsel %vm1417, %v1463, 0.0
        %1485 = vadd.xlane.f32.xlu0 %v1484
        %v1486 = vpop.xlane.xlu0 %1485
        %v1487 = vsel %vm1417, %v1465, 0.0
        %1488 = vadd.xlane.f32.xlu0 %v1487
        %v1489 = vpop.xlane.xlu0 %1488
        %v1490 = vrcp.pop %v1468
        %v1491 = vrcp.pop %v1471
        %v1492 = vrcp.pop %v1474
        %v1493 = vrcp.pop %v1477
        %v1494 = vrcp.pop %v1480
        %v1495 = vrcp.pop %v1483
        %v1496 = vrcp.pop %v1486
        %v1497 = vrcp.pop %v1489
        %v1498 = vmul.f32 %v1451, %v1490
        %v1499 = vmul.f32 %v1453, %v1491
        %v1500 = vmul.f32 %v1455, %v1492
        %v1501 = vmul.f32 %v1457, %v1493
        %v1502 = vmul.f32 %v1459, %v1494
        %v1503 = vmul.f32 %v1461, %v1495
        %v1504 = vmul.f32 %v1463, %v1496
        %v1505 = vmul.f32 %v1465, %v1497
        %v1506 = vpack.c.bf16 %v1498, %v1498
        %v1507 = vpack.c.bf16 %v1499, %v1499
        %v1508 = vpack.c.bf16 %v1500, %v1500
        %v1509 = vpack.c.bf16 %v1501, %v1501
        %v1510 = vpack.c.bf16 %v1502, %v1502
        %v1511 = vpack.c.bf16 %v1503, %v1503
        %v1512 = vpack.c.bf16 %v1504, %v1504
        %v1513 = vpack.c.bf16 %v1505, %v1505
        %1514 = vrot.lane.b32.xlu0 %v933, 64
        %v1515 = vpop.permute.xlu0 %1514
        %vm1516 = vcmask 15360
        %v1518 = vsel %vm1516, %v1506, 0
        %vm1520 = vcmask 1040384
        %v1522 = vsel %vm1520, %v1515, 0
        %1524 = vmatprep.subr.bf16.mxu0 0
        %1525 = vmatpush1.bf16.msra.mxu0 %v1522
        %1526 = vmatprep.subr.bf16.mxu0 0
        %1527 = vmatpush1.bf16.msra.mxu0 0
        %1528 = vmatprep.subr.bf16.mxu0 0
        %1529 = vmatpush1.bf16.msra.mxu0 0
        %1530 = vmatprep.subr.bf16.mxu0 0
        %1531 = vmatpush1.bf16.msra.mxu0 0
        %1532 = vmatprep.subr.bf16.mxu0 0
        %1533 = vmatpush1.bf16.msra.mxu0 0
        %1534 = vmatprep.subr.bf16.mxu0 0
        %1535 = vmatpush1.bf16.msra.mxu0 0
        %1536 = vmatprep.subr.bf16.mxu0 0
        %1537 = vmatpush1.bf16.msra.mxu0 0
        %1538 = vmatprep.subr.bf16.mxu0 0
        %1539 = vmatpush1.bf16.msra.mxu0 0
        %1540 = vmatprep.subr.bf16.mxu0 0
        %1541 = vmatpush1.bf16.msra.mxu0 0
        %1542 = vmatprep.subr.bf16.mxu0 0
        %1543 = vmatpush1.bf16.msra.mxu0 0
        %1544 = vmatprep.subr.bf16.mxu0 0
        %1545 = vmatpush1.bf16.msra.mxu0 0
        %1546 = vmatprep.subr.bf16.mxu0 0
        %1547 = vmatpush1.bf16.msra.mxu0 0
        %1548 = vmatprep.subr.bf16.mxu0 0
        %1549 = vmatpush1.bf16.msra.mxu0 0
        %1550 = vmatprep.subr.bf16.mxu0 0
        %1551 = vmatpush1.bf16.msra.mxu0 0
        %1552 = vmatprep.subr.bf16.mxu0 0
        %1553 = vmatpush1.bf16.msra.mxu0 0
        %1554 = vmatprep.subr.bf16.mxu0 0
        %1555 = vmatpush1.bf16.msra.mxu0 0
        %1556 = vmatprep.mubr.bf16.mxu0 0
        %1557 = vmatmul.mubr.bf16.gmra.mrb[0].mxu0 %v1518
        %v1558 = vpop.f32.mrb[0].mxu0
        %v1559 = vadd.f32 0.0, %v1558
        %v1560 = vpop.f32.mrb[0].mxu0
        %v1561 = vpop.f32.mrb[0].mxu0
        %v1562 = vpop.f32.mrb[0].mxu0
        %1563 = vdwg.mxu0
        %1564 = vrot.lane.b32.xlu0 %v996, 64
        %v1565 = vpop.permute.xlu0 %1564
        %v1567 = vsel %vm1516, %v1507, 0
        %v1570 = vsel %vm1520, %v1565, 0
        %1572 = vmatprep.subr.bf16.mxu0 0
        %1573 = vmatpush1.bf16.msra.mxu0 %v1570
        %1574 = vmatprep.subr.bf16.mxu0 0
        %1575 = vmatpush1.bf16.msra.mxu0 0
        %1576 = vmatprep.subr.bf16.mxu0 0
        %1577 = vmatpush1.bf16.msra.mxu0 0
        %1578 = vmatprep.subr.bf16.mxu0 0
        %1579 = vmatpush1.bf16.msra.mxu0 0
        %1580 = vmatprep.subr.bf16.mxu0 0
        %1581 = vmatpush1.bf16.msra.mxu0 0
        %1582 = vmatprep.subr.bf16.mxu0 0
        %1583 = vmatpush1.bf16.msra.mxu0 0
        %1584 = vmatprep.subr.bf16.mxu0 0
        %1585 = vmatpush1.bf16.msra.mxu0 0
        %1586 = vmatprep.subr.bf16.mxu0 0
        %1587 = vmatpush1.bf16.msra.mxu0 0
        %1588 = vmatprep.subr.bf16.mxu0 0
        %1589 = vmatpush1.bf16.msra.mxu0 0
        %1590 = vmatprep.subr.bf16.mxu0 0
        %1591 = vmatpush1.bf16.msra.mxu0 0
        %1592 = vmatprep.subr.bf16.mxu0 0
        %1593 = vmatpush1.bf16.msra.mxu0 0
        %1594 = vmatprep.subr.bf16.mxu0 0
        %1595 = vmatpush1.bf16.msra.mxu0 0
        %1596 = vmatprep.subr.bf16.mxu0 0
        %1597 = vmatpush1.bf16.msra.mxu0 0
        %1598 = vmatprep.subr.bf16.mxu0 0
        %1599 = vmatpush1.bf16.msra.mxu0 0
        %1600 = vmatprep.subr.bf16.mxu0 0
        %1601 = vmatpush1.bf16.msra.mxu0 0
        %1602 = vmatprep.subr.bf16.mxu0 0
        %1603 = vmatpush1.bf16.msra.mxu0 0
        %1604 = vmatprep.mubr.bf16.mxu0 0
        %1605 = vmatmul.mubr.bf16.gmra.mrb[0].mxu0 %v1567
        %v1606 = vpop.f32.mrb[0].mxu0
        %v1607 = vadd.f32 0.0, %v1606
        %v1608 = vpop.f32.mrb[0].mxu0
        %v1609 = vpop.f32.mrb[0].mxu0
        %v1610 = vpop.f32.mrb[0].mxu0
        %1611 = vdwg.mxu0
        %1612 = vrot.lane.b32.xlu0 %v1058, 64
        %v1613 = vpop.permute.xlu0 %1612
        %v1615 = vsel %vm1516, %v1508, 0
        %v1618 = vsel %vm1520, %v1613, 0
        %1620 = vmatprep.subr.bf16.mxu0 0
        %1621 = vmatpush1.bf16.msra.mxu0 %v1618
        %1622 = vmatprep.subr.bf16.mxu0 0
        %1623 = vmatpush1.bf16.msra.mxu0 0
        %1624 = vmatprep.subr.bf16.mxu0 0
        %1625 = vmatpush1.bf16.msra.mxu0 0
        %1626 = vmatprep.subr.bf16.mxu0 0
        %1627 = vmatpush1.bf16.msra.mxu0 0
        %1628 = vmatprep.subr.bf16.mxu0 0
        %1629 = vmatpush1.bf16.msra.mxu0 0
        %1630 = vmatprep.subr.bf16.mxu0 0
        %1631 = vmatpush1.bf16.msra.mxu0 0
        %1632 = vmatprep.subr.bf16.mxu0 0
        %1633 = vmatpush1.bf16.msra.mxu0 0
        %1634 = vmatprep.subr.bf16.mxu0 0
        %1635 = vmatpush1.bf16.msra.mxu0 0
        %1636 = vmatprep.subr.bf16.mxu0 0
        %1637 = vmatpush1.bf16.msra.mxu0 0
        %1638 = vmatprep.subr.bf16.mxu0 0
        %1639 = vmatpush1.bf16.msra.mxu0 0
        %1640 = vmatprep.subr.bf16.mxu0 0
        %1641 = vmatpush1.bf16.msra.mxu0 0
        %1642 = vmatprep.subr.bf16.mxu0 0
        %1643 = vmatpush1.bf16.msra.mxu0 0
        %1644 = vmatprep.subr.bf16.mxu0 0
        %1645 = vmatpush1.bf16.msra.mxu0 0
        %1646 = vmatprep.subr.bf16.mxu0 0
        %1647 = vmatpush1.bf16.msra.mxu0 0
        %1648 = vmatprep.subr.bf16.mxu0 0
        %1649 = vmatpush1.bf16.msra.mxu0 0
        %1650 = vmatprep.subr.bf16.mxu0 0
        %1651 = vmatpush1.bf16.msra.mxu0 0
        %1652 = vmatprep.mubr.bf16.mxu0 0
        %1653 = vmatmul.mubr.bf16.gmra.mrb[0].mxu0 %v1615
        %v1654 = vpop.f32.mrb[0].mxu0
        %v1655 = vadd.f32 0.0, %v1654
        %v1656 = vpop.f32.mrb[0].mxu0
        %v1657 = vpop.f32.mrb[0].mxu0
        %v1658 = vpop.f32.mrb[0].mxu0
        %1659 = vdwg.mxu0
        %1660 = vrot.lane.b32.xlu0 %v1120, 64
        %v1661 = vpop.permute.xlu0 %1660
        %v1663 = vsel %vm1516, %v1509, 0
        %v1666 = vsel %vm1520, %v1661, 0
        %1668 = vmatprep.subr.bf16.mxu0 0
        %1669 = vmatpush1.bf16.msra.mxu0 %v1666
        %1670 = vmatprep.subr.bf16.mxu0 0
        %1671 = vmatpush1.bf16.msra.mxu0 0
        %1672 = vmatprep.subr.bf16.mxu0 0
        %1673 = vmatpush1.bf16.msra.mxu0 0
        %1674 = vmatprep.subr.bf16.mxu0 0
        %1675 = vmatpush1.bf16.msra.mxu0 0
        %1676 = vmatprep.subr.bf16.mxu0 0
        %1677 = vmatpush1.bf16.msra.mxu0 0
        %1678 = vmatprep.subr.bf16.mxu0 0
        %1679 = vmatpush1.bf16.msra.mxu0 0
        %1680 = vmatprep.subr.bf16.mxu0 0
        %1681 = vmatpush1.bf16.msra.mxu0 0
        %1682 = vmatprep.subr.bf16.mxu0 0
        %1683 = vmatpush1.bf16.msra.mxu0 0
        %1684 = vmatprep.subr.bf16.mxu0 0
        %1685 = vmatpush1.bf16.msra.mxu0 0
        %1686 = vmatprep.subr.bf16.mxu0 0
        %1687 = vmatpush1.bf16.msra.mxu0 0
        %1688 = vmatprep.subr.bf16.mxu0 0
        %1689 = vmatpush1.bf16.msra.mxu0 0
        %1690 = vmatprep.subr.bf16.mxu0 0
        %1691 = vmatpush1.bf16.msra.mxu0 0
        %1692 = vmatprep.subr.bf16.mxu0 0
        %1693 = vmatpush1.bf16.msra.mxu0 0
        %1694 = vmatprep.subr.bf16.mxu0 0
        %1695 = vmatpush1.bf16.msra.mxu0 0
        %1696 = vmatprep.subr.bf16.mxu0 0
        %1697 = vmatpush1.bf16.msra.mxu0 0
        %1698 = vmatprep.subr.bf16.mxu0 0
        %1699 = vmatpush1.bf16.msra.mxu0 0
        %1700 = vmatprep.mubr.bf16.mxu0 0
        %1701 = vmatmul.mubr.bf16.gmra.mrb[0].mxu0 %v1663
        %v1702 = vpop.f32.mrb[0].mxu0
        %v1703 = vadd.f32 0.0, %v1702
        %v1704 = vpop.f32.mrb[0].mxu0
        %v1705 = vpop.f32.mrb[0].mxu0
        %v1706 = vpop.f32.mrb[0].mxu0
        %1707 = vdwg.mxu0
        %1708 = vrot.lane.b32.xlu0 %v1182, 64
        %v1709 = vpop.permute.xlu0 %1708
        %v1711 = vsel %vm1516, %v1510, 0
        %v1714 = vsel %vm1520, %v1709, 0
        %1716 = vmatprep.subr.bf16.mxu0 0
        %1717 = vmatpush1.bf16.msra.mxu0 %v1714
        %1718 = vmatprep.subr.bf16.mxu0 0
        %1719 = vmatpush1.bf16.msra.mxu0 0
        %1720 = vmatprep.subr.bf16.mxu0 0
        %1721 = vmatpush1.bf16.msra.mxu0 0
        %1722 = vmatprep.subr.bf16.mxu0 0
        %1723 = vmatpush1.bf16.msra.mxu0 0
        %1724 = vmatprep.subr.bf16.mxu0 0
        %1725 = vmatpush1.bf16.msra.mxu0 0
        %1726 = vmatprep.subr.bf16.mxu0 0
        %1727 = vmatpush1.bf16.msra.mxu0 0
        %1728 = vmatprep.subr.bf16.mxu0 0
        %1729 = vmatpush1.bf16.msra.mxu0 0
        %1730 = vmatprep.subr.bf16.mxu0 0
        %1731 = vmatpush1.bf16.msra.mxu0 0
        %1732 = vmatprep.subr.bf16.mxu0 0
        %1733 = vmatpush1.bf16.msra.mxu0 0
        %1734 = vmatprep.subr.bf16.mxu0 0
        %1735 = vmatpush1.bf16.msra.mxu0 0
        %1736 = vmatprep.subr.bf16.mxu0 0
        %1737 = vmatpush1.bf16.msra.mxu0 0
        %1738 = vmatprep.subr.bf16.mxu0 0
        %1739 = vmatpush1.bf16.msra.mxu0 0
        %1740 = vmatprep.subr.bf16.mxu0 0
        %1741 = vmatpush1.bf16.msra.mxu0 0
        %1742 = vmatprep.subr.bf16.mxu0 0
        %1743 = vmatpush1.bf16.msra.mxu0 0
        %1744 = vmatprep.subr.bf16.mxu0 0
        %1745 = vmatpush1.bf16.msra.mxu0 0
        %1746 = vmatprep.subr.bf16.mxu0 0
        %1747 = vmatpush1.bf16.msra.mxu0 0
        %1748 = vmatprep.mubr.bf16.mxu0 0
        %1749 = vmatmul.mubr.bf16.gmra.mrb[0].mxu0 %v1711
        %v1750 = vpop.f32.mrb[0].mxu0
        %v1751 = vadd.f32 0.0, %v1750
        %v1752 = vpop.f32.mrb[0].mxu0
        %v1753 = vpop.f32.mrb[0].mxu0
        %v1754 = vpop.f32.mrb[0].mxu0
        %1755 = vdwg.mxu0
        %1756 = vrot.lane.b32.xlu0 %v1244, 64
        %v1757 = vpop.permute.xlu0 %1756
        %v1759 = vsel %vm1516, %v1511, 0
        %v1762 = vsel %vm1520, %v1757, 0
        %1764 = vmatprep.subr.bf16.mxu0 0
        %1765 = vmatpush1.bf16.msra.mxu0 %v1762
        %1766 = vmatprep.subr.bf16.mxu0 0
        %1767 = vmatpush1.bf16.msra.mxu0 0
        %1768 = vmatprep.subr.bf16.mxu0 0
        %1769 = vmatpush1.bf16.msra.mxu0 0
        %1770 = vmatprep.subr.bf16.mxu0 0
        %1771 = vmatpush1.bf16.msra.mxu0 0
        %1772 = vmatprep.subr.bf16.mxu0 0
        %1773 = vmatpush1.bf16.msra.mxu0 0
        %1774 = vmatprep.subr.bf16.mxu0 0
        %1775 = vmatpush1.bf16.msra.mxu0 0
        %1776 = vmatprep.subr.bf16.mxu0 0
        %1777 = vmatpush1.bf16.msra.mxu0 0
        %1778 = vmatprep.subr.bf16.mxu0 0
        %1779 = vmatpush1.bf16.msra.mxu0 0
        %1780 = vmatprep.subr.bf16.mxu0 0
        %1781 = vmatpush1.bf16.msra.mxu0 0
        %1782 = vmatprep.subr.bf16.mxu0 0
        %1783 = vmatpush1.bf16.msra.mxu0 0
        %1784 = vmatprep.subr.bf16.mxu0 0
        %1785 = vmatpush1.bf16.msra.mxu0 0
        %1786 = vmatprep.subr.bf16.mxu0 0
        %1787 = vmatpush1.bf16.msra.mxu0 0
        %1788 = vmatprep.subr.bf16.mxu0 0
        %1789 = vmatpush1.bf16.msra.mxu0 0
        %1790 = vmatprep.subr.bf16.mxu0 0
        %1791 = vmatpush1.bf16.msra.mxu0 0
        %1792 = vmatprep.subr.bf16.mxu0 0
        %1793 = vmatpush1.bf16.msra.mxu0 0
        %1794 = vmatprep.subr.bf16.mxu0 0
        %1795 = vmatpush1.bf16.msra.mxu0 0
        %1796 = vmatprep.mubr.bf16.mxu0 0
        %1797 = vmatmul.mubr.bf16.gmra.mrb[0].mxu0 %v1759
        %v1798 = vpop.f32.mrb[0].mxu0
        %v1799 = vadd.f32 0.0, %v1798
        %v1800 = vpop.f32.mrb[0].mxu0
        %v1801 = vpop.f32.mrb[0].mxu0
        %v1802 = vpop.f32.mrb[0].mxu0
        %1803 = vdwg.mxu0
        %1804 = vrot.lane.b32.xlu0 %v1306, 64
        %v1805 = vpop.permute.xlu0 %1804
        %v1807 = vsel %vm1516, %v1512, 0
        %v1810 = vsel %vm1520, %v1805, 0
        %1812 = vmatprep.subr.bf16.mxu0 0
        %1813 = vmatpush1.bf16.msra.mxu0 %v1810
        %1814 = vmatprep.subr.bf16.mxu0 0
        %1815 = vmatpush1.bf16.msra.mxu0 0
        %1816 = vmatprep.subr.bf16.mxu0 0
        %1817 = vmatpush1.bf16.msra.mxu0 0
        %1818 = vmatprep.subr.bf16.mxu0 0
        %1819 = vmatpush1.bf16.msra.mxu0 0
        %1820 = vmatprep.subr.bf16.mxu0 0
        %1821 = vmatpush1.bf16.msra.mxu0 0
        %1822 = vmatprep.subr.bf16.mxu0 0
        %1823 = vmatpush1.bf16.msra.mxu0 0
        %1824 = vmatprep.subr.bf16.mxu0 0
        %1825 = vmatpush1.bf16.msra.mxu0 0
        %1826 = vmatprep.subr.bf16.mxu0 0
        %1827 = vmatpush1.bf16.msra.mxu0 0
        %1828 = vmatprep.subr.bf16.mxu0 0
        %1829 = vmatpush1.bf16.msra.mxu0 0
        %1830 = vmatprep.subr.bf16.mxu0 0
        %1831 = vmatpush1.bf16.msra.mxu0 0
        %1832 = vmatprep.subr.bf16.mxu0 0
        %1833 = vmatpush1.bf16.msra.mxu0 0
        %1834 = vmatprep.subr.bf16.mxu0 0
        %1835 = vmatpush1.bf16.msra.mxu0 0
        %1836 = vmatprep.subr.bf16.mxu0 0
        %1837 = vmatpush1.bf16.msra.mxu0 0
        %1838 = vmatprep.subr.bf16.mxu0 0
        %1839 = vmatpush1.bf16.msra.mxu0 0
        %1840 = vmatprep.subr.bf16.mxu0 0
        %1841 = vmatpush1.bf16.msra.mxu0 0
        %1842 = vmatprep.subr.bf16.mxu0 0
        %1843 = vmatpush1.bf16.msra.mxu0 0
        %1844 = vmatprep.mubr.bf16.mxu0 0
        %1845 = vmatmul.mubr.bf16.gmra.mrb[0].mxu0 %v1807
        %v1846 = vpop.f32.mrb[0].mxu0
        %v1847 = vadd.f32 0.0, %v1846
        %v1848 = vpop.f32.mrb[0].mxu0
        %v1849 = vpop.f32.mrb[0].mxu0
        %v1850 = vpop.f32.mrb[0].mxu0
        %1851 = vdwg.mxu0
        %1852 = vrot.lane.b32.xlu0 %v1368, 64
        %v1853 = vpop.permute.xlu0 %1852
        %v1855 = vsel %vm1516, %v1513, 0
        %v1858 = vsel %vm1520, %v1853, 0
        %1860 = vmatprep.subr.bf16.mxu0 0
        %1861 = vmatpush1.bf16.msra.mxu0 %v1858
        %1862 = vmatprep.subr.bf16.mxu0 0
        %1863 = vmatpush1.bf16.msra.mxu0 0
        %1864 = vmatprep.subr.bf16.mxu0 0
        %1865 = vmatpush1.bf16.msra.mxu0 0
        %1866 = vmatprep.subr.bf16.mxu0 0
        %1867 = vmatpush1.bf16.msra.mxu0 0
        %1868 = vmatprep.subr.bf16.mxu0 0
        %1869 = vmatpush1.bf16.msra.mxu0 0
        %1870 = vmatprep.subr.bf16.mxu0 0
        %1871 = vmatpush1.bf16.msra.mxu0 0
        %1872 = vmatprep.subr.bf16.mxu0 0
        %1873 = vmatpush1.bf16.msra.mxu0 0
        %1874 = vmatprep.subr.bf16.mxu0 0
        %1875 = vmatpush1.bf16.msra.mxu0 0
        %1876 = vmatprep.subr.bf16.mxu0 0
        %1877 = vmatpush1.bf16.msra.mxu0 0
        %1878 = vmatprep.subr.bf16.mxu0 0
        %1879 = vmatpush1.bf16.msra.mxu0 0
        %1880 = vmatprep.subr.bf16.mxu0 0
        %1881 = vmatpush1.bf16.msra.mxu0 0
        %1882 = vmatprep.subr.bf16.mxu0 0
        %1883 = vmatpush1.bf16.msra.mxu0 0
        %1884 = vmatprep.subr.bf16.mxu0 0
        %1885 = vmatpush1.bf16.msra.mxu0 0
        %1886 = vmatprep.subr.bf16.mxu0 0
        %1887 = vmatpush1.bf16.msra.mxu0 0
        %1888 = vmatprep.subr.bf16.mxu0 0
        %1889 = vmatpush1.bf16.msra.mxu0 0
        %1890 = vmatprep.subr.bf16.mxu0 0
        %1891 = vmatpush1.bf16.msra.mxu0 0
        %1892 = vmatprep.mubr.bf16.mxu0 0
        %1893 = vmatmul.mubr.bf16.gmra.mrb[0].mxu0 %v1855
        %v1894 = vpop.f32.mrb[0].mxu0
        %v1895 = vadd.f32 0.0, %v1894
        %v1896 = vpop.f32.mrb[0].mxu0
        %v1897 = vpop.f32.mrb[0].mxu0
        %v1898 = vpop.f32.mrb[0].mxu0
        %1899 = vdwg.mxu0
        %v1908 = vcombine.low %v1559, %v1607
        %v1909 = vcombine.low %v1655, %v1703
        %v1911 = vunpack.c.l.s4 1983009808
        %v1912 = vunpack.c.0.s8 %v1911
        %v1913 = vlaneseq
        %v1914 = vshrl.u32 %v1913, 7
        %v1915 = vsub.s32 %v1912, %v1914
        %v1916 = vrot.slane %v1908, %v1915
        %v1918 = vunpack.c.l.s4 1983009808
        %v1919 = vunpack.c.0.s8 %v1918
        %v1920 = vlaneseq
        %v1921 = vshrl.u32 %v1920, 7
        %v1922 = vsub.s32 %v1919, %v1921
        %v1923 = vrot.slane %v1909, %v1922
        %v1924 = vcombine.low %v1916, %v1923
        %v1925 = vcombine.low %v1751, %v1799
        %v1926 = vcombine.low %v1847, %v1895
        %v1928 = vunpack.c.l.s4 1983009808
        %v1929 = vunpack.c.0.s8 %v1928
        %v1930 = vlaneseq
        %v1931 = vshrl.u32 %v1930, 7
        %v1932 = vsub.s32 %v1929, %v1931
        %v1933 = vrot.slane %v1925, %v1932
        %v1935 = vunpack.c.l.s4 1983009808
        %v1936 = vunpack.c.0.s8 %v1935
        %v1937 = vlaneseq
        %v1938 = vshrl.u32 %v1937, 7
        %v1939 = vsub.s32 %v1936, %v1938
        %v1940 = vrot.slane %v1926, %v1939
        %v1941 = vcombine.low %v1933, %v1940
        %v1944 = vpack.c.bf16 %v1941, %v1924
        %1945 = vrot.lane.b32.xlu0 %v933, 120
        %v1946 = vpop.permute.xlu0 %1945
        %1947 = vrot.lane.b32.xlu0 %v933, 88
        %v1948 = vpop.permute.xlu0 %1947
        %v1950 = vsel %vm936, %v1946, 0
        %v1953 = vsel %vm936, %v1948, 0
        %1955 = vmatprep.subr.bf16.mxu0 0
        %1956 = vmatpush1.bf16.xpose.msra.mxu0 %v1953
        %1957 = vmatprep.subr.bf16.mxu0 0
        %1958 = vmatpush1.bf16.xpose.msra.mxu0 0
        %1959 = vmatprep.subr.bf16.mxu0 0
        %1960 = vmatpush1.bf16.xpose.msra.mxu0 0
        %1961 = vmatprep.subr.bf16.mxu0 0
        %1962 = vmatpush1.bf16.xpose.msra.mxu0 0
        %1963 = vmatprep.subr.bf16.mxu0 0
        %1964 = vmatpush1.bf16.xpose.msra.mxu0 0
        %1965 = vmatprep.subr.bf16.mxu0 0
        %1966 = vmatpush1.bf16.xpose.msra.mxu0 0
        %1967 = vmatprep.subr.bf16.mxu0 0
        %1968 = vmatpush1.bf16.xpose.msra.mxu0 0
        %1969 = vmatprep.subr.bf16.mxu0 0
        %1970 = vmatpush1.bf16.xpose.msra.mxu0 0
        %1971 = vmatprep.subr.bf16.mxu0 0
        %1972 = vmatpush1.bf16.xpose.msra.mxu0 0
        %1973 = vmatprep.subr.bf16.mxu0 0
        %1974 = vmatpush1.bf16.xpose.msra.mxu0 0
        %1975 = vmatprep.subr.bf16.mxu0 0
        %1976 = vmatpush1.bf16.xpose.msra.mxu0 0
        %1977 = vmatprep.subr.bf16.mxu0 0
        %1978 = vmatpush1.bf16.xpose.msra.mxu0 0
        %1979 = vmatprep.subr.bf16.mxu0 0
        %1980 = vmatpush1.bf16.xpose.msra.mxu0 0
        %1981 = vmatprep.subr.bf16.mxu0 0
        %1982 = vmatpush1.bf16.xpose.msra.mxu0 0
        %1983 = vmatprep.subr.bf16.mxu0 0
        %1984 = vmatpush1.bf16.xpose.msra.mxu0 0
        %1985 = vmatprep.subr.bf16.mxu0 0
        %1986 = vmatpush1.bf16.xpose.msra.mxu0 0
        %1987 = vmatprep.mubr.bf16.mxu0 0
        %1988 = vmatmul.mubr.bf16.gmra.mrb[0].mxu0 %v1950
        %v1989 = vpop.f32.mrb[0].mxu0
        %v1990 = vadd.f32 0.0, %v1989
        %v1991 = vpop.f32.mrb[0].mxu0
        %v1992 = vpop.f32.mrb[0].mxu0
        %v1993 = vpop.f32.mrb[0].mxu0
        %1994 = vdwg.mxu0
        %1995 = vrot.lane.b32.xlu0 %v996, 120
        %v1996 = vpop.permute.xlu0 %1995
        %1997 = vrot.lane.b32.xlu0 %v996, 88
        %v1998 = vpop.permute.xlu0 %1997
        %v2000 = vsel %vm936, %v1996, 0
        %v2003 = vsel %vm936, %v1998, 0
        %2005 = vmatprep.subr.bf16.mxu0 0
        %2006 = vmatpush1.bf16.xpose.msra.mxu0 %v2003
        %2007 = vmatprep.subr.bf16.mxu0 0
        %2008 = vmatpush1.bf16.xpose.msra.mxu0 0
        %2009 = vmatprep.subr.bf16.mxu0 0
        %2010 = vmatpush1.bf16.xpose.msra.mxu0 0
        %2011 = vmatprep.subr.bf16.mxu0 0
        %2012 = vmatpush1.bf16.xpose.msra.mxu0 0
        %2013 = vmatprep.subr.bf16.mxu0 0
        %2014 = vmatpush1.bf16.xpose.msra.mxu0 0
        %2015 = vmatprep.subr.bf16.mxu0 0
        %2016 = vmatpush1.bf16.xpose.msra.mxu0 0
        %2017 = vmatprep.subr.bf16.mxu0 0
        %2018 = vmatpush1.bf16.xpose.msra.mxu0 0
        %2019 = vmatprep.subr.bf16.mxu0 0
        %2020 = vmatpush1.bf16.xpose.msra.mxu0 0
        %2021 = vmatprep.subr.bf16.mxu0 0
        %2022 = vmatpush1.bf16.xpose.msra.mxu0 0
        %2023 = vmatprep.subr.bf16.mxu0 0
        %2024 = vmatpush1.bf16.xpose.msra.mxu0 0
        %2025 = vmatprep.subr.bf16.mxu0 0
        %2026 = vmatpush1.bf16.xpose.msra.mxu0 0
        %2027 = vmatprep.subr.bf16.mxu0 0
        %2028 = vmatpush1.bf16.xpose.msra.mxu0 0
        %2029 = vmatprep.subr.bf16.mxu0 0
        %2030 = vmatpush1.bf16.xpose.msra.mxu0 0
        %2031 = vmatprep.subr.bf16.mxu0 0
        %2032 = vmatpush1.bf16.xpose.msra.mxu0 0
        %2033 = vmatprep.subr.bf16.mxu0 0
        %2034 = vmatpush1.bf16.xpose.msra.mxu0 0
        %2035 = vmatprep.subr.bf16.mxu0 0
        %2036 = vmatpush1.bf16.xpose.msra.mxu0 0
        %2037 = vmatprep.mubr.bf16.mxu0 0
        %2038 = vmatmul.mubr.bf16.gmra.mrb[0].mxu0 %v2000
        %v2039 = vpop.f32.mrb[0].mxu0
        %v2040 = vadd.f32 0.0, %v2039
        %v2041 = vpop.f32.mrb[0].mxu0
        %v2042 = vpop.f32.mrb[0].mxu0
        %v2043 = vpop.f32.mrb[0].mxu0
        %2044 = vdwg.mxu0
        %2045 = vrot.lane.b32.xlu0 %v1058, 120
        %v2046 = vpop.permute.xlu0 %2045
        %2047 = vrot.lane.b32.xlu0 %v1058, 88
        %v2048 = vpop.permute.xlu0 %2047
        %v2050 = vsel %vm936, %v2046, 0
        %v2053 = vsel %vm936, %v2048, 0
        %2055 = vmatprep.subr.bf16.mxu0 0
        %2056 = vmatpush1.bf16.xpose.msra.mxu0 %v2053
        %2057 = vmatprep.subr.bf16.mxu0 0
        %2058 = vmatpush1.bf16.xpose.msra.mxu0 0
        %2059 = vmatprep.subr.bf16.mxu0 0
        %2060 = vmatpush1.bf16.xpose.msra.mxu0 0
        %2061 = vmatprep.subr.bf16.mxu0 0
        %2062 = vmatpush1.bf16.xpose.msra.mxu0 0
        %2063 = vmatprep.subr.bf16.mxu0 0
        %2064 = vmatpush1.bf16.xpose.msra.mxu0 0
        %2065 = vmatprep.subr.bf16.mxu0 0
        %2066 = vmatpush1.bf16.xpose.msra.mxu0 0
        %2067 = vmatprep.subr.bf16.mxu0 0
        %2068 = vmatpush1.bf16.xpose.msra.mxu0 0
        %2069 = vmatprep.subr.bf16.mxu0 0
        %2070 = vmatpush1.bf16.xpose.msra.mxu0 0
        %2071 = vmatprep.subr.bf16.mxu0 0
        %2072 = vmatpush1.bf16.xpose.msra.mxu0 0
        %2073 = vmatprep.subr.bf16.mxu0 0
        %2074 = vmatpush1.bf16.xpose.msra.mxu0 0
        %2075 = vmatprep.subr.bf16.mxu0 0
        %2076 = vmatpush1.bf16.xpose.msra.mxu0 0
        %2077 = vmatprep.subr.bf16.mxu0 0
        %2078 = vmatpush1.bf16.xpose.msra.mxu0 0
        %2079 = vmatprep.subr.bf16.mxu0 0
        %2080 = vmatpush1.bf16.xpose.msra.mxu0 0
        %2081 = vmatprep.subr.bf16.mxu0 0
        %2082 = vmatpush1.bf16.xpose.msra.mxu0 0
        %2083 = vmatprep.subr.bf16.mxu0 0
        %2084 = vmatpush1.bf16.xpose.msra.mxu0 0
        %2085 = vmatprep.subr.bf16.mxu0 0
        %2086 = vmatpush1.bf16.xpose.msra.mxu0 0
        %2087 = vmatprep.mubr.bf16.mxu0 0
        %2088 = vmatmul.mubr.bf16.gmra.mrb[0].mxu0 %v2050
        %v2089 = vpop.f32.mrb[0].mxu0
        %v2090 = vadd.f32 0.0, %v2089
        %v2091 = vpop.f32.mrb[0].mxu0
        %v2092 = vpop.f32.mrb[0].mxu0
        %v2093 = vpop.f32.mrb[0].mxu0
        %2094 = vdwg.mxu0
        %2095 = vrot.lane.b32.xlu0 %v1120, 120
        %v2096 = vpop.permute.xlu0 %2095
        %2097 = vrot.lane.b32.xlu0 %v1120, 88
        %v2098 = vpop.permute.xlu0 %2097
        %v2100 = vsel %vm936, %v2096, 0
        %v2103 = vsel %vm936, %v2098, 0
        %2105 = vmatprep.subr.bf16.mxu0 0
        %2106 = vmatpush1.bf16.xpose.msra.mxu0 %v2103
        %2107 = vmatprep.subr.bf16.mxu0 0
        %2108 = vmatpush1.bf16.xpose.msra.mxu0 0
        %2109 = vmatprep.subr.bf16.mxu0 0
        %2110 = vmatpush1.bf16.xpose.msra.mxu0 0
        %2111 = vmatprep.subr.bf16.mxu0 0
        %2112 = vmatpush1.bf16.xpose.msra.mxu0 0
        %2113 = vmatprep.subr.bf16.mxu0 0
        %2114 = vmatpush1.bf16.xpose.msra.mxu0 0
        %2115 = vmatprep.subr.bf16.mxu0 0
        %2116 = vmatpush1.bf16.xpose.msra.mxu0 0
        %2117 = vmatprep.subr.bf16.mxu0 0
        %2118 = vmatpush1.bf16.xpose.msra.mxu0 0
        %2119 = vmatprep.subr.bf16.mxu0 0
        %2120 = vmatpush1.bf16.xpose.msra.mxu0 0
        %2121 = vmatprep.subr.bf16.mxu0 0
        %2122 = vmatpush1.bf16.xpose.msra.mxu0 0
        %2123 = vmatprep.subr.bf16.mxu0 0
        %2124 = vmatpush1.bf16.xpose.msra.mxu0 0
        %2125 = vmatprep.subr.bf16.mxu0 0
        %2126 = vmatpush1.bf16.xpose.msra.mxu0 0
        %2127 = vmatprep.subr.bf16.mxu0 0
        %2128 = vmatpush1.bf16.xpose.msra.mxu0 0
        %2129 = vmatprep.subr.bf16.mxu0 0
        %2130 = vmatpush1.bf16.xpose.msra.mxu0 0
        %2131 = vmatprep.subr.bf16.mxu0 0
        %2132 = vmatpush1.bf16.xpose.msra.mxu0 0
        %2133 = vmatprep.subr.bf16.mxu0 0
        %2134 = vmatpush1.bf16.xpose.msra.mxu0 0
        %2135 = vmatprep.subr.bf16.mxu0 0
        %2136 = vmatpush1.bf16.xpose.msra.mxu0 0
        %2137 = vmatprep.mubr.bf16.mxu0 0
        %2138 = vmatmul.mubr.bf16.gmra.mrb[0].mxu0 %v2100
        %v2139 = vpop.f32.mrb[0].mxu0
        %v2140 = vadd.f32 0.0, %v2139
        %v2141 = vpop.f32.mrb[0].mxu0
        %v2142 = vpop.f32.mrb[0].mxu0
        %v2143 = vpop.f32.mrb[0].mxu0
        %2144 = vdwg.mxu0
        %2145 = vrot.lane.b32.xlu0 %v1182, 120
        %v2146 = vpop.permute.xlu0 %2145
        %2147 = vrot.lane.b32.xlu0 %v1182, 88
        %v2148 = vpop.permute.xlu0 %2147
        %v2150 = vsel %vm936, %v2146, 0
        %v2153 = vsel %vm936, %v2148, 0
        %2155 = vmatprep.subr.bf16.mxu0 0
        %2156 = vmatpush1.bf16.xpose.msra.mxu0 %v2153
        %2157 = vmatprep.subr.bf16.mxu0 0
        %2158 = vmatpush1.bf16.xpose.msra.mxu0 0
        %2159 = vmatprep.subr.bf16.mxu0 0
        %2160 = vmatpush1.bf16.xpose.msra.mxu0 0
        %2161 = vmatprep.subr.bf16.mxu0 0
        %2162 = vmatpush1.bf16.xpose.msra.mxu0 0
        %2163 = vmatprep.subr.bf16.mxu0 0
        %2164 = vmatpush1.bf16.xpose.msra.mxu0 0
        %2165 = vmatprep.subr.bf16.mxu0 0
        %2166 = vmatpush1.bf16.xpose.msra.mxu0 0
        %2167 = vmatprep.subr.bf16.mxu0 0
        %2168 = vmatpush1.bf16.xpose.msra.mxu0 0
        %2169 = vmatprep.subr.bf16.mxu0 0
        %2170 = vmatpush1.bf16.xpose.msra.mxu0 0
        %2171 = vmatprep.subr.bf16.mxu0 0
        %2172 = vmatpush1.bf16.xpose.msra.mxu0 0
        %2173 = vmatprep.subr.bf16.mxu0 0
        %2174 = vmatpush1.bf16.xpose.msra.mxu0 0
        %2175 = vmatprep.subr.bf16.mxu0 0
        %2176 = vmatpush1.bf16.xpose.msra.mxu0 0
        %2177 = vmatprep.subr.bf16.mxu0 0
        %2178 = vmatpush1.bf16.xpose.msra.mxu0 0
        %2179 = vmatprep.subr.bf16.mxu0 0
        %2180 = vmatpush1.bf16.xpose.msra.mxu0 0
        %2181 = vmatprep.subr.bf16.mxu0 0
        %2182 = vmatpush1.bf16.xpose.msra.mxu0 0
        %2183 = vmatprep.subr.bf16.mxu0 0
        %2184 = vmatpush1.bf16.xpose.msra.mxu0 0
        %2185 = vmatprep.subr.bf16.mxu0 0
        %2186 = vmatpush1.bf16.xpose.msra.mxu0 0
        %2187 = vmatprep.mubr.bf16.mxu0 0
        %2188 = vmatmul.mubr.bf16.gmra.mrb[0].mxu0 %v2150
        %v2189 = vpop.f32.mrb[0].mxu0
        %v2190 = vadd.f32 0.0, %v2189
        %v2191 = vpop.f32.mrb[0].mxu0
        %v2192 = vpop.f32.mrb[0].mxu0
        %v2193 = vpop.f32.mrb[0].mxu0
        %2194 = vdwg.mxu0
        %2195 = vrot.lane.b32.xlu0 %v1244, 120
        %v2196 = vpop.permute.xlu0 %2195
        %2197 = vrot.lane.b32.xlu0 %v1244, 88
        %v2198 = vpop.permute.xlu0 %2197
        %v2200 = vsel %vm936, %v2196, 0
        %v2203 = vsel %vm936, %v2198, 0
        %2205 = vmatprep.subr.bf16.mxu0 0
        %2206 = vmatpush1.bf16.xpose.msra.mxu0 %v2203
        %2207 = vmatprep.subr.bf16.mxu0 0
        %2208 = vmatpush1.bf16.xpose.msra.mxu0 0
        %2209 = vmatprep.subr.bf16.mxu0 0
        %2210 = vmatpush1.bf16.xpose.msra.mxu0 0
        %2211 = vmatprep.subr.bf16.mxu0 0
        %2212 = vmatpush1.bf16.xpose.msra.mxu0 0
        %2213 = vmatprep.subr.bf16.mxu0 0
        %2214 = vmatpush1.bf16.xpose.msra.mxu0 0
        %2215 = vmatprep.subr.bf16.mxu0 0
        %2216 = vmatpush1.bf16.xpose.msra.mxu0 0
        %2217 = vmatprep.subr.bf16.mxu0 0
        %2218 = vmatpush1.bf16.xpose.msra.mxu0 0
        %2219 = vmatprep.subr.bf16.mxu0 0
        %2220 = vmatpush1.bf16.xpose.msra.mxu0 0
        %2221 = vmatprep.subr.bf16.mxu0 0
        %2222 = vmatpush1.bf16.xpose.msra.mxu0 0
        %2223 = vmatprep.subr.bf16.mxu0 0
        %2224 = vmatpush1.bf16.xpose.msra.mxu0 0
        %2225 = vmatprep.subr.bf16.mxu0 0
        %2226 = vmatpush1.bf16.xpose.msra.mxu0 0
        %2227 = vmatprep.subr.bf16.mxu0 0
        %2228 = vmatpush1.bf16.xpose.msra.mxu0 0
        %2229 = vmatprep.subr.bf16.mxu0 0
        %2230 = vmatpush1.bf16.xpose.msra.mxu0 0
        %2231 = vmatprep.subr.bf16.mxu0 0
        %2232 = vmatpush1.bf16.xpose.msra.mxu0 0
        %2233 = vmatprep.subr.bf16.mxu0 0
        %2234 = vmatpush1.bf16.xpose.msra.mxu0 0
        %2235 = vmatprep.subr.bf16.mxu0 0
        %2236 = vmatpush1.bf16.xpose.msra.mxu0 0
        %2237 = vmatprep.mubr.bf16.mxu0 0
        %2238 = vmatmul.mubr.bf16.gmra.mrb[0].mxu0 %v2200
        %v2239 = vpop.f32.mrb[0].mxu0
        %v2240 = vadd.f32 0.0, %v2239
        %v2241 = vpop.f32.mrb[0].mxu0
        %v2242 = vpop.f32.mrb[0].mxu0
        %v2243 = vpop.f32.mrb[0].mxu0
        %2244 = vdwg.mxu0
        %2245 = vrot.lane.b32.xlu0 %v1306, 120
        %v2246 = vpop.permute.xlu0 %2245
        %2247 = vrot.lane.b32.xlu0 %v1306, 88
        %v2248 = vpop.permute.xlu0 %2247
        %v2250 = vsel %vm936, %v2246, 0
        %v2253 = vsel %vm936, %v2248, 0
        %2255 = vmatprep.subr.bf16.mxu0 0
        %2256 = vmatpush1.bf16.xpose.msra.mxu0 %v2253
        %2257 = vmatprep.subr.bf16.mxu0 0
        %2258 = vmatpush1.bf16.xpose.msra.mxu0 0
        %2259 = vmatprep.subr.bf16.mxu0 0
        %2260 = vmatpush1.bf16.xpose.msra.mxu0 0
        %2261 = vmatprep.subr.bf16.mxu0 0
        %2262 = vmatpush1.bf16.xpose.msra.mxu0 0
        %2263 = vmatprep.subr.bf16.mxu0 0
        %2264 = vmatpush1.bf16.xpose.msra.mxu0 0
        %2265 = vmatprep.subr.bf16.mxu0 0
        %2266 = vmatpush1.bf16.xpose.msra.mxu0 0
        %2267 = vmatprep.subr.bf16.mxu0 0
        %2268 = vmatpush1.bf16.xpose.msra.mxu0 0
        %2269 = vmatprep.subr.bf16.mxu0 0
        %2270 = vmatpush1.bf16.xpose.msra.mxu0 0
        %2271 = vmatprep.subr.bf16.mxu0 0
        %2272 = vmatpush1.bf16.xpose.msra.mxu0 0
        %2273 = vmatprep.subr.bf16.mxu0 0
        %2274 = vmatpush1.bf16.xpose.msra.mxu0 0
        %2275 = vmatprep.subr.bf16.mxu0 0
        %2276 = vmatpush1.bf16.xpose.msra.mxu0 0
        %2277 = vmatprep.subr.bf16.mxu0 0
        %2278 = vmatpush1.bf16.xpose.msra.mxu0 0
        %2279 = vmatprep.subr.bf16.mxu0 0
        %2280 = vmatpush1.bf16.xpose.msra.mxu0 0
        %2281 = vmatprep.subr.bf16.mxu0 0
        %2282 = vmatpush1.bf16.xpose.msra.mxu0 0
        %2283 = vmatprep.subr.bf16.mxu0 0
        %2284 = vmatpush1.bf16.xpose.msra.mxu0 0
        %2285 = vmatprep.subr.bf16.mxu0 0
        %2286 = vmatpush1.bf16.xpose.msra.mxu0 0
        %2287 = vmatprep.mubr.bf16.mxu0 0
        %2288 = vmatmul.mubr.bf16.gmra.mrb[0].mxu0 %v2250
        %v2289 = vpop.f32.mrb[0].mxu0
        %v2290 = vadd.f32 0.0, %v2289
        %v2291 = vpop.f32.mrb[0].mxu0
        %v2292 = vpop.f32.mrb[0].mxu0
        %v2293 = vpop.f32.mrb[0].mxu0
        %2294 = vdwg.mxu0
        %2295 = vrot.lane.b32.xlu0 %v1368, 120
        %v2296 = vpop.permute.xlu0 %2295
        %2297 = vrot.lane.b32.xlu0 %v1368, 88
        %v2298 = vpop.permute.xlu0 %2297
        %v2300 = vsel %vm936, %v2296, 0
        %v2303 = vsel %vm936, %v2298, 0
        %2305 = vmatprep.subr.bf16.mxu0 0
        %2306 = vmatpush1.bf16.xpose.msra.mxu0 %v2303
        %2307 = vmatprep.subr.bf16.mxu0 0
        %2308 = vmatpush1.bf16.xpose.msra.mxu0 0
        %2309 = vmatprep.subr.bf16.mxu0 0
        %2310 = vmatpush1.bf16.xpose.msra.mxu0 0
        %2311 = vmatprep.subr.bf16.mxu0 0
        %2312 = vmatpush1.bf16.xpose.msra.mxu0 0
        %2313 = vmatprep.subr.bf16.mxu0 0
        %2314 = vmatpush1.bf16.xpose.msra.mxu0 0
        %2315 = vmatprep.subr.bf16.mxu0 0
        %2316 = vmatpush1.bf16.xpose.msra.mxu0 0
        %2317 = vmatprep.subr.bf16.mxu0 0
        %2318 = vmatpush1.bf16.xpose.msra.mxu0 0
        %2319 = vmatprep.subr.bf16.mxu0 0
        %2320 = vmatpush1.bf16.xpose.msra.mxu0 0
        %2321 = vmatprep.subr.bf16.mxu0 0
        %2322 = vmatpush1.bf16.xpose.msra.mxu0 0
        %2323 = vmatprep.subr.bf16.mxu0 0
        %2324 = vmatpush1.bf16.xpose.msra.mxu0 0
        %2325 = vmatprep.subr.bf16.mxu0 0
        %2326 = vmatpush1.bf16.xpose.msra.mxu0 0
        %2327 = vmatprep.subr.bf16.mxu0 0
        %2328 = vmatpush1.bf16.xpose.msra.mxu0 0
        %2329 = vmatprep.subr.bf16.mxu0 0
        %2330 = vmatpush1.bf16.xpose.msra.mxu0 0
        %2331 = vmatprep.subr.bf16.mxu0 0
        %2332 = vmatpush1.bf16.xpose.msra.mxu0 0
        %2333 = vmatprep.subr.bf16.mxu0 0
        %2334 = vmatpush1.bf16.xpose.msra.mxu0 0
        %2335 = vmatprep.subr.bf16.mxu0 0
        %2336 = vmatpush1.bf16.xpose.msra.mxu0 0
        %2337 = vmatprep.mubr.bf16.mxu0 0
        %2338 = vmatmul.mubr.bf16.gmra.mrb[0].mxu0 %v2300
        %v2339 = vpop.f32.mrb[0].mxu0
        %v2340 = vadd.f32 0.0, %v2339
        %v2341 = vpop.f32.mrb[0].mxu0
        %v2342 = vpop.f32.mrb[0].mxu0
        %v2343 = vpop.f32.mrb[0].mxu0
        %2344 = vdwg.mxu0
        %v2345 = vsel %vm1417, %v1990, -inf
        %2346 = vmax.xlane.f32.xlu0 %v2345
        %v2347 = vpop.xlane.xlu0 %2346
        %v2348 = vsel %vm1417, %v2040, -inf
        %2349 = vmax.xlane.f32.xlu0 %v2348
        %v2350 = vpop.xlane.xlu0 %2349
        %v2351 = vsel %vm1417, %v2090, -inf
        %2352 = vmax.xlane.f32.xlu0 %v2351
        %v2353 = vpop.xlane.xlu0 %2352
        %v2354 = vsel %vm1417, %v2140, -inf
        %2355 = vmax.xlane.f32.xlu0 %v2354
        %v2356 = vpop.xlane.xlu0 %2355
        %v2357 = vsel %vm1417, %v2190, -inf
        %2358 = vmax.xlane.f32.xlu0 %v2357
        %v2359 = vpop.xlane.xlu0 %2358
        %v2360 = vsel %vm1417, %v2240, -inf
        %2361 = vmax.xlane.f32.xlu0 %v2360
        %v2362 = vpop.xlane.xlu0 %2361
        %v2363 = vsel %vm1417, %v2290, -inf
        %2364 = vmax.xlane.f32.xlu0 %v2363
        %v2365 = vpop.xlane.xlu0 %2364
        %v2366 = vsel %vm1417, %v2340, -inf
        %2367 = vmax.xlane.f32.xlu0 %v2366
        %v2368 = vpop.xlane.xlu0 %2367
        %v2369 = vsub.f32 %v1990, %v2347
        %v2370 = vsub.f32 %v2040, %v2350
        %v2371 = vsub.f32 %v2090, %v2353
        %v2372 = vsub.f32 %v2140, %v2356
        %v2373 = vsub.f32 %v2190, %v2359
        %v2374 = vsub.f32 %v2240, %v2362
        %v2375 = vsub.f32 %v2290, %v2365
        %v2376 = vsub.f32 %v2340, %v2368
        %v2377 = vmul.f32 %v2369, 1.442695
        %v2378 = vpow.pop %v2377
        %v2379 = vmul.f32 %v2370, 1.442695
        %v2380 = vpow.pop %v2379
        %v2381 = vmul.f32 %v2371, 1.442695
        %v2382 = vpow.pop %v2381
        %v2383 = vmul.f32 %v2372, 1.442695
        %v2384 = vpow.pop %v2383
        %v2385 = vmul.f32 %v2373, 1.442695
        %v2386 = vpow.pop %v2385
        %v2387 = vmul.f32 %v2374, 1.442695
        %v2388 = vpow.pop %v2387
        %v2389 = vmul.f32 %v2375, 1.442695
        %v2390 = vpow.pop %v2389
        %v2391 = vmul.f32 %v2376, 1.442695
        %v2392 = vpow.pop %v2391
        %v2393 = vsel %vm1417, %v2378, 0.0
        %2394 = vadd.xlane.f32.xlu0 %v2393
        %v2395 = vpop.xlane.xlu0 %2394
        %v2396 = vsel %vm1417, %v2380, 0.0
        %2397 = vadd.xlane.f32.xlu0 %v2396
        %v2398 = vpop.xlane.xlu0 %2397
        %v2399 = vsel %vm1417, %v2382, 0.0
        %2400 = vadd.xlane.f32.xlu0 %v2399
        %v2401 = vpop.xlane.xlu0 %2400
        %v2402 = vsel %vm1417, %v2384, 0.0
        %2403 = vadd.xlane.f32.xlu0 %v2402
        %v2404 = vpop.xlane.xlu0 %2403
        %v2405 = vsel %vm1417, %v2386, 0.0
        %2406 = vadd.xlane.f32.xlu0 %v2405
        %v2407 = vpop.xlane.xlu0 %2406
        %v2408 = vsel %vm1417, %v2388, 0.0
        %2409 = vadd.xlane.f32.xlu0 %v2408
        %v2410 = vpop.xlane.xlu0 %2409
        %v2411 = vsel %vm1417, %v2390, 0.0
        %2412 = vadd.xlane.f32.xlu0 %v2411
        %v2413 = vpop.xlane.xlu0 %2412
        %v2414 = vsel %vm1417, %v2392, 0.0
        %2415 = vadd.xlane.f32.xlu0 %v2414
        %v2416 = vpop.xlane.xlu0 %2415
        %v2417 = vrcp.pop %v2395
        %v2418 = vrcp.pop %v2398
        %v2419 = vrcp.pop %v2401
        %v2420 = vrcp.pop %v2404
        %v2421 = vrcp.pop %v2407
        %v2422 = vrcp.pop %v2410
        %v2423 = vrcp.pop %v2413
        %v2424 = vrcp.pop %v2416
        %v2425 = vmul.f32 %v2378, %v2417
        %v2426 = vmul.f32 %v2380, %v2418
        %v2427 = vmul.f32 %v2382, %v2419
        %v2428 = vmul.f32 %v2384, %v2420
        %v2429 = vmul.f32 %v2386, %v2421
        %v2430 = vmul.f32 %v2388, %v2422
        %v2431 = vmul.f32 %v2390, %v2423
        %v2432 = vmul.f32 %v2392, %v2424
        %v2433 = vpack.c.bf16 %v2425, %v2425
        %v2434 = vpack.c.bf16 %v2426, %v2426
        %v2435 = vpack.c.bf16 %v2427, %v2427
        %v2436 = vpack.c.bf16 %v2428, %v2428
        %v2437 = vpack.c.bf16 %v2429, %v2429
        %v2438 = vpack.c.bf16 %v2430, %v2430
        %v2439 = vpack.c.bf16 %v2431, %v2431
        %v2440 = vpack.c.bf16 %v2432, %v2432
        %2441 = vrot.lane.b32.xlu0 %v933, 56
        %v2442 = vpop.permute.xlu0 %2441
        %v2444 = vsel %vm1516, %v2433, 0
        %v2447 = vsel %vm1520, %v2442, 0
        %2449 = vmatprep.subr.bf16.mxu0 0
        %2450 = vmatpush1.bf16.msra.mxu0 %v2447
        %2451 = vmatprep.subr.bf16.mxu0 0
        %2452 = vmatpush1.bf16.msra.mxu0 0
        %2453 = vmatprep.subr.bf16.mxu0 0
        %2454 = vmatpush1.bf16.msra.mxu0 0
        %2455 = vmatprep.subr.bf16.mxu0 0
        %2456 = vmatpush1.bf16.msra.mxu0 0
        %2457 = vmatprep.subr.bf16.mxu0 0
        %2458 = vmatpush1.bf16.msra.mxu0 0
        %2459 = vmatprep.subr.bf16.mxu0 0
        %2460 = vmatpush1.bf16.msra.mxu0 0
        %2461 = vmatprep.subr.bf16.mxu0 0
        %2462 = vmatpush1.bf16.msra.mxu0 0
        %2463 = vmatprep.subr.bf16.mxu0 0
        %2464 = vmatpush1.bf16.msra.mxu0 0
        %2465 = vmatprep.subr.bf16.mxu0 0
        %2466 = vmatpush1.bf16.msra.mxu0 0
        %2467 = vmatprep.subr.bf16.mxu0 0
        %2468 = vmatpush1.bf16.msra.mxu0 0
        %2469 = vmatprep.subr.bf16.mxu0 0
        %2470 = vmatpush1.bf16.msra.mxu0 0
        %2471 = vmatprep.subr.bf16.mxu0 0
        %2472 = vmatpush1.bf16.msra.mxu0 0
        %2473 = vmatprep.subr.bf16.mxu0 0
        %2474 = vmatpush1.bf16.msra.mxu0 0
        %2475 = vmatprep.subr.bf16.mxu0 0
        %2476 = vmatpush1.bf16.msra.mxu0 0
        %2477 = vmatprep.subr.bf16.mxu0 0
        %2478 = vmatpush1.bf16.msra.mxu0 0
        %2479 = vmatprep.subr.bf16.mxu0 0
        %2480 = vmatpush1.bf16.msra.mxu0 0
        %2481 = vmatprep.mubr.bf16.mxu0 0
        %2482 = vmatmul.mubr.bf16.gmra.mrb[0].mxu0 %v2444
        %v2483 = vpop.f32.mrb[0].mxu0
        %v2484 = vadd.f32 0.0, %v2483
        %v2485 = vpop.f32.mrb[0].mxu0
        %v2486 = vpop.f32.mrb[0].mxu0
        %v2487 = vpop.f32.mrb[0].mxu0
        %2488 = vdwg.mxu0
        %2489 = vrot.lane.b32.xlu0 %v996, 56
        %v2490 = vpop.permute.xlu0 %2489
        %v2492 = vsel %vm1516, %v2434, 0
        %v2495 = vsel %vm1520, %v2490, 0
        %2497 = vmatprep.subr.bf16.mxu0 0
        %2498 = vmatpush1.bf16.msra.mxu0 %v2495
        %2499 = vmatprep.subr.bf16.mxu0 0
        %2500 = vmatpush1.bf16.msra.mxu0 0
        %2501 = vmatprep.subr.bf16.mxu0 0
        %2502 = vmatpush1.bf16.msra.mxu0 0
        %2503 = vmatprep.subr.bf16.mxu0 0
        %2504 = vmatpush1.bf16.msra.mxu0 0
        %2505 = vmatprep.subr.bf16.mxu0 0
        %2506 = vmatpush1.bf16.msra.mxu0 0
        %2507 = vmatprep.subr.bf16.mxu0 0
        %2508 = vmatpush1.bf16.msra.mxu0 0
        %2509 = vmatprep.subr.bf16.mxu0 0
        %2510 = vmatpush1.bf16.msra.mxu0 0
        %2511 = vmatprep.subr.bf16.mxu0 0
        %2512 = vmatpush1.bf16.msra.mxu0 0
        %2513 = vmatprep.subr.bf16.mxu0 0
        %2514 = vmatpush1.bf16.msra.mxu0 0
        %2515 = vmatprep.subr.bf16.mxu0 0
        %2516 = vmatpush1.bf16.msra.mxu0 0
        %2517 = vmatprep.subr.bf16.mxu0 0
        %2518 = vmatpush1.bf16.msra.mxu0 0
        %2519 = vmatprep.subr.bf16.mxu0 0
        %2520 = vmatpush1.bf16.msra.mxu0 0
        %2521 = vmatprep.subr.bf16.mxu0 0
        %2522 = vmatpush1.bf16.msra.mxu0 0
        %2523 = vmatprep.subr.bf16.mxu0 0
        %2524 = vmatpush1.bf16.msra.mxu0 0
        %2525 = vmatprep.subr.bf16.mxu0 0
        %2526 = vmatpush1.bf16.msra.mxu0 0
        %2527 = vmatprep.subr.bf16.mxu0 0
        %2528 = vmatpush1.bf16.msra.mxu0 0
        %2529 = vmatprep.mubr.bf16.mxu0 0
        %2530 = vmatmul.mubr.bf16.gmra.mrb[0].mxu0 %v2492
        %v2531 = vpop.f32.mrb[0].mxu0
        %v2532 = vadd.f32 0.0, %v2531
        %v2533 = vpop.f32.mrb[0].mxu0
        %v2534 = vpop.f32.mrb[0].mxu0
        %v2535 = vpop.f32.mrb[0].mxu0
        %2536 = vdwg.mxu0
        %2537 = vrot.lane.b32.xlu0 %v1058, 56
        %v2538 = vpop.permute.xlu0 %2537
        %v2540 = vsel %vm1516, %v2435, 0
        %v2543 = vsel %vm1520, %v2538, 0
        %2545 = vmatprep.subr.bf16.mxu0 0
        %2546 = vmatpush1.bf16.msra.mxu0 %v2543
        %2547 = vmatprep.subr.bf16.mxu0 0
        %2548 = vmatpush1.bf16.msra.mxu0 0
        %2549 = vmatprep.subr.bf16.mxu0 0
        %2550 = vmatpush1.bf16.msra.mxu0 0
        %2551 = vmatprep.subr.bf16.mxu0 0
        %2552 = vmatpush1.bf16.msra.mxu0 0
        %2553 = vmatprep.subr.bf16.mxu0 0
        %2554 = vmatpush1.bf16.msra.mxu0 0
        %2555 = vmatprep.subr.bf16.mxu0 0
        %2556 = vmatpush1.bf16.msra.mxu0 0
        %2557 = vmatprep.subr.bf16.mxu0 0
        %2558 = vmatpush1.bf16.msra.mxu0 0
        %2559 = vmatprep.subr.bf16.mxu0 0
        %2560 = vmatpush1.bf16.msra.mxu0 0
        %2561 = vmatprep.subr.bf16.mxu0 0
        %2562 = vmatpush1.bf16.msra.mxu0 0
        %2563 = vmatprep.subr.bf16.mxu0 0
        %2564 = vmatpush1.bf16.msra.mxu0 0
        %2565 = vmatprep.subr.bf16.mxu0 0
        %2566 = vmatpush1.bf16.msra.mxu0 0
        %2567 = vmatprep.subr.bf16.mxu0 0
        %2568 = vmatpush1.bf16.msra.mxu0 0
        %2569 = vmatprep.subr.bf16.mxu0 0
        %2570 = vmatpush1.bf16.msra.mxu0 0
        %2571 = vmatprep.subr.bf16.mxu0 0
        %2572 = vmatpush1.bf16.msra.mxu0 0
        %2573 = vmatprep.subr.bf16.mxu0 0
        %2574 = vmatpush1.bf16.msra.mxu0 0
        %2575 = vmatprep.subr.bf16.mxu0 0
        %2576 = vmatpush1.bf16.msra.mxu0 0
        %2577 = vmatprep.mubr.bf16.mxu0 0
        %2578 = vmatmul.mubr.bf16.gmra.mrb[0].mxu0 %v2540
        %v2579 = vpop.f32.mrb[0].mxu0
        %v2580 = vadd.f32 0.0, %v2579
        %v2581 = vpop.f32.mrb[0].mxu0
        %v2582 = vpop.f32.mrb[0].mxu0
        %v2583 = vpop.f32.mrb[0].mxu0
        %2584 = vdwg.mxu0
        %2585 = vrot.lane.b32.xlu0 %v1120, 56
        %v2586 = vpop.permute.xlu0 %2585
        %v2588 = vsel %vm1516, %v2436, 0
        %v2591 = vsel %vm1520, %v2586, 0
        %2593 = vmatprep.subr.bf16.mxu0 0
        %2594 = vmatpush1.bf16.msra.mxu0 %v2591
        %2595 = vmatprep.subr.bf16.mxu0 0
        %2596 = vmatpush1.bf16.msra.mxu0 0
        %2597 = vmatprep.subr.bf16.mxu0 0
        %2598 = vmatpush1.bf16.msra.mxu0 0
        %2599 = vmatprep.subr.bf16.mxu0 0
        %2600 = vmatpush1.bf16.msra.mxu0 0
        %2601 = vmatprep.subr.bf16.mxu0 0
        %2602 = vmatpush1.bf16.msra.mxu0 0
        %2603 = vmatprep.subr.bf16.mxu0 0
        %2604 = vmatpush1.bf16.msra.mxu0 0
        %2605 = vmatprep.subr.bf16.mxu0 0
        %2606 = vmatpush1.bf16.msra.mxu0 0
        %2607 = vmatprep.subr.bf16.mxu0 0
        %2608 = vmatpush1.bf16.msra.mxu0 0
        %2609 = vmatprep.subr.bf16.mxu0 0
        %2610 = vmatpush1.bf16.msra.mxu0 0
        %2611 = vmatprep.subr.bf16.mxu0 0
        %2612 = vmatpush1.bf16.msra.mxu0 0
        %2613 = vmatprep.subr.bf16.mxu0 0
        %2614 = vmatpush1.bf16.msra.mxu0 0
        %2615 = vmatprep.subr.bf16.mxu0 0
        %2616 = vmatpush1.bf16.msra.mxu0 0
        %2617 = vmatprep.subr.bf16.mxu0 0
        %2618 = vmatpush1.bf16.msra.mxu0 0
        %2619 = vmatprep.subr.bf16.mxu0 0
        %2620 = vmatpush1.bf16.msra.mxu0 0
        %2621 = vmatprep.subr.bf16.mxu0 0
        %2622 = vmatpush1.bf16.msra.mxu0 0
        %2623 = vmatprep.subr.bf16.mxu0 0
        %2624 = vmatpush1.bf16.msra.mxu0 0
        %2625 = vmatprep.mubr.bf16.mxu0 0
        %2626 = vmatmul.mubr.bf16.gmra.mrb[0].mxu0 %v2588
        %v2627 = vpop.f32.mrb[0].mxu0
        %v2628 = vadd.f32 0.0, %v2627
        %v2629 = vpop.f32.mrb[0].mxu0
        %v2630 = vpop.f32.mrb[0].mxu0
        %v2631 = vpop.f32.mrb[0].mxu0
        %2632 = vdwg.mxu0
        %2633 = vrot.lane.b32.xlu0 %v1182, 56
        %v2634 = vpop.permute.xlu0 %2633
        %v2636 = vsel %vm1516, %v2437, 0
        %v2639 = vsel %vm1520, %v2634, 0
        %2641 = vmatprep.subr.bf16.mxu0 0
        %2642 = vmatpush1.bf16.msra.mxu0 %v2639
        %2643 = vmatprep.subr.bf16.mxu0 0
        %2644 = vmatpush1.bf16.msra.mxu0 0
        %2645 = vmatprep.subr.bf16.mxu0 0
        %2646 = vmatpush1.bf16.msra.mxu0 0
        %2647 = vmatprep.subr.bf16.mxu0 0
        %2648 = vmatpush1.bf16.msra.mxu0 0
        %2649 = vmatprep.subr.bf16.mxu0 0
        %2650 = vmatpush1.bf16.msra.mxu0 0
        %2651 = vmatprep.subr.bf16.mxu0 0
        %2652 = vmatpush1.bf16.msra.mxu0 0
        %2653 = vmatprep.subr.bf16.mxu0 0
        %2654 = vmatpush1.bf16.msra.mxu0 0
        %2655 = vmatprep.subr.bf16.mxu0 0
        %2656 = vmatpush1.bf16.msra.mxu0 0
        %2657 = vmatprep.subr.bf16.mxu0 0
        %2658 = vmatpush1.bf16.msra.mxu0 0
        %2659 = vmatprep.subr.bf16.mxu0 0
        %2660 = vmatpush1.bf16.msra.mxu0 0
        %2661 = vmatprep.subr.bf16.mxu0 0
        %2662 = vmatpush1.bf16.msra.mxu0 0
        %2663 = vmatprep.subr.bf16.mxu0 0
        %2664 = vmatpush1.bf16.msra.mxu0 0
        %2665 = vmatprep.subr.bf16.mxu0 0
        %2666 = vmatpush1.bf16.msra.mxu0 0
        %2667 = vmatprep.subr.bf16.mxu0 0
        %2668 = vmatpush1.bf16.msra.mxu0 0
        %2669 = vmatprep.subr.bf16.mxu0 0
        %2670 = vmatpush1.bf16.msra.mxu0 0
        %2671 = vmatprep.subr.bf16.mxu0 0
        %2672 = vmatpush1.bf16.msra.mxu0 0
        %2673 = vmatprep.mubr.bf16.mxu0 0
        %2674 = vmatmul.mubr.bf16.gmra.mrb[0].mxu0 %v2636
        %v2675 = vpop.f32.mrb[0].mxu0
        %v2676 = vadd.f32 0.0, %v2675
        %v2677 = vpop.f32.mrb[0].mxu0
        %v2678 = vpop.f32.mrb[0].mxu0
        %v2679 = vpop.f32.mrb[0].mxu0
        %2680 = vdwg.mxu0
        %2681 = vrot.lane.b32.xlu0 %v1244, 56
        %v2682 = vpop.permute.xlu0 %2681
        %v2684 = vsel %vm1516, %v2438, 0
        %v2687 = vsel %vm1520, %v2682, 0
        %2689 = vmatprep.subr.bf16.mxu0 0
        %2690 = vmatpush1.bf16.msra.mxu0 %v2687
        %2691 = vmatprep.subr.bf16.mxu0 0
        %2692 = vmatpush1.bf16.msra.mxu0 0
        %2693 = vmatprep.subr.bf16.mxu0 0
        %2694 = vmatpush1.bf16.msra.mxu0 0
        %2695 = vmatprep.subr.bf16.mxu0 0
        %2696 = vmatpush1.bf16.msra.mxu0 0
        %2697 = vmatprep.subr.bf16.mxu0 0
        %2698 = vmatpush1.bf16.msra.mxu0 0
        %2699 = vmatprep.subr.bf16.mxu0 0
        %2700 = vmatpush1.bf16.msra.mxu0 0
        %2701 = vmatprep.subr.bf16.mxu0 0
        %2702 = vmatpush1.bf16.msra.mxu0 0
        %2703 = vmatprep.subr.bf16.mxu0 0
        %2704 = vmatpush1.bf16.msra.mxu0 0
        %2705 = vmatprep.subr.bf16.mxu0 0
        %2706 = vmatpush1.bf16.msra.mxu0 0
        %2707 = vmatprep.subr.bf16.mxu0 0
        %2708 = vmatpush1.bf16.msra.mxu0 0
        %2709 = vmatprep.subr.bf16.mxu0 0
        %2710 = vmatpush1.bf16.msra.mxu0 0
        %2711 = vmatprep.subr.bf16.mxu0 0
        %2712 = vmatpush1.bf16.msra.mxu0 0
        %2713 = vmatprep.subr.bf16.mxu0 0
        %2714 = vmatpush1.bf16.msra.mxu0 0
        %2715 = vmatprep.subr.bf16.mxu0 0
        %2716 = vmatpush1.bf16.msra.mxu0 0
        %2717 = vmatprep.subr.bf16.mxu0 0
        %2718 = vmatpush1.bf16.msra.mxu0 0
        %2719 = vmatprep.subr.bf16.mxu0 0
        %2720 = vmatpush1.bf16.msra.mxu0 0
        %2721 = vmatprep.mubr.bf16.mxu0 0
        %2722 = vmatmul.mubr.bf16.gmra.mrb[0].mxu0 %v2684
        %v2723 = vpop.f32.mrb[0].mxu0
        %v2724 = vadd.f32 0.0, %v2723
        %v2725 = vpop.f32.mrb[0].mxu0
        %v2726 = vpop.f32.mrb[0].mxu0
        %v2727 = vpop.f32.mrb[0].mxu0
        %2728 = vdwg.mxu0
        %2729 = vrot.lane.b32.xlu0 %v1306, 56
        %v2730 = vpop.permute.xlu0 %2729
        %v2732 = vsel %vm1516, %v2439, 0
        %v2735 = vsel %vm1520, %v2730, 0
        %2737 = vmatprep.subr.bf16.mxu0 0
        %2738 = vmatpush1.bf16.msra.mxu0 %v2735
        %2739 = vmatprep.subr.bf16.mxu0 0
        %2740 = vmatpush1.bf16.msra.mxu0 0
        %2741 = vmatprep.subr.bf16.mxu0 0
        %2742 = vmatpush1.bf16.msra.mxu0 0
        %2743 = vmatprep.subr.bf16.mxu0 0
        %2744 = vmatpush1.bf16.msra.mxu0 0
        %2745 = vmatprep.subr.bf16.mxu0 0
        %2746 = vmatpush1.bf16.msra.mxu0 0
        %2747 = vmatprep.subr.bf16.mxu0 0
        %2748 = vmatpush1.bf16.msra.mxu0 0
        %2749 = vmatprep.subr.bf16.mxu0 0
        %2750 = vmatpush1.bf16.msra.mxu0 0
        %2751 = vmatprep.subr.bf16.mxu0 0
        %2752 = vmatpush1.bf16.msra.mxu0 0
        %2753 = vmatprep.subr.bf16.mxu0 0
        %2754 = vmatpush1.bf16.msra.mxu0 0
        %2755 = vmatprep.subr.bf16.mxu0 0
        %2756 = vmatpush1.bf16.msra.mxu0 0
        %2757 = vmatprep.subr.bf16.mxu0 0
        %2758 = vmatpush1.bf16.msra.mxu0 0
        %2759 = vmatprep.subr.bf16.mxu0 0
        %2760 = vmatpush1.bf16.msra.mxu0 0
        %2761 = vmatprep.subr.bf16.mxu0 0
        %2762 = vmatpush1.bf16.msra.mxu0 0
        %2763 = vmatprep.subr.bf16.mxu0 0
        %2764 = vmatpush1.bf16.msra.mxu0 0
        %2765 = vmatprep.subr.bf16.mxu0 0
        %2766 = vmatpush1.bf16.msra.mxu0 0
        %2767 = vmatprep.subr.bf16.mxu0 0
        %2768 = vmatpush1.bf16.msra.mxu0 0
        %2769 = vmatprep.mubr.bf16.mxu0 0
        %2770 = vmatmul.mubr.bf16.gmra.mrb[0].mxu0 %v2732
        %v2771 = vpop.f32.mrb[0].mxu0
        %v2772 = vadd.f32 0.0, %v2771
        %v2773 = vpop.f32.mrb[0].mxu0
        %v2774 = vpop.f32.mrb[0].mxu0
        %v2775 = vpop.f32.mrb[0].mxu0
        %2776 = vdwg.mxu0
        %2777 = vrot.lane.b32.xlu0 %v1368, 56
        %v2778 = vpop.permute.xlu0 %2777
        %v2780 = vsel %vm1516, %v2440, 0
        %v2783 = vsel %vm1520, %v2778, 0
        %2785 = vmatprep.subr.bf16.mxu0 0
        %2786 = vmatpush1.bf16.msra.mxu0 %v2783
        %2787 = vmatprep.subr.bf16.mxu0 0
        %2788 = vmatpush1.bf16.msra.mxu0 0
        %2789 = vmatprep.subr.bf16.mxu0 0
        %2790 = vmatpush1.bf16.msra.mxu0 0
        %2791 = vmatprep.subr.bf16.mxu0 0
        %2792 = vmatpush1.bf16.msra.mxu0 0
        %2793 = vmatprep.subr.bf16.mxu0 0
        %2794 = vmatpush1.bf16.msra.mxu0 0
        %2795 = vmatprep.subr.bf16.mxu0 0
        %2796 = vmatpush1.bf16.msra.mxu0 0
        %2797 = vmatprep.subr.bf16.mxu0 0
        %2798 = vmatpush1.bf16.msra.mxu0 0
        %2799 = vmatprep.subr.bf16.mxu0 0
        %2800 = vmatpush1.bf16.msra.mxu0 0
        %2801 = vmatprep.subr.bf16.mxu0 0
        %2802 = vmatpush1.bf16.msra.mxu0 0
        %2803 = vmatprep.subr.bf16.mxu0 0
        %2804 = vmatpush1.bf16.msra.mxu0 0
        %2805 = vmatprep.subr.bf16.mxu0 0
        %2806 = vmatpush1.bf16.msra.mxu0 0
        %2807 = vmatprep.subr.bf16.mxu0 0
        %2808 = vmatpush1.bf16.msra.mxu0 0
        %2809 = vmatprep.subr.bf16.mxu0 0
        %2810 = vmatpush1.bf16.msra.mxu0 0
        %2811 = vmatprep.subr.bf16.mxu0 0
        %2812 = vmatpush1.bf16.msra.mxu0 0
        %2813 = vmatprep.subr.bf16.mxu0 0
        %2814 = vmatpush1.bf16.msra.mxu0 0
        %2815 = vmatprep.subr.bf16.mxu0 0
        %2816 = vmatpush1.bf16.msra.mxu0 0
        %2817 = vmatprep.mubr.bf16.mxu0 0
        %2818 = vmatmul.mubr.bf16.gmra.mrb[0].mxu0 %v2780
        %v2819 = vpop.f32.mrb[0].mxu0
        %v2820 = vadd.f32 0.0, %v2819
        %v2821 = vpop.f32.mrb[0].mxu0
        %v2822 = vpop.f32.mrb[0].mxu0
        %v2823 = vpop.f32.mrb[0].mxu0
        %2824 = vdwg.mxu0
        %v2833 = vcombine.low %v2484, %v2532
        %v2834 = vcombine.low %v2580, %v2628
        %v2836 = vunpack.c.l.s4 1983009808
        %v2837 = vunpack.c.0.s8 %v2836
        %v2838 = vlaneseq
        %v2839 = vshrl.u32 %v2838, 7
        %v2840 = vsub.s32 %v2837, %v2839
        %v2841 = vrot.slane %v2833, %v2840
        %v2843 = vunpack.c.l.s4 1983009808
        %v2844 = vunpack.c.0.s8 %v2843
        %v2845 = vlaneseq
        %v2846 = vshrl.u32 %v2845, 7
        %v2847 = vsub.s32 %v2844, %v2846
        %v2848 = vrot.slane %v2834, %v2847
        %v2849 = vcombine.low %v2841, %v2848
        %v2850 = vcombine.low %v2676, %v2724
        %v2851 = vcombine.low %v2772, %v2820
        %v2853 = vunpack.c.l.s4 1983009808
        %v2854 = vunpack.c.0.s8 %v2853
        %v2855 = vlaneseq
        %v2856 = vshrl.u32 %v2855, 7
        %v2857 = vsub.s32 %v2854, %v2856
        %v2858 = vrot.slane %v2850, %v2857
        %v2860 = vunpack.c.l.s4 1983009808
        %v2861 = vunpack.c.0.s8 %v2860
        %v2862 = vlaneseq
        %v2863 = vshrl.u32 %v2862, 7
        %v2864 = vsub.s32 %v2861, %v2863
        %v2865 = vrot.slane %v2851, %v2864
        %v2866 = vcombine.low %v2858, %v2865
        %v2869 = vpack.c.bf16 %v2866, %v2849
        %v2871 = vsel %vm936, %v2869, 0
        %vm2873 = vcmask 1043456
        %v2875 = vsel %vm2873, %v917, 0
        %2877 = vmatprep.subr.bf16.mxu0 0
        %2878 = vmatpush1.bf16.msra.mxu0 %v2875
        %2879 = vmatprep.subr.bf16.mxu0 0
        %2880 = vmatpush1.bf16.msra.mxu0 0
        %2881 = vmatprep.subr.bf16.mxu0 0
        %2882 = vmatpush1.bf16.msra.mxu0 0
        %2883 = vmatprep.subr.bf16.mxu0 0
        %2884 = vmatpush1.bf16.msra.mxu0 0
        %2885 = vmatprep.subr.bf16.mxu0 0
        %2886 = vmatpush1.bf16.msra.mxu0 0
        %2887 = vmatprep.subr.bf16.mxu0 0
        %2888 = vmatpush1.bf16.msra.mxu0 0
        %2889 = vmatprep.subr.bf16.mxu0 0
        %2890 = vmatpush1.bf16.msra.mxu0 0
        %2891 = vmatprep.subr.bf16.mxu0 0
        %2892 = vmatpush1.bf16.msra.mxu0 0
        %2893 = vmatprep.subr.bf16.mxu0 0
        %2894 = vmatpush1.bf16.msra.mxu0 0
        %2895 = vmatprep.subr.bf16.mxu0 0
        %2896 = vmatpush1.bf16.msra.mxu0 0
        %2897 = vmatprep.subr.bf16.mxu0 0
        %2898 = vmatpush1.bf16.msra.mxu0 0
        %2899 = vmatprep.subr.bf16.mxu0 0
        %2900 = vmatpush1.bf16.msra.mxu0 0
        %2901 = vmatprep.subr.bf16.mxu0 0
        %2902 = vmatpush1.bf16.msra.mxu0 0
        %2903 = vmatprep.subr.bf16.mxu0 0
        %2904 = vmatpush1.bf16.msra.mxu0 0
        %2905 = vmatprep.subr.bf16.mxu0 0
        %2906 = vmatpush1.bf16.msra.mxu0 0
        %2907 = vmatprep.subr.bf16.mxu0 0
        %2908 = vmatpush1.bf16.msra.mxu0 0
        %2909 = vmatprep.mubr.bf16.mxu0 0
        %2910 = vmatmul.mubr.bf16.gmra.mrb[0].mxu0 %v2871
        %v2911 = vpop.f32.mrb[0].mxu0
        %v2912 = vadd.f32 0.0, %v2911
        %v2913 = vpop.f32.mrb[0].mxu0
        %v2914 = vpop.f32.mrb[0].mxu0
        %v2915 = vadd.f32 0.0, %v2914
        %v2916 = vpop.f32.mrb[0].mxu0
        %2917 = vdwg.mxu0
        %v2919 = vsel %vm936, %v1944, 0
        %v2922 = vsel %vm2873, %v916, 0
        %2924 = vmatprep.subr.bf16.mxu0 0
        %2925 = vmatpush1.bf16.msra.mxu0 %v2922
        %2926 = vmatprep.subr.bf16.mxu0 0
        %2927 = vmatpush1.bf16.msra.mxu0 0
        %2928 = vmatprep.subr.bf16.mxu0 0
        %2929 = vmatpush1.bf16.msra.mxu0 0
        %2930 = vmatprep.subr.bf16.mxu0 0
        %2931 = vmatpush1.bf16.msra.mxu0 0
        %2932 = vmatprep.subr.bf16.mxu0 0
        %2933 = vmatpush1.bf16.msra.mxu0 0
        %2934 = vmatprep.subr.bf16.mxu0 0
        %2935 = vmatpush1.bf16.msra.mxu0 0
        %2936 = vmatprep.subr.bf16.mxu0 0
        %2937 = vmatpush1.bf16.msra.mxu0 0
        %2938 = vmatprep.subr.bf16.mxu0 0
        %2939 = vmatpush1.bf16.msra.mxu0 0
        %2940 = vmatprep.subr.bf16.mxu0 0
        %2941 = vmatpush1.bf16.msra.mxu0 0
        %2942 = vmatprep.subr.bf16.mxu0 0
        %2943 = vmatpush1.bf16.msra.mxu0 0
        %2944 = vmatprep.subr.bf16.mxu0 0
        %2945 = vmatpush1.bf16.msra.mxu0 0
        %2946 = vmatprep.subr.bf16.mxu0 0
        %2947 = vmatpush1.bf16.msra.mxu0 0
        %2948 = vmatprep.subr.bf16.mxu0 0
        %2949 = vmatpush1.bf16.msra.mxu0 0
        %2950 = vmatprep.subr.bf16.mxu0 0
        %2951 = vmatpush1.bf16.msra.mxu0 0
        %2952 = vmatprep.subr.bf16.mxu0 0
        %2953 = vmatpush1.bf16.msra.mxu0 0
        %2954 = vmatprep.subr.bf16.mxu0 0
        %2955 = vmatpush1.bf16.msra.mxu0 0
        %2956 = vmatprep.mubr.bf16.mxu0 0
        %2957 = vmatmul.mubr.bf16.gmra.mrb[0].mxu0 %v2919
        %v2958 = vpop.f32.mrb[0].mxu0
        %v2959 = vadd.f32 %v2912, %v2958
        %v2960 = vpop.f32.mrb[0].mxu0
        %v2961 = vpop.f32.mrb[0].mxu0
        %v2962 = vadd.f32 %v2915, %v2961
        %v2963 = vpop.f32.mrb[0].mxu0
        %2964 = vdwg.mxu0
        %2965 = vrot.lane.b32.xlu0 %v933, 112
        %v2966 = vpop.permute.xlu0 %2965
        %2967 = vrot.lane.b32.xlu0 %v933, 80
        %v2968 = vpop.permute.xlu0 %2967
        %v2970 = vsel %vm936, %v2966, 0
        %v2973 = vsel %vm936, %v2968, 0
        %2975 = vmatprep.subr.bf16.mxu0 0
        %2976 = vmatpush1.bf16.xpose.msra.mxu0 %v2973
        %2977 = vmatprep.subr.bf16.mxu0 0
        %2978 = vmatpush1.bf16.xpose.msra.mxu0 0
        %2979 = vmatprep.subr.bf16.mxu0 0
        %2980 = vmatpush1.bf16.xpose.msra.mxu0 0
        %2981 = vmatprep.subr.bf16.mxu0 0
        %2982 = vmatpush1.bf16.xpose.msra.mxu0 0
        %2983 = vmatprep.subr.bf16.mxu0 0
        %2984 = vmatpush1.bf16.xpose.msra.mxu0 0
        %2985 = vmatprep.subr.bf16.mxu0 0
        %2986 = vmatpush1.bf16.xpose.msra.mxu0 0
        %2987 = vmatprep.subr.bf16.mxu0 0
        %2988 = vmatpush1.bf16.xpose.msra.mxu0 0
        %2989 = vmatprep.subr.bf16.mxu0 0
        %2990 = vmatpush1.bf16.xpose.msra.mxu0 0
        %2991 = vmatprep.subr.bf16.mxu0 0
        %2992 = vmatpush1.bf16.xpose.msra.mxu0 0
        %2993 = vmatprep.subr.bf16.mxu0 0
        %2994 = vmatpush1.bf16.xpose.msra.mxu0 0
        %2995 = vmatprep.subr.bf16.mxu0 0
        %2996 = vmatpush1.bf16.xpose.msra.mxu0 0
        %2997 = vmatprep.subr.bf16.mxu0 0
        %2998 = vmatpush1.bf16.xpose.msra.mxu0 0
        %2999 = vmatprep.subr.bf16.mxu0 0
        %3000 = vmatpush1.bf16.xpose.msra.mxu0 0
        %3001 = vmatprep.subr.bf16.mxu0 0
        %3002 = vmatpush1.bf16.xpose.msra.mxu0 0
        %3003 = vmatprep.subr.bf16.mxu0 0
        %3004 = vmatpush1.bf16.xpose.msra.mxu0 0
        %3005 = vmatprep.subr.bf16.mxu0 0
        %3006 = vmatpush1.bf16.xpose.msra.mxu0 0
        %3007 = vmatprep.mubr.bf16.mxu0 0
        %3008 = vmatmul.mubr.bf16.gmra.mrb[0].mxu0 %v2970
        %v3009 = vpop.f32.mrb[0].mxu0
        %v3010 = vadd.f32 0.0, %v3009
        %v3011 = vpop.f32.mrb[0].mxu0
        %v3012 = vpop.f32.mrb[0].mxu0
        %v3013 = vpop.f32.mrb[0].mxu0
        %3014 = vdwg.mxu0
        %3015 = vrot.lane.b32.xlu0 %v996, 112
        %v3016 = vpop.permute.xlu0 %3015
        %3017 = vrot.lane.b32.xlu0 %v996, 80
        %v3018 = vpop.permute.xlu0 %3017
        %v3020 = vsel %vm936, %v3016, 0
        %v3023 = vsel %vm936, %v3018, 0
        %3025 = vmatprep.subr.bf16.mxu0 0
        %3026 = vmatpush1.bf16.xpose.msra.mxu0 %v3023
        %3027 = vmatprep.subr.bf16.mxu0 0
        %3028 = vmatpush1.bf16.xpose.msra.mxu0 0
        %3029 = vmatprep.subr.bf16.mxu0 0
        %3030 = vmatpush1.bf16.xpose.msra.mxu0 0
        %3031 = vmatprep.subr.bf16.mxu0 0
        %3032 = vmatpush1.bf16.xpose.msra.mxu0 0
        %3033 = vmatprep.subr.bf16.mxu0 0
        %3034 = vmatpush1.bf16.xpose.msra.mxu0 0
        %3035 = vmatprep.subr.bf16.mxu0 0
        %3036 = vmatpush1.bf16.xpose.msra.mxu0 0
        %3037 = vmatprep.subr.bf16.mxu0 0
        %3038 = vmatpush1.bf16.xpose.msra.mxu0 0
        %3039 = vmatprep.subr.bf16.mxu0 0
        %3040 = vmatpush1.bf16.xpose.msra.mxu0 0
        %3041 = vmatprep.subr.bf16.mxu0 0
        %3042 = vmatpush1.bf16.xpose.msra.mxu0 0
        %3043 = vmatprep.subr.bf16.mxu0 0
        %3044 = vmatpush1.bf16.xpose.msra.mxu0 0
        %3045 = vmatprep.subr.bf16.mxu0 0
        %3046 = vmatpush1.bf16.xpose.msra.mxu0 0
        %3047 = vmatprep.subr.bf16.mxu0 0
        %3048 = vmatpush1.bf16.xpose.msra.mxu0 0
        %3049 = vmatprep.subr.bf16.mxu0 0
        %3050 = vmatpush1.bf16.xpose.msra.mxu0 0
        %3051 = vmatprep.subr.bf16.mxu0 0
        %3052 = vmatpush1.bf16.xpose.msra.mxu0 0
        %3053 = vmatprep.subr.bf16.mxu0 0
        %3054 = vmatpush1.bf16.xpose.msra.mxu0 0
        %3055 = vmatprep.subr.bf16.mxu0 0
        %3056 = vmatpush1.bf16.xpose.msra.mxu0 0
        %3057 = vmatprep.mubr.bf16.mxu0 0
        %3058 = vmatmul.mubr.bf16.gmra.mrb[0].mxu0 %v3020
        %v3059 = vpop.f32.mrb[0].mxu0
        %v3060 = vadd.f32 0.0, %v3059
        %v3061 = vpop.f32.mrb[0].mxu0
        %v3062 = vpop.f32.mrb[0].mxu0
        %v3063 = vpop.f32.mrb[0].mxu0
        %3064 = vdwg.mxu0
        %3065 = vrot.lane.b32.xlu0 %v1058, 112
        %v3066 = vpop.permute.xlu0 %3065
        %3067 = vrot.lane.b32.xlu0 %v1058, 80
        %v3068 = vpop.permute.xlu0 %3067
        %v3070 = vsel %vm936, %v3066, 0
        %v3073 = vsel %vm936, %v3068, 0
        %3075 = vmatprep.subr.bf16.mxu0 0
        %3076 = vmatpush1.bf16.xpose.msra.mxu0 %v3073
        %3077 = vmatprep.subr.bf16.mxu0 0
        %3078 = vmatpush1.bf16.xpose.msra.mxu0 0
        %3079 = vmatprep.subr.bf16.mxu0 0
        %3080 = vmatpush1.bf16.xpose.msra.mxu0 0
        %3081 = vmatprep.subr.bf16.mxu0 0
        %3082 = vmatpush1.bf16.xpose.msra.mxu0 0
        %3083 = vmatprep.subr.bf16.mxu0 0
        %3084 = vmatpush1.bf16.xpose.msra.mxu0 0
        %3085 = vmatprep.subr.bf16.mxu0 0
        %3086 = vmatpush1.bf16.xpose.msra.mxu0 0
        %3087 = vmatprep.subr.bf16.mxu0 0
        %3088 = vmatpush1.bf16.xpose.msra.mxu0 0
        %3089 = vmatprep.subr.bf16.mxu0 0
        %3090 = vmatpush1.bf16.xpose.msra.mxu0 0
        %3091 = vmatprep.subr.bf16.mxu0 0
        %3092 = vmatpush1.bf16.xpose.msra.mxu0 0
        %3093 = vmatprep.subr.bf16.mxu0 0
        %3094 = vmatpush1.bf16.xpose.msra.mxu0 0
        %3095 = vmatprep.subr.bf16.mxu0 0
        %3096 = vmatpush1.bf16.xpose.msra.mxu0 0
        %3097 = vmatprep.subr.bf16.mxu0 0
        %3098 = vmatpush1.bf16.xpose.msra.mxu0 0
        %3099 = vmatprep.subr.bf16.mxu0 0
        %3100 = vmatpush1.bf16.xpose.msra.mxu0 0
        %3101 = vmatprep.subr.bf16.mxu0 0
        %3102 = vmatpush1.bf16.xpose.msra.mxu0 0
        %3103 = vmatprep.subr.bf16.mxu0 0
        %3104 = vmatpush1.bf16.xpose.msra.mxu0 0
        %3105 = vmatprep.subr.bf16.mxu0 0
        %3106 = vmatpush1.bf16.xpose.msra.mxu0 0
        %3107 = vmatprep.mubr.bf16.mxu0 0
        %3108 = vmatmul.mubr.bf16.gmra.mrb[0].mxu0 %v3070
        %v3109 = vpop.f32.mrb[0].mxu0
        %v3110 = vadd.f32 0.0, %v3109
        %v3111 = vpop.f32.mrb[0].mxu0
        %v3112 = vpop.f32.mrb[0].mxu0
        %v3113 = vpop.f32.mrb[0].mxu0
        %3114 = vdwg.mxu0
        %3115 = vrot.lane.b32.xlu0 %v1120, 112
        %v3116 = vpop.permute.xlu0 %3115
        %3117 = vrot.lane.b32.xlu0 %v1120, 80
        %v3118 = vpop.permute.xlu0 %3117
        %v3120 = vsel %vm936, %v3116, 0
        %v3123 = vsel %vm936, %v3118, 0
        %3125 = vmatprep.subr.bf16.mxu0 0
        %3126 = vmatpush1.bf16.xpose.msra.mxu0 %v3123
        %3127 = vmatprep.subr.bf16.mxu0 0
        %3128 = vmatpush1.bf16.xpose.msra.mxu0 0
        %3129 = vmatprep.subr.bf16.mxu0 0
        %3130 = vmatpush1.bf16.xpose.msra.mxu0 0
        %3131 = vmatprep.subr.bf16.mxu0 0
        %3132 = vmatpush1.bf16.xpose.msra.mxu0 0
        %3133 = vmatprep.subr.bf16.mxu0 0
        %3134 = vmatpush1.bf16.xpose.msra.mxu0 0
        %3135 = vmatprep.subr.bf16.mxu0 0
        %3136 = vmatpush1.bf16.xpose.msra.mxu0 0
        %3137 = vmatprep.subr.bf16.mxu0 0
        %3138 = vmatpush1.bf16.xpose.msra.mxu0 0
        %3139 = vmatprep.subr.bf16.mxu0 0
        %3140 = vmatpush1.bf16.xpose.msra.mxu0 0
        %3141 = vmatprep.subr.bf16.mxu0 0
        %3142 = vmatpush1.bf16.xpose.msra.mxu0 0
        %3143 = vmatprep.subr.bf16.mxu0 0
        %3144 = vmatpush1.bf16.xpose.msra.mxu0 0
        %3145 = vmatprep.subr.bf16.mxu0 0
        %3146 = vmatpush1.bf16.xpose.msra.mxu0 0
        %3147 = vmatprep.subr.bf16.mxu0 0
        %3148 = vmatpush1.bf16.xpose.msra.mxu0 0
        %3149 = vmatprep.subr.bf16.mxu0 0
        %3150 = vmatpush1.bf16.xpose.msra.mxu0 0
        %3151 = vmatprep.subr.bf16.mxu0 0
        %3152 = vmatpush1.bf16.xpose.msra.mxu0 0
        %3153 = vmatprep.subr.bf16.mxu0 0
        %3154 = vmatpush1.bf16.xpose.msra.mxu0 0
        %3155 = vmatprep.subr.bf16.mxu0 0
        %3156 = vmatpush1.bf16.xpose.msra.mxu0 0
        %3157 = vmatprep.mubr.bf16.mxu0 0
        %3158 = vmatmul.mubr.bf16.gmra.mrb[0].mxu0 %v3120
        %v3159 = vpop.f32.mrb[0].mxu0
        %v3160 = vadd.f32 0.0, %v3159
        %v3161 = vpop.f32.mrb[0].mxu0
        %v3162 = vpop.f32.mrb[0].mxu0
        %v3163 = vpop.f32.mrb[0].mxu0
        %3164 = vdwg.mxu0
        %3165 = vrot.lane.b32.xlu0 %v1182, 112
        %v3166 = vpop.permute.xlu0 %3165
        %3167 = vrot.lane.b32.xlu0 %v1182, 80
        %v3168 = vpop.permute.xlu0 %3167
        %v3170 = vsel %vm936, %v3166, 0
        %v3173 = vsel %vm936, %v3168, 0
        %3175 = vmatprep.subr.bf16.mxu0 0
        %3176 = vmatpush1.bf16.xpose.msra.mxu0 %v3173
        %3177 = vmatprep.subr.bf16.mxu0 0
        %3178 = vmatpush1.bf16.xpose.msra.mxu0 0
        %3179 = vmatprep.subr.bf16.mxu0 0
        %3180 = vmatpush1.bf16.xpose.msra.mxu0 0
        %3181 = vmatprep.subr.bf16.mxu0 0
        %3182 = vmatpush1.bf16.xpose.msra.mxu0 0
        %3183 = vmatprep.subr.bf16.mxu0 0
        %3184 = vmatpush1.bf16.xpose.msra.mxu0 0
        %3185 = vmatprep.subr.bf16.mxu0 0
        %3186 = vmatpush1.bf16.xpose.msra.mxu0 0
        %3187 = vmatprep.subr.bf16.mxu0 0
        %3188 = vmatpush1.bf16.xpose.msra.mxu0 0
        %3189 = vmatprep.subr.bf16.mxu0 0
        %3190 = vmatpush1.bf16.xpose.msra.mxu0 0
        %3191 = vmatprep.subr.bf16.mxu0 0
        %3192 = vmatpush1.bf16.xpose.msra.mxu0 0
        %3193 = vmatprep.subr.bf16.mxu0 0
        %3194 = vmatpush1.bf16.xpose.msra.mxu0 0
        %3195 = vmatprep.subr.bf16.mxu0 0
        %3196 = vmatpush1.bf16.xpose.msra.mxu0 0
        %3197 = vmatprep.subr.bf16.mxu0 0
        %3198 = vmatpush1.bf16.xpose.msra.mxu0 0
        %3199 = vmatprep.subr.bf16.mxu0 0
        %3200 = vmatpush1.bf16.xpose.msra.mxu0 0
        %3201 = vmatprep.subr.bf16.mxu0 0
        %3202 = vmatpush1.bf16.xpose.msra.mxu0 0
        %3203 = vmatprep.subr.bf16.mxu0 0
        %3204 = vmatpush1.bf16.xpose.msra.mxu0 0
        %3205 = vmatprep.subr.bf16.mxu0 0
        %3206 = vmatpush1.bf16.xpose.msra.mxu0 0
        %3207 = vmatprep.mubr.bf16.mxu0 0
        %3208 = vmatmul.mubr.bf16.gmra.mrb[0].mxu0 %v3170
        %v3209 = vpop.f32.mrb[0].mxu0
        %v3210 = vadd.f32 0.0, %v3209
        %v3211 = vpop.f32.mrb[0].mxu0
        %v3212 = vpop.f32.mrb[0].mxu0
        %v3213 = vpop.f32.mrb[0].mxu0
        %3214 = vdwg.mxu0
        %3215 = vrot.lane.b32.xlu0 %v1244, 112
        %v3216 = vpop.permute.xlu0 %3215
        %3217 = vrot.lane.b32.xlu0 %v1244, 80
        %v3218 = vpop.permute.xlu0 %3217
        %v3220 = vsel %vm936, %v3216, 0
        %v3223 = vsel %vm936, %v3218, 0
        %3225 = vmatprep.subr.bf16.mxu0 0
        %3226 = vmatpush1.bf16.xpose.msra.mxu0 %v3223
        %3227 = vmatprep.subr.bf16.mxu0 0
        %3228 = vmatpush1.bf16.xpose.msra.mxu0 0
        %3229 = vmatprep.subr.bf16.mxu0 0
        %3230 = vmatpush1.bf16.xpose.msra.mxu0 0
        %3231 = vmatprep.subr.bf16.mxu0 0
        %3232 = vmatpush1.bf16.xpose.msra.mxu0 0
        %3233 = vmatprep.subr.bf16.mxu0 0
        %3234 = vmatpush1.bf16.xpose.msra.mxu0 0
        %3235 = vmatprep.subr.bf16.mxu0 0
        %3236 = vmatpush1.bf16.xpose.msra.mxu0 0
        %3237 = vmatprep.subr.bf16.mxu0 0
        %3238 = vmatpush1.bf16.xpose.msra.mxu0 0
        %3239 = vmatprep.subr.bf16.mxu0 0
        %3240 = vmatpush1.bf16.xpose.msra.mxu0 0
        %3241 = vmatprep.subr.bf16.mxu0 0
        %3242 = vmatpush1.bf16.xpose.msra.mxu0 0
        %3243 = vmatprep.subr.bf16.mxu0 0
        %3244 = vmatpush1.bf16.xpose.msra.mxu0 0
        %3245 = vmatprep.subr.bf16.mxu0 0
        %3246 = vmatpush1.bf16.xpose.msra.mxu0 0
        %3247 = vmatprep.subr.bf16.mxu0 0
        %3248 = vmatpush1.bf16.xpose.msra.mxu0 0
        %3249 = vmatprep.subr.bf16.mxu0 0
        %3250 = vmatpush1.bf16.xpose.msra.mxu0 0
        %3251 = vmatprep.subr.bf16.mxu0 0
        %3252 = vmatpush1.bf16.xpose.msra.mxu0 0
        %3253 = vmatprep.subr.bf16.mxu0 0
        %3254 = vmatpush1.bf16.xpose.msra.mxu0 0
        %3255 = vmatprep.subr.bf16.mxu0 0
        %3256 = vmatpush1.bf16.xpose.msra.mxu0 0
        %3257 = vmatprep.mubr.bf16.mxu0 0
        %3258 = vmatmul.mubr.bf16.gmra.mrb[0].mxu0 %v3220
        %v3259 = vpop.f32.mrb[0].mxu0
        %v3260 = vadd.f32 0.0, %v3259
        %v3261 = vpop.f32.mrb[0].mxu0
        %v3262 = vpop.f32.mrb[0].mxu0
        %v3263 = vpop.f32.mrb[0].mxu0
        %3264 = vdwg.mxu0
        %3265 = vrot.lane.b32.xlu0 %v1306, 112
        %v3266 = vpop.permute.xlu0 %3265
        %3267 = vrot.lane.b32.xlu0 %v1306, 80
        %v3268 = vpop.permute.xlu0 %3267
        %v3270 = vsel %vm936, %v3266, 0
        %v3273 = vsel %vm936, %v3268, 0
        %3275 = vmatprep.subr.bf16.mxu0 0
        %3276 = vmatpush1.bf16.xpose.msra.mxu0 %v3273
        %3277 = vmatprep.subr.bf16.mxu0 0
        %3278 = vmatpush1.bf16.xpose.msra.mxu0 0
        %3279 = vmatprep.subr.bf16.mxu0 0
        %3280 = vmatpush1.bf16.xpose.msra.mxu0 0
        %3281 = vmatprep.subr.bf16.mxu0 0
        %3282 = vmatpush1.bf16.xpose.msra.mxu0 0
        %3283 = vmatprep.subr.bf16.mxu0 0
        %3284 = vmatpush1.bf16.xpose.msra.mxu0 0
        %3285 = vmatprep.subr.bf16.mxu0 0
        %3286 = vmatpush1.bf16.xpose.msra.mxu0 0
        %3287 = vmatprep.subr.bf16.mxu0 0
        %3288 = vmatpush1.bf16.xpose.msra.mxu0 0
        %3289 = vmatprep.subr.bf16.mxu0 0
        %3290 = vmatpush1.bf16.xpose.msra.mxu0 0
        %3291 = vmatprep.subr.bf16.mxu0 0
        %3292 = vmatpush1.bf16.xpose.msra.mxu0 0
        %3293 = vmatprep.subr.bf16.mxu0 0
        %3294 = vmatpush1.bf16.xpose.msra.mxu0 0
        %3295 = vmatprep.subr.bf16.mxu0 0
        %3296 = vmatpush1.bf16.xpose.msra.mxu0 0
        %3297 = vmatprep.subr.bf16.mxu0 0
        %3298 = vmatpush1.bf16.xpose.msra.mxu0 0
        %3299 = vmatprep.subr.bf16.mxu0 0
        %3300 = vmatpush1.bf16.xpose.msra.mxu0 0
        %3301 = vmatprep.subr.bf16.mxu0 0
        %3302 = vmatpush1.bf16.xpose.msra.mxu0 0
        %3303 = vmatprep.subr.bf16.mxu0 0
        %3304 = vmatpush1.bf16.xpose.msra.mxu0 0
        %3305 = vmatprep.subr.bf16.mxu0 0
        %3306 = vmatpush1.bf16.xpose.msra.mxu0 0
        %3307 = vmatprep.mubr.bf16.mxu0 0
        %3308 = vmatmul.mubr.bf16.gmra.mrb[0].mxu0 %v3270
        %v3309 = vpop.f32.mrb[0].mxu0
        %v3310 = vadd.f32 0.0, %v3309
        %v3311 = vpop.f32.mrb[0].mxu0
        %v3312 = vpop.f32.mrb[0].mxu0
        %v3313 = vpop.f32.mrb[0].mxu0
        %3314 = vdwg.mxu0
        %3315 = vrot.lane.b32.xlu0 %v1368, 112
        %v3316 = vpop.permute.xlu0 %3315
        %3317 = vrot.lane.b32.xlu0 %v1368, 80
        %v3318 = vpop.permute.xlu0 %3317
        %v3320 = vsel %vm936, %v3316, 0
        %v3323 = vsel %vm936, %v3318, 0
        %3325 = vmatprep.subr.bf16.mxu0 0
        %3326 = vmatpush1.bf16.xpose.msra.mxu0 %v3323
        %3327 = vmatprep.subr.bf16.mxu0 0
        %3328 = vmatpush1.bf16.xpose.msra.mxu0 0
        %3329 = vmatprep.subr.bf16.mxu0 0
        %3330 = vmatpush1.bf16.xpose.msra.mxu0 0
        %3331 = vmatprep.subr.bf16.mxu0 0
        %3332 = vmatpush1.bf16.xpose.msra.mxu0 0
        %3333 = vmatprep.subr.bf16.mxu0 0
        %3334 = vmatpush1.bf16.xpose.msra.mxu0 0
        %3335 = vmatprep.subr.bf16.mxu0 0
        %3336 = vmatpush1.bf16.xpose.msra.mxu0 0
        %3337 = vmatprep.subr.bf16.mxu0 0
        %3338 = vmatpush1.bf16.xpose.msra.mxu0 0
        %3339 = vmatprep.subr.bf16.mxu0 0
        %3340 = vmatpush1.bf16.xpose.msra.mxu0 0
        %3341 = vmatprep.subr.bf16.mxu0 0
        %3342 = vmatpush1.bf16.xpose.msra.mxu0 0
        %3343 = vmatprep.subr.bf16.mxu0 0
        %3344 = vmatpush1.bf16.xpose.msra.mxu0 0
        %3345 = vmatprep.subr.bf16.mxu0 0
        %3346 = vmatpush1.bf16.xpose.msra.mxu0 0
        %3347 = vmatprep.subr.bf16.mxu0 0
        %3348 = vmatpush1.bf16.xpose.msra.mxu0 0
        %3349 = vmatprep.subr.bf16.mxu0 0
        %3350 = vmatpush1.bf16.xpose.msra.mxu0 0
        %3351 = vmatprep.subr.bf16.mxu0 0
        %3352 = vmatpush1.bf16.xpose.msra.mxu0 0
        %3353 = vmatprep.subr.bf16.mxu0 0
        %3354 = vmatpush1.bf16.xpose.msra.mxu0 0
        %3355 = vmatprep.subr.bf16.mxu0 0
        %3356 = vmatpush1.bf16.xpose.msra.mxu0 0
        %3357 = vmatprep.mubr.bf16.mxu0 0
        %3358 = vmatmul.mubr.bf16.gmra.mrb[0].mxu0 %v3320
        %v3359 = vpop.f32.mrb[0].mxu0
        %v3360 = vadd.f32 0.0, %v3359
        %v3361 = vpop.f32.mrb[0].mxu0
        %v3362 = vpop.f32.mrb[0].mxu0
        %v3363 = vpop.f32.mrb[0].mxu0
        %3364 = vdwg.mxu0
        %v3365 = vsel %vm1417, %v3010, -inf
        %3366 = vmax.xlane.f32.xlu0 %v3365
        %v3367 = vpop.xlane.xlu0 %3366
        %v3368 = vsel %vm1417, %v3060, -inf
        %3369 = vmax.xlane.f32.xlu0 %v3368
        %v3370 = vpop.xlane.xlu0 %3369
        %v3371 = vsel %vm1417, %v3110, -inf
        %3372 = vmax.xlane.f32.xlu0 %v3371
        %v3373 = vpop.xlane.xlu0 %3372
        %v3374 = vsel %vm1417, %v3160, -inf
        %3375 = vmax.xlane.f32.xlu0 %v3374
        %v3376 = vpop.xlane.xlu0 %3375
        %v3377 = vsel %vm1417, %v3210, -inf
        %3378 = vmax.xlane.f32.xlu0 %v3377
        %v3379 = vpop.xlane.xlu0 %3378
        %v3380 = vsel %vm1417, %v3260, -inf
        %3381 = vmax.xlane.f32.xlu0 %v3380
        %v3382 = vpop.xlane.xlu0 %3381
        %v3383 = vsel %vm1417, %v3310, -inf
        %3384 = vmax.xlane.f32.xlu0 %v3383
        %v3385 = vpop.xlane.xlu0 %3384
        %v3386 = vsel %vm1417, %v3360, -inf
        %3387 = vmax.xlane.f32.xlu0 %v3386
        %v3388 = vpop.xlane.xlu0 %3387
        %v3389 = vsub.f32 %v3010, %v3367
        %v3390 = vsub.f32 %v3060, %v3370
        %v3391 = vsub.f32 %v3110, %v3373
        %v3392 = vsub.f32 %v3160, %v3376
        %v3393 = vsub.f32 %v3210, %v3379
        %v3394 = vsub.f32 %v3260, %v3382
        %v3395 = vsub.f32 %v3310, %v3385
        %v3396 = vsub.f32 %v3360, %v3388
        %v3397 = vmul.f32 %v3389, 1.442695
        %v3398 = vpow.pop %v3397
        %v3399 = vmul.f32 %v3390, 1.442695
        %v3400 = vpow.pop %v3399
        %v3401 = vmul.f32 %v3391, 1.442695
        %v3402 = vpow.pop %v3401
        %v3403 = vmul.f32 %v3392, 1.442695
        %v3404 = vpow.pop %v3403
        %v3405 = vmul.f32 %v3393, 1.442695
        %v3406 = vpow.pop %v3405
        %v3407 = vmul.f32 %v3394, 1.442695
        %v3408 = vpow.pop %v3407
        %v3409 = vmul.f32 %v3395, 1.442695
        %v3410 = vpow.pop %v3409
        %v3411 = vmul.f32 %v3396, 1.442695
        %v3412 = vpow.pop %v3411
        %v3413 = vsel %vm1417, %v3398, 0.0
        %3414 = vadd.xlane.f32.xlu0 %v3413
        %v3415 = vpop.xlane.xlu0 %3414
        %v3416 = vsel %vm1417, %v3400, 0.0
        %3417 = vadd.xlane.f32.xlu0 %v3416
        %v3418 = vpop.xlane.xlu0 %3417
        %v3419 = vsel %vm1417, %v3402, 0.0
        %3420 = vadd.xlane.f32.xlu0 %v3419
        %v3421 = vpop.xlane.xlu0 %3420
        %v3422 = vsel %vm1417, %v3404, 0.0
        %3423 = vadd.xlane.f32.xlu0 %v3422
        %v3424 = vpop.xlane.xlu0 %3423
        %v3425 = vsel %vm1417, %v3406, 0.0
        %3426 = vadd.xlane.f32.xlu0 %v3425
        %v3427 = vpop.xlane.xlu0 %3426
        %v3428 = vsel %vm1417, %v3408, 0.0
        %3429 = vadd.xlane.f32.xlu0 %v3428
        %v3430 = vpop.xlane.xlu0 %3429
        %v3431 = vsel %vm1417, %v3410, 0.0
        %3432 = vadd.xlane.f32.xlu0 %v3431
        %v3433 = vpop.xlane.xlu0 %3432
        %v3434 = vsel %vm1417, %v3412, 0.0
        %3435 = vadd.xlane.f32.xlu0 %v3434
        %v3436 = vpop.xlane.xlu0 %3435
        %v3437 = vrcp.pop %v3415
        %v3438 = vrcp.pop %v3418
        %v3439 = vrcp.pop %v3421
        %v3440 = vrcp.pop %v3424
        %v3441 = vrcp.pop %v3427
        %v3442 = vrcp.pop %v3430
        %v3443 = vrcp.pop %v3433
        %v3444 = vrcp.pop %v3436
        %v3445 = vmul.f32 %v3398, %v3437
        %v3446 = vmul.f32 %v3400, %v3438
        %v3447 = vmul.f32 %v3402, %v3439
        %v3448 = vmul.f32 %v3404, %v3440
        %v3449 = vmul.f32 %v3406, %v3441
        %v3450 = vmul.f32 %v3408, %v3442
        %v3451 = vmul.f32 %v3410, %v3443
        %v3452 = vmul.f32 %v3412, %v3444
        %v3453 = vpack.c.bf16 %v3445, %v3445
        %v3454 = vpack.c.bf16 %v3446, %v3446
        %v3455 = vpack.c.bf16 %v3447, %v3447
        %v3456 = vpack.c.bf16 %v3448, %v3448
        %v3457 = vpack.c.bf16 %v3449, %v3449
        %v3458 = vpack.c.bf16 %v3450, %v3450
        %v3459 = vpack.c.bf16 %v3451, %v3451
        %v3460 = vpack.c.bf16 %v3452, %v3452
        %3461 = vrot.lane.b32.xlu0 %v933, 48
        %v3462 = vpop.permute.xlu0 %3461
        %v3464 = vsel %vm1516, %v3453, 0
        %v3467 = vsel %vm1520, %v3462, 0
        %3469 = vmatprep.subr.bf16.mxu0 0
        %3470 = vmatpush1.bf16.msra.mxu0 %v3467
        %3471 = vmatprep.subr.bf16.mxu0 0
        %3472 = vmatpush1.bf16.msra.mxu0 0
        %3473 = vmatprep.subr.bf16.mxu0 0
        %3474 = vmatpush1.bf16.msra.mxu0 0
        %3475 = vmatprep.subr.bf16.mxu0 0
        %3476 = vmatpush1.bf16.msra.mxu0 0
        %3477 = vmatprep.subr.bf16.mxu0 0
        %3478 = vmatpush1.bf16.msra.mxu0 0
        %3479 = vmatprep.subr.bf16.mxu0 0
        %3480 = vmatpush1.bf16.msra.mxu0 0
        %3481 = vmatprep.subr.bf16.mxu0 0
        %3482 = vmatpush1.bf16.msra.mxu0 0
        %3483 = vmatprep.subr.bf16.mxu0 0
        %3484 = vmatpush1.bf16.msra.mxu0 0
        %3485 = vmatprep.subr.bf16.mxu0 0
        %3486 = vmatpush1.bf16.msra.mxu0 0
        %3487 = vmatprep.subr.bf16.mxu0 0
        %3488 = vmatpush1.bf16.msra.mxu0 0
        %3489 = vmatprep.subr.bf16.mxu0 0
        %3490 = vmatpush1.bf16.msra.mxu0 0
        %3491 = vmatprep.subr.bf16.mxu0 0
        %3492 = vmatpush1.bf16.msra.mxu0 0
        %3493 = vmatprep.subr.bf16.mxu0 0
        %3494 = vmatpush1.bf16.msra.mxu0 0
        %3495 = vmatprep.subr.bf16.mxu0 0
        %3496 = vmatpush1.bf16.msra.mxu0 0
        %3497 = vmatprep.subr.bf16.mxu0 0
        %3498 = vmatpush1.bf16.msra.mxu0 0
        %3499 = vmatprep.subr.bf16.mxu0 0
        %3500 = vmatpush1.bf16.msra.mxu0 0
        %3501 = vmatprep.mubr.bf16.mxu0 0
        %3502 = vmatmul.mubr.bf16.gmra.mrb[0].mxu0 %v3464
        %v3503 = vpop.f32.mrb[0].mxu0
        %v3504 = vadd.f32 0.0, %v3503
        %v3505 = vpop.f32.mrb[0].mxu0
        %v3506 = vpop.f32.mrb[0].mxu0
        %v3507 = vpop.f32.mrb[0].mxu0
        %3508 = vdwg.mxu0
        %3509 = vrot.lane.b32.xlu0 %v996, 48
        %v3510 = vpop.permute.xlu0 %3509
        %v3512 = vsel %vm1516, %v3454, 0
        %v3515 = vsel %vm1520, %v3510, 0
        %3517 = vmatprep.subr.bf16.mxu0 0
        %3518 = vmatpush1.bf16.msra.mxu0 %v3515
        %3519 = vmatprep.subr.bf16.mxu0 0
        %3520 = vmatpush1.bf16.msra.mxu0 0
        %3521 = vmatprep.subr.bf16.mxu0 0
        %3522 = vmatpush1.bf16.msra.mxu0 0
        %3523 = vmatprep.subr.bf16.mxu0 0
        %3524 = vmatpush1.bf16.msra.mxu0 0
        %3525 = vmatprep.subr.bf16.mxu0 0
        %3526 = vmatpush1.bf16.msra.mxu0 0
        %3527 = vmatprep.subr.bf16.mxu0 0
        %3528 = vmatpush1.bf16.msra.mxu0 0
        %3529 = vmatprep.subr.bf16.mxu0 0
        %3530 = vmatpush1.bf16.msra.mxu0 0
        %3531 = vmatprep.subr.bf16.mxu0 0
        %3532 = vmatpush1.bf16.msra.mxu0 0
        %3533 = vmatprep.subr.bf16.mxu0 0
        %3534 = vmatpush1.bf16.msra.mxu0 0
        %3535 = vmatprep.subr.bf16.mxu0 0
        %3536 = vmatpush1.bf16.msra.mxu0 0
        %3537 = vmatprep.subr.bf16.mxu0 0
        %3538 = vmatpush1.bf16.msra.mxu0 0
        %3539 = vmatprep.subr.bf16.mxu0 0
        %3540 = vmatpush1.bf16.msra.mxu0 0
        %3541 = vmatprep.subr.bf16.mxu0 0
        %3542 = vmatpush1.bf16.msra.mxu0 0
        %3543 = vmatprep.subr.bf16.mxu0 0
        %3544 = vmatpush1.bf16.msra.mxu0 0
        %3545 = vmatprep.subr.bf16.mxu0 0
        %3546 = vmatpush1.bf16.msra.mxu0 0
        %3547 = vmatprep.subr.bf16.mxu0 0
        %3548 = vmatpush1.bf16.msra.mxu0 0
        %3549 = vmatprep.mubr.bf16.mxu0 0
        %3550 = vmatmul.mubr.bf16.gmra.mrb[0].mxu0 %v3512
        %v3551 = vpop.f32.mrb[0].mxu0
        %v3552 = vadd.f32 0.0, %v3551
        %v3553 = vpop.f32.mrb[0].mxu0
        %v3554 = vpop.f32.mrb[0].mxu0
        %v3555 = vpop.f32.mrb[0].mxu0
        %3556 = vdwg.mxu0
        %3557 = vrot.lane.b32.xlu0 %v1058, 48
        %v3558 = vpop.permute.xlu0 %3557
        %v3560 = vsel %vm1516, %v3455, 0
        %v3563 = vsel %vm1520, %v3558, 0
        %3565 = vmatprep.subr.bf16.mxu0 0
        %3566 = vmatpush1.bf16.msra.mxu0 %v3563
        %3567 = vmatprep.subr.bf16.mxu0 0
        %3568 = vmatpush1.bf16.msra.mxu0 0
        %3569 = vmatprep.subr.bf16.mxu0 0
        %3570 = vmatpush1.bf16.msra.mxu0 0
        %3571 = vmatprep.subr.bf16.mxu0 0
        %3572 = vmatpush1.bf16.msra.mxu0 0
        %3573 = vmatprep.subr.bf16.mxu0 0
        %3574 = vmatpush1.bf16.msra.mxu0 0
        %3575 = vmatprep.subr.bf16.mxu0 0
        %3576 = vmatpush1.bf16.msra.mxu0 0
        %3577 = vmatprep.subr.bf16.mxu0 0
        %3578 = vmatpush1.bf16.msra.mxu0 0
        %3579 = vmatprep.subr.bf16.mxu0 0
        %3580 = vmatpush1.bf16.msra.mxu0 0
        %3581 = vmatprep.subr.bf16.mxu0 0
        %3582 = vmatpush1.bf16.msra.mxu0 0
        %3583 = vmatprep.subr.bf16.mxu0 0
        %3584 = vmatpush1.bf16.msra.mxu0 0
        %3585 = vmatprep.subr.bf16.mxu0 0
        %3586 = vmatpush1.bf16.msra.mxu0 0
        %3587 = vmatprep.subr.bf16.mxu0 0
        %3588 = vmatpush1.bf16.msra.mxu0 0
        %3589 = vmatprep.subr.bf16.mxu0 0
        %3590 = vmatpush1.bf16.msra.mxu0 0
        %3591 = vmatprep.subr.bf16.mxu0 0
        %3592 = vmatpush1.bf16.msra.mxu0 0
        %3593 = vmatprep.subr.bf16.mxu0 0
        %3594 = vmatpush1.bf16.msra.mxu0 0
        %3595 = vmatprep.subr.bf16.mxu0 0
        %3596 = vmatpush1.bf16.msra.mxu0 0
        %3597 = vmatprep.mubr.bf16.mxu0 0
        %3598 = vmatmul.mubr.bf16.gmra.mrb[0].mxu0 %v3560
        %v3599 = vpop.f32.mrb[0].mxu0
        %v3600 = vadd.f32 0.0, %v3599
        %v3601 = vpop.f32.mrb[0].mxu0
        %v3602 = vpop.f32.mrb[0].mxu0
        %v3603 = vpop.f32.mrb[0].mxu0
        %3604 = vdwg.mxu0
        %3605 = vrot.lane.b32.xlu0 %v1120, 48
        %v3606 = vpop.permute.xlu0 %3605
        %v3608 = vsel %vm1516, %v3456, 0
        %v3611 = vsel %vm1520, %v3606, 0
        %3613 = vmatprep.subr.bf16.mxu0 0
        %3614 = vmatpush1.bf16.msra.mxu0 %v3611
        %3615 = vmatprep.subr.bf16.mxu0 0
        %3616 = vmatpush1.bf16.msra.mxu0 0
        %3617 = vmatprep.subr.bf16.mxu0 0
        %3618 = vmatpush1.bf16.msra.mxu0 0
        %3619 = vmatprep.subr.bf16.mxu0 0
        %3620 = vmatpush1.bf16.msra.mxu0 0
        %3621 = vmatprep.subr.bf16.mxu0 0
        %3622 = vmatpush1.bf16.msra.mxu0 0
        %3623 = vmatprep.subr.bf16.mxu0 0
        %3624 = vmatpush1.bf16.msra.mxu0 0
        %3625 = vmatprep.subr.bf16.mxu0 0
        %3626 = vmatpush1.bf16.msra.mxu0 0
        %3627 = vmatprep.subr.bf16.mxu0 0
        %3628 = vmatpush1.bf16.msra.mxu0 0
        %3629 = vmatprep.subr.bf16.mxu0 0
        %3630 = vmatpush1.bf16.msra.mxu0 0
        %3631 = vmatprep.subr.bf16.mxu0 0
        %3632 = vmatpush1.bf16.msra.mxu0 0
        %3633 = vmatprep.subr.bf16.mxu0 0
        %3634 = vmatpush1.bf16.msra.mxu0 0
        %3635 = vmatprep.subr.bf16.mxu0 0
        %3636 = vmatpush1.bf16.msra.mxu0 0
        %3637 = vmatprep.subr.bf16.mxu0 0
        %3638 = vmatpush1.bf16.msra.mxu0 0
        %3639 = vmatprep.subr.bf16.mxu0 0
        %3640 = vmatpush1.bf16.msra.mxu0 0
        %3641 = vmatprep.subr.bf16.mxu0 0
        %3642 = vmatpush1.bf16.msra.mxu0 0
        %3643 = vmatprep.subr.bf16.mxu0 0
        %3644 = vmatpush1.bf16.msra.mxu0 0
        %3645 = vmatprep.mubr.bf16.mxu0 0
        %3646 = vmatmul.mubr.bf16.gmra.mrb[0].mxu0 %v3608
        %v3647 = vpop.f32.mrb[0].mxu0
        %v3648 = vadd.f32 0.0, %v3647
        %v3649 = vpop.f32.mrb[0].mxu0
        %v3650 = vpop.f32.mrb[0].mxu0
        %v3651 = vpop.f32.mrb[0].mxu0
        %3652 = vdwg.mxu0
        %3653 = vrot.lane.b32.xlu0 %v1182, 48
        %v3654 = vpop.permute.xlu0 %3653
        %v3656 = vsel %vm1516, %v3457, 0
        %v3659 = vsel %vm1520, %v3654, 0
        %3661 = vmatprep.subr.bf16.mxu0 0
        %3662 = vmatpush1.bf16.msra.mxu0 %v3659
        %3663 = vmatprep.subr.bf16.mxu0 0
        %3664 = vmatpush1.bf16.msra.mxu0 0
        %3665 = vmatprep.subr.bf16.mxu0 0
        %3666 = vmatpush1.bf16.msra.mxu0 0
        %3667 = vmatprep.subr.bf16.mxu0 0
        %3668 = vmatpush1.bf16.msra.mxu0 0
        %3669 = vmatprep.subr.bf16.mxu0 0
        %3670 = vmatpush1.bf16.msra.mxu0 0
        %3671 = vmatprep.subr.bf16.mxu0 0
        %3672 = vmatpush1.bf16.msra.mxu0 0
        %3673 = vmatprep.subr.bf16.mxu0 0
        %3674 = vmatpush1.bf16.msra.mxu0 0
        %3675 = vmatprep.subr.bf16.mxu0 0
        %3676 = vmatpush1.bf16.msra.mxu0 0
        %3677 = vmatprep.subr.bf16.mxu0 0
        %3678 = vmatpush1.bf16.msra.mxu0 0
        %3679 = vmatprep.subr.bf16.mxu0 0
        %3680 = vmatpush1.bf16.msra.mxu0 0
        %3681 = vmatprep.subr.bf16.mxu0 0
        %3682 = vmatpush1.bf16.msra.mxu0 0
        %3683 = vmatprep.subr.bf16.mxu0 0
        %3684 = vmatpush1.bf16.msra.mxu0 0
        %3685 = vmatprep.subr.bf16.mxu0 0
        %3686 = vmatpush1.bf16.msra.mxu0 0
        %3687 = vmatprep.subr.bf16.mxu0 0
        %3688 = vmatpush1.bf16.msra.mxu0 0
        %3689 = vmatprep.subr.bf16.mxu0 0
        %3690 = vmatpush1.bf16.msra.mxu0 0
        %3691 = vmatprep.subr.bf16.mxu0 0
        %3692 = vmatpush1.bf16.msra.mxu0 0
        %3693 = vmatprep.mubr.bf16.mxu0 0
        %3694 = vmatmul.mubr.bf16.gmra.mrb[0].mxu0 %v3656
        %v3695 = vpop.f32.mrb[0].mxu0
        %v3696 = vadd.f32 0.0, %v3695
        %v3697 = vpop.f32.mrb[0].mxu0
        %v3698 = vpop.f32.mrb[0].mxu0
        %v3699 = vpop.f32.mrb[0].mxu0
        %3700 = vdwg.mxu0
        %3701 = vrot.lane.b32.xlu0 %v1244, 48
        %v3702 = vpop.permute.xlu0 %3701
        %v3704 = vsel %vm1516, %v3458, 0
        %v3707 = vsel %vm1520, %v3702, 0
        %3709 = vmatprep.subr.bf16.mxu0 0
        %3710 = vmatpush1.bf16.msra.mxu0 %v3707
        %3711 = vmatprep.subr.bf16.mxu0 0
        %3712 = vmatpush1.bf16.msra.mxu0 0
        %3713 = vmatprep.subr.bf16.mxu0 0
        %3714 = vmatpush1.bf16.msra.mxu0 0
        %3715 = vmatprep.subr.bf16.mxu0 0
        %3716 = vmatpush1.bf16.msra.mxu0 0
        %3717 = vmatprep.subr.bf16.mxu0 0
        %3718 = vmatpush1.bf16.msra.mxu0 0
        %3719 = vmatprep.subr.bf16.mxu0 0
        %3720 = vmatpush1.bf16.msra.mxu0 0
        %3721 = vmatprep.subr.bf16.mxu0 0
        %3722 = vmatpush1.bf16.msra.mxu0 0
        %3723 = vmatprep.subr.bf16.mxu0 0
        %3724 = vmatpush1.bf16.msra.mxu0 0
        %3725 = vmatprep.subr.bf16.mxu0 0
        %3726 = vmatpush1.bf16.msra.mxu0 0
        %3727 = vmatprep.subr.bf16.mxu0 0
        %3728 = vmatpush1.bf16.msra.mxu0 0
        %3729 = vmatprep.subr.bf16.mxu0 0
        %3730 = vmatpush1.bf16.msra.mxu0 0
        %3731 = vmatprep.subr.bf16.mxu0 0
        %3732 = vmatpush1.bf16.msra.mxu0 0
        %3733 = vmatprep.subr.bf16.mxu0 0
        %3734 = vmatpush1.bf16.msra.mxu0 0
        %3735 = vmatprep.subr.bf16.mxu0 0
        %3736 = vmatpush1.bf16.msra.mxu0 0
        %3737 = vmatprep.subr.bf16.mxu0 0
        %3738 = vmatpush1.bf16.msra.mxu0 0
        %3739 = vmatprep.subr.bf16.mxu0 0
        %3740 = vmatpush1.bf16.msra.mxu0 0
        %3741 = vmatprep.mubr.bf16.mxu0 0
        %3742 = vmatmul.mubr.bf16.gmra.mrb[0].mxu0 %v3704
        %v3743 = vpop.f32.mrb[0].mxu0
        %v3744 = vadd.f32 0.0, %v3743
        %v3745 = vpop.f32.mrb[0].mxu0
        %v3746 = vpop.f32.mrb[0].mxu0
        %v3747 = vpop.f32.mrb[0].mxu0
        %3748 = vdwg.mxu0
        %3749 = vrot.lane.b32.xlu0 %v1306, 48
        %v3750 = vpop.permute.xlu0 %3749
        %v3752 = vsel %vm1516, %v3459, 0
        %v3755 = vsel %vm1520, %v3750, 0
        %3757 = vmatprep.subr.bf16.mxu0 0
        %3758 = vmatpush1.bf16.msra.mxu0 %v3755
        %3759 = vmatprep.subr.bf16.mxu0 0
        %3760 = vmatpush1.bf16.msra.mxu0 0
        %3761 = vmatprep.subr.bf16.mxu0 0
        %3762 = vmatpush1.bf16.msra.mxu0 0
        %3763 = vmatprep.subr.bf16.mxu0 0
        %3764 = vmatpush1.bf16.msra.mxu0 0
        %3765 = vmatprep.subr.bf16.mxu0 0
        %3766 = vmatpush1.bf16.msra.mxu0 0
        %3767 = vmatprep.subr.bf16.mxu0 0
        %3768 = vmatpush1.bf16.msra.mxu0 0
        %3769 = vmatprep.subr.bf16.mxu0 0
        %3770 = vmatpush1.bf16.msra.mxu0 0
        %3771 = vmatprep.subr.bf16.mxu0 0
        %3772 = vmatpush1.bf16.msra.mxu0 0
        %3773 = vmatprep.subr.bf16.mxu0 0
        %3774 = vmatpush1.bf16.msra.mxu0 0
        %3775 = vmatprep.subr.bf16.mxu0 0
        %3776 = vmatpush1.bf16.msra.mxu0 0
        %3777 = vmatprep.subr.bf16.mxu0 0
        %3778 = vmatpush1.bf16.msra.mxu0 0
        %3779 = vmatprep.subr.bf16.mxu0 0
        %3780 = vmatpush1.bf16.msra.mxu0 0
        %3781 = vmatprep.subr.bf16.mxu0 0
        %3782 = vmatpush1.bf16.msra.mxu0 0
        %3783 = vmatprep.subr.bf16.mxu0 0
        %3784 = vmatpush1.bf16.msra.mxu0 0
        %3785 = vmatprep.subr.bf16.mxu0 0
        %3786 = vmatpush1.bf16.msra.mxu0 0
        %3787 = vmatprep.subr.bf16.mxu0 0
        %3788 = vmatpush1.bf16.msra.mxu0 0
        %3789 = vmatprep.mubr.bf16.mxu0 0
        %3790 = vmatmul.mubr.bf16.gmra.mrb[0].mxu0 %v3752
        %v3791 = vpop.f32.mrb[0].mxu0
        %v3792 = vadd.f32 0.0, %v3791
        %v3793 = vpop.f32.mrb[0].mxu0
        %v3794 = vpop.f32.mrb[0].mxu0
        %v3795 = vpop.f32.mrb[0].mxu0
        %3796 = vdwg.mxu0
        %3797 = vrot.lane.b32.xlu0 %v1368, 48
        %v3798 = vpop.permute.xlu0 %3797
        %v3800 = vsel %vm1516, %v3460, 0
        %v3803 = vsel %vm1520, %v3798, 0
        %3805 = vmatprep.subr.bf16.mxu0 0
        %3806 = vmatpush1.bf16.msra.mxu0 %v3803
        %3807 = vmatprep.subr.bf16.mxu0 0
        %3808 = vmatpush1.bf16.msra.mxu0 0
        %3809 = vmatprep.subr.bf16.mxu0 0
        %3810 = vmatpush1.bf16.msra.mxu0 0
        %3811 = vmatprep.subr.bf16.mxu0 0
        %3812 = vmatpush1.bf16.msra.mxu0 0
        %3813 = vmatprep.subr.bf16.mxu0 0
        %3814 = vmatpush1.bf16.msra.mxu0 0
        %3815 = vmatprep.subr.bf16.mxu0 0
        %3816 = vmatpush1.bf16.msra.mxu0 0
        %3817 = vmatprep.subr.bf16.mxu0 0
        %3818 = vmatpush1.bf16.msra.mxu0 0
        %3819 = vmatprep.subr.bf16.mxu0 0
        %3820 = vmatpush1.bf16.msra.mxu0 0
        %3821 = vmatprep.subr.bf16.mxu0 0
        %3822 = vmatpush1.bf16.msra.mxu0 0
        %3823 = vmatprep.subr.bf16.mxu0 0
        %3824 = vmatpush1.bf16.msra.mxu0 0
        %3825 = vmatprep.subr.bf16.mxu0 0
        %3826 = vmatpush1.bf16.msra.mxu0 0
        %3827 = vmatprep.subr.bf16.mxu0 0
        %3828 = vmatpush1.bf16.msra.mxu0 0
        %3829 = vmatprep.subr.bf16.mxu0 0
        %3830 = vmatpush1.bf16.msra.mxu0 0
        %3831 = vmatprep.subr.bf16.mxu0 0
        %3832 = vmatpush1.bf16.msra.mxu0 0
        %3833 = vmatprep.subr.bf16.mxu0 0
        %3834 = vmatpush1.bf16.msra.mxu0 0
        %3835 = vmatprep.subr.bf16.mxu0 0
        %3836 = vmatpush1.bf16.msra.mxu0 0
        %3837 = vmatprep.mubr.bf16.mxu0 0
        %3838 = vmatmul.mubr.bf16.gmra.mrb[0].mxu0 %v3800
        %v3839 = vpop.f32.mrb[0].mxu0
        %v3840 = vadd.f32 0.0, %v3839
        %v3841 = vpop.f32.mrb[0].mxu0
        %v3842 = vpop.f32.mrb[0].mxu0
        %v3843 = vpop.f32.mrb[0].mxu0
        %3844 = vdwg.mxu0
        %v3853 = vcombine.low %v3504, %v3552
        %v3854 = vcombine.low %v3600, %v3648
        %v3856 = vunpack.c.l.s4 1983009808
        %v3857 = vunpack.c.0.s8 %v3856
        %v3858 = vlaneseq
        %v3859 = vshrl.u32 %v3858, 7
        %v3860 = vsub.s32 %v3857, %v3859
        %v3861 = vrot.slane %v3853, %v3860
        %v3863 = vunpack.c.l.s4 1983009808
        %v3864 = vunpack.c.0.s8 %v3863
        %v3865 = vlaneseq
        %v3866 = vshrl.u32 %v3865, 7
        %v3867 = vsub.s32 %v3864, %v3866
        %v3868 = vrot.slane %v3854, %v3867
        %v3869 = vcombine.low %v3861, %v3868
        %v3870 = vcombine.low %v3696, %v3744
        %v3871 = vcombine.low %v3792, %v3840
        %v3873 = vunpack.c.l.s4 1983009808
        %v3874 = vunpack.c.0.s8 %v3873
        %v3875 = vlaneseq
        %v3876 = vshrl.u32 %v3875, 7
        %v3877 = vsub.s32 %v3874, %v3876
        %v3878 = vrot.slane %v3870, %v3877
        %v3880 = vunpack.c.l.s4 1983009808
        %v3881 = vunpack.c.0.s8 %v3880
        %v3882 = vlaneseq
        %v3883 = vshrl.u32 %v3882, 7
        %v3884 = vsub.s32 %v3881, %v3883
        %v3885 = vrot.slane %v3871, %v3884
        %v3886 = vcombine.low %v3878, %v3885
        %v3889 = vpack.c.bf16 %v3886, %v3869
        %v3891 = vsel %vm936, %v3889, 0
        %v3894 = vsel %vm2873, %v918, 0
        %3896 = vmatprep.subr.bf16.mxu0 0
        %3897 = vmatpush1.bf16.msra.mxu0 %v3894
        %3898 = vmatprep.subr.bf16.mxu0 0
        %3899 = vmatpush1.bf16.msra.mxu0 0
        %3900 = vmatprep.subr.bf16.mxu0 0
        %3901 = vmatpush1.bf16.msra.mxu0 0
        %3902 = vmatprep.subr.bf16.mxu0 0
        %3903 = vmatpush1.bf16.msra.mxu0 0
        %3904 = vmatprep.subr.bf16.mxu0 0
        %3905 = vmatpush1.bf16.msra.mxu0 0
        %3906 = vmatprep.subr.bf16.mxu0 0
        %3907 = vmatpush1.bf16.msra.mxu0 0
        %3908 = vmatprep.subr.bf16.mxu0 0
        %3909 = vmatpush1.bf16.msra.mxu0 0
        %3910 = vmatprep.subr.bf16.mxu0 0
        %3911 = vmatpush1.bf16.msra.mxu0 0
        %3912 = vmatprep.subr.bf16.mxu0 0
        %3913 = vmatpush1.bf16.msra.mxu0 0
        %3914 = vmatprep.subr.bf16.mxu0 0
        %3915 = vmatpush1.bf16.msra.mxu0 0
        %3916 = vmatprep.subr.bf16.mxu0 0
        %3917 = vmatpush1.bf16.msra.mxu0 0
        %3918 = vmatprep.subr.bf16.mxu0 0
        %3919 = vmatpush1.bf16.msra.mxu0 0
        %3920 = vmatprep.subr.bf16.mxu0 0
        %3921 = vmatpush1.bf16.msra.mxu0 0
        %3922 = vmatprep.subr.bf16.mxu0 0
        %3923 = vmatpush1.bf16.msra.mxu0 0
        %3924 = vmatprep.subr.bf16.mxu0 0
        %3925 = vmatpush1.bf16.msra.mxu0 0
        %3926 = vmatprep.subr.bf16.mxu0 0
        %3927 = vmatpush1.bf16.msra.mxu0 0
        %3928 = vmatprep.mubr.bf16.mxu0 0
        %3929 = vmatmul.mubr.bf16.gmra.mrb[0].mxu0 %v3891
        %v3930 = vpop.f32.mrb[0].mxu0
        %v3931 = vadd.f32 0.0, %v3930
        %v3932 = vpop.f32.mrb[0].mxu0
        %v3933 = vpop.f32.mrb[0].mxu0
        %v3934 = vadd.f32 0.0, %v3933
        %v3935 = vpop.f32.mrb[0].mxu0
        %3936 = vdwg.mxu0
        %v3937 = vadd.f32 %v2959, %v3931
        %v3938 = vadd.f32 %v2962, %v3934
        %3939 = vrot.lane.b32.xlu0 %v933, 104
        %v3940 = vpop.permute.xlu0 %3939
        %3941 = vrot.lane.b32.xlu0 %v933, 72
        %v3942 = vpop.permute.xlu0 %3941
        %v3944 = vsel %vm936, %v3940, 0
        %v3947 = vsel %vm936, %v3942, 0
        %3949 = vmatprep.subr.bf16.mxu0 0
        %3950 = vmatpush1.bf16.xpose.msra.mxu0 %v3947
        %3951 = vmatprep.subr.bf16.mxu0 0
        %3952 = vmatpush1.bf16.xpose.msra.mxu0 0
        %3953 = vmatprep.subr.bf16.mxu0 0
        %3954 = vmatpush1.bf16.xpose.msra.mxu0 0
        %3955 = vmatprep.subr.bf16.mxu0 0
        %3956 = vmatpush1.bf16.xpose.msra.mxu0 0
        %3957 = vmatprep.subr.bf16.mxu0 0
        %3958 = vmatpush1.bf16.xpose.msra.mxu0 0
        %3959 = vmatprep.subr.bf16.mxu0 0
        %3960 = vmatpush1.bf16.xpose.msra.mxu0 0
        %3961 = vmatprep.subr.bf16.mxu0 0
        %3962 = vmatpush1.bf16.xpose.msra.mxu0 0
        %3963 = vmatprep.subr.bf16.mxu0 0
        %3964 = vmatpush1.bf16.xpose.msra.mxu0 0
        %3965 = vmatprep.subr.bf16.mxu0 0
        %3966 = vmatpush1.bf16.xpose.msra.mxu0 0
        %3967 = vmatprep.subr.bf16.mxu0 0
        %3968 = vmatpush1.bf16.xpose.msra.mxu0 0
        %3969 = vmatprep.subr.bf16.mxu0 0
        %3970 = vmatpush1.bf16.xpose.msra.mxu0 0
        %3971 = vmatprep.subr.bf16.mxu0 0
        %3972 = vmatpush1.bf16.xpose.msra.mxu0 0
        %3973 = vmatprep.subr.bf16.mxu0 0
        %3974 = vmatpush1.bf16.xpose.msra.mxu0 0
        %3975 = vmatprep.subr.bf16.mxu0 0
        %3976 = vmatpush1.bf16.xpose.msra.mxu0 0
        %3977 = vmatprep.subr.bf16.mxu0 0
        %3978 = vmatpush1.bf16.xpose.msra.mxu0 0
        %3979 = vmatprep.subr.bf16.mxu0 0
        %3980 = vmatpush1.bf16.xpose.msra.mxu0 0
        %3981 = vmatprep.mubr.bf16.mxu0 0
        %3982 = vmatmul.mubr.bf16.gmra.mrb[0].mxu0 %v3944
        %v3983 = vpop.f32.mrb[0].mxu0
        %v3984 = vadd.f32 0.0, %v3983
        %v3985 = vpop.f32.mrb[0].mxu0
        %v3986 = vpop.f32.mrb[0].mxu0
        %v3987 = vpop.f32.mrb[0].mxu0
        %3988 = vdwg.mxu0
        %3989 = vrot.lane.b32.xlu0 %v996, 104
        %v3990 = vpop.permute.xlu0 %3989
        %3991 = vrot.lane.b32.xlu0 %v996, 72
        %v3992 = vpop.permute.xlu0 %3991
        %v3994 = vsel %vm936, %v3990, 0
        %v3997 = vsel %vm936, %v3992, 0
        %3999 = vmatprep.subr.bf16.mxu0 0
        %4000 = vmatpush1.bf16.xpose.msra.mxu0 %v3997
        %4001 = vmatprep.subr.bf16.mxu0 0
        %4002 = vmatpush1.bf16.xpose.msra.mxu0 0
        %4003 = vmatprep.subr.bf16.mxu0 0
        %4004 = vmatpush1.bf16.xpose.msra.mxu0 0
        %4005 = vmatprep.subr.bf16.mxu0 0
        %4006 = vmatpush1.bf16.xpose.msra.mxu0 0
        %4007 = vmatprep.subr.bf16.mxu0 0
        %4008 = vmatpush1.bf16.xpose.msra.mxu0 0
        %4009 = vmatprep.subr.bf16.mxu0 0
        %4010 = vmatpush1.bf16.xpose.msra.mxu0 0
        %4011 = vmatprep.subr.bf16.mxu0 0
        %4012 = vmatpush1.bf16.xpose.msra.mxu0 0
        %4013 = vmatprep.subr.bf16.mxu0 0
        %4014 = vmatpush1.bf16.xpose.msra.mxu0 0
        %4015 = vmatprep.subr.bf16.mxu0 0
        %4016 = vmatpush1.bf16.xpose.msra.mxu0 0
        %4017 = vmatprep.subr.bf16.mxu0 0
        %4018 = vmatpush1.bf16.xpose.msra.mxu0 0
        %4019 = vmatprep.subr.bf16.mxu0 0
        %4020 = vmatpush1.bf16.xpose.msra.mxu0 0
        %4021 = vmatprep.subr.bf16.mxu0 0
        %4022 = vmatpush1.bf16.xpose.msra.mxu0 0
        %4023 = vmatprep.subr.bf16.mxu0 0
        %4024 = vmatpush1.bf16.xpose.msra.mxu0 0
        %4025 = vmatprep.subr.bf16.mxu0 0
        %4026 = vmatpush1.bf16.xpose.msra.mxu0 0
        %4027 = vmatprep.subr.bf16.mxu0 0
        %4028 = vmatpush1.bf16.xpose.msra.mxu0 0
        %4029 = vmatprep.subr.bf16.mxu0 0
        %4030 = vmatpush1.bf16.xpose.msra.mxu0 0
        %4031 = vmatprep.mubr.bf16.mxu0 0
        %4032 = vmatmul.mubr.bf16.gmra.mrb[0].mxu0 %v3994
        %v4033 = vpop.f32.mrb[0].mxu0
        %v4034 = vadd.f32 0.0, %v4033
        %v4035 = vpop.f32.mrb[0].mxu0
        %v4036 = vpop.f32.mrb[0].mxu0
        %v4037 = vpop.f32.mrb[0].mxu0
        %4038 = vdwg.mxu0
        %4039 = vrot.lane.b32.xlu0 %v1058, 104
        %v4040 = vpop.permute.xlu0 %4039
        %4041 = vrot.lane.b32.xlu0 %v1058, 72
        %v4042 = vpop.permute.xlu0 %4041
        %v4044 = vsel %vm936, %v4040, 0
        %v4047 = vsel %vm936, %v4042, 0
        %4049 = vmatprep.subr.bf16.mxu0 0
        %4050 = vmatpush1.bf16.xpose.msra.mxu0 %v4047
        %4051 = vmatprep.subr.bf16.mxu0 0
        %4052 = vmatpush1.bf16.xpose.msra.mxu0 0
        %4053 = vmatprep.subr.bf16.mxu0 0
        %4054 = vmatpush1.bf16.xpose.msra.mxu0 0
        %4055 = vmatprep.subr.bf16.mxu0 0
        %4056 = vmatpush1.bf16.xpose.msra.mxu0 0
        %4057 = vmatprep.subr.bf16.mxu0 0
        %4058 = vmatpush1.bf16.xpose.msra.mxu0 0
        %4059 = vmatprep.subr.bf16.mxu0 0
        %4060 = vmatpush1.bf16.xpose.msra.mxu0 0
        %4061 = vmatprep.subr.bf16.mxu0 0
        %4062 = vmatpush1.bf16.xpose.msra.mxu0 0
        %4063 = vmatprep.subr.bf16.mxu0 0
        %4064 = vmatpush1.bf16.xpose.msra.mxu0 0
        %4065 = vmatprep.subr.bf16.mxu0 0
        %4066 = vmatpush1.bf16.xpose.msra.mxu0 0
        %4067 = vmatprep.subr.bf16.mxu0 0
        %4068 = vmatpush1.bf16.xpose.msra.mxu0 0
        %4069 = vmatprep.subr.bf16.mxu0 0
        %4070 = vmatpush1.bf16.xpose.msra.mxu0 0
        %4071 = vmatprep.subr.bf16.mxu0 0
        %4072 = vmatpush1.bf16.xpose.msra.mxu0 0
        %4073 = vmatprep.subr.bf16.mxu0 0
        %4074 = vmatpush1.bf16.xpose.msra.mxu0 0
        %4075 = vmatprep.subr.bf16.mxu0 0
        %4076 = vmatpush1.bf16.xpose.msra.mxu0 0
        %4077 = vmatprep.subr.bf16.mxu0 0
        %4078 = vmatpush1.bf16.xpose.msra.mxu0 0
        %4079 = vmatprep.subr.bf16.mxu0 0
        %4080 = vmatpush1.bf16.xpose.msra.mxu0 0
        %4081 = vmatprep.mubr.bf16.mxu0 0
        %4082 = vmatmul.mubr.bf16.gmra.mrb[0].mxu0 %v4044
        %v4083 = vpop.f32.mrb[0].mxu0
        %v4084 = vadd.f32 0.0, %v4083
        %v4085 = vpop.f32.mrb[0].mxu0
        %v4086 = vpop.f32.mrb[0].mxu0
        %v4087 = vpop.f32.mrb[0].mxu0
        %4088 = vdwg.mxu0
        %4089 = vrot.lane.b32.xlu0 %v1120, 104
        %v4090 = vpop.permute.xlu0 %4089
        %4091 = vrot.lane.b32.xlu0 %v1120, 72
        %v4092 = vpop.permute.xlu0 %4091
        %v4094 = vsel %vm936, %v4090, 0
        %v4097 = vsel %vm936, %v4092, 0
        %4099 = vmatprep.subr.bf16.mxu0 0
        %4100 = vmatpush1.bf16.xpose.msra.mxu0 %v4097
        %4101 = vmatprep.subr.bf16.mxu0 0
        %4102 = vmatpush1.bf16.xpose.msra.mxu0 0
        %4103 = vmatprep.subr.bf16.mxu0 0
        %4104 = vmatpush1.bf16.xpose.msra.mxu0 0
        %4105 = vmatprep.subr.bf16.mxu0 0
        %4106 = vmatpush1.bf16.xpose.msra.mxu0 0
        %4107 = vmatprep.subr.bf16.mxu0 0
        %4108 = vmatpush1.bf16.xpose.msra.mxu0 0
        %4109 = vmatprep.subr.bf16.mxu0 0
        %4110 = vmatpush1.bf16.xpose.msra.mxu0 0
        %4111 = vmatprep.subr.bf16.mxu0 0
        %4112 = vmatpush1.bf16.xpose.msra.mxu0 0
        %4113 = vmatprep.subr.bf16.mxu0 0
        %4114 = vmatpush1.bf16.xpose.msra.mxu0 0
        %4115 = vmatprep.subr.bf16.mxu0 0
        %4116 = vmatpush1.bf16.xpose.msra.mxu0 0
        %4117 = vmatprep.subr.bf16.mxu0 0
        %4118 = vmatpush1.bf16.xpose.msra.mxu0 0
        %4119 = vmatprep.subr.bf16.mxu0 0
        %4120 = vmatpush1.bf16.xpose.msra.mxu0 0
        %4121 = vmatprep.subr.bf16.mxu0 0
        %4122 = vmatpush1.bf16.xpose.msra.mxu0 0
        %4123 = vmatprep.subr.bf16.mxu0 0
        %4124 = vmatpush1.bf16.xpose.msra.mxu0 0
        %4125 = vmatprep.subr.bf16.mxu0 0
        %4126 = vmatpush1.bf16.xpose.msra.mxu0 0
        %4127 = vmatprep.subr.bf16.mxu0 0
        %4128 = vmatpush1.bf16.xpose.msra.mxu0 0
        %4129 = vmatprep.subr.bf16.mxu0 0
        %4130 = vmatpush1.bf16.xpose.msra.mxu0 0
        %4131 = vmatprep.mubr.bf16.mxu0 0
        %4132 = vmatmul.mubr.bf16.gmra.mrb[0].mxu0 %v4094
        %v4133 = vpop.f32.mrb[0].mxu0
        %v4134 = vadd.f32 0.0, %v4133
        %v4135 = vpop.f32.mrb[0].mxu0
        %v4136 = vpop.f32.mrb[0].mxu0
        %v4137 = vpop.f32.mrb[0].mxu0
        %4138 = vdwg.mxu0
        %4139 = vrot.lane.b32.xlu0 %v1182, 104
        %v4140 = vpop.permute.xlu0 %4139
        %4141 = vrot.lane.b32.xlu0 %v1182, 72
        %v4142 = vpop.permute.xlu0 %4141
        %v4144 = vsel %vm936, %v4140, 0
        %v4147 = vsel %vm936, %v4142, 0
        %4149 = vmatprep.subr.bf16.mxu0 0
        %4150 = vmatpush1.bf16.xpose.msra.mxu0 %v4147
        %4151 = vmatprep.subr.bf16.mxu0 0
        %4152 = vmatpush1.bf16.xpose.msra.mxu0 0
        %4153 = vmatprep.subr.bf16.mxu0 0
        %4154 = vmatpush1.bf16.xpose.msra.mxu0 0
        %4155 = vmatprep.subr.bf16.mxu0 0
        %4156 = vmatpush1.bf16.xpose.msra.mxu0 0
        %4157 = vmatprep.subr.bf16.mxu0 0
        %4158 = vmatpush1.bf16.xpose.msra.mxu0 0
        %4159 = vmatprep.subr.bf16.mxu0 0
        %4160 = vmatpush1.bf16.xpose.msra.mxu0 0
        %4161 = vmatprep.subr.bf16.mxu0 0
        %4162 = vmatpush1.bf16.xpose.msra.mxu0 0
        %4163 = vmatprep.subr.bf16.mxu0 0
        %4164 = vmatpush1.bf16.xpose.msra.mxu0 0
        %4165 = vmatprep.subr.bf16.mxu0 0
        %4166 = vmatpush1.bf16.xpose.msra.mxu0 0
        %4167 = vmatprep.subr.bf16.mxu0 0
        %4168 = vmatpush1.bf16.xpose.msra.mxu0 0
        %4169 = vmatprep.subr.bf16.mxu0 0
        %4170 = vmatpush1.bf16.xpose.msra.mxu0 0
        %4171 = vmatprep.subr.bf16.mxu0 0
        %4172 = vmatpush1.bf16.xpose.msra.mxu0 0
        %4173 = vmatprep.subr.bf16.mxu0 0
        %4174 = vmatpush1.bf16.xpose.msra.mxu0 0
        %4175 = vmatprep.subr.bf16.mxu0 0
        %4176 = vmatpush1.bf16.xpose.msra.mxu0 0
        %4177 = vmatprep.subr.bf16.mxu0 0
        %4178 = vmatpush1.bf16.xpose.msra.mxu0 0
        %4179 = vmatprep.subr.bf16.mxu0 0
        %4180 = vmatpush1.bf16.xpose.msra.mxu0 0
        %4181 = vmatprep.mubr.bf16.mxu0 0
        %4182 = vmatmul.mubr.bf16.gmra.mrb[0].mxu0 %v4144
        %v4183 = vpop.f32.mrb[0].mxu0
        %v4184 = vadd.f32 0.0, %v4183
        %v4185 = vpop.f32.mrb[0].mxu0
        %v4186 = vpop.f32.mrb[0].mxu0
        %v4187 = vpop.f32.mrb[0].mxu0
        %4188 = vdwg.mxu0
        %4189 = vrot.lane.b32.xlu0 %v1244, 104
        %v4190 = vpop.permute.xlu0 %4189
        %4191 = vrot.lane.b32.xlu0 %v1244, 72
        %v4192 = vpop.permute.xlu0 %4191
        %v4194 = vsel %vm936, %v4190, 0
        %v4197 = vsel %vm936, %v4192, 0
        %4199 = vmatprep.subr.bf16.mxu0 0
        %4200 = vmatpush1.bf16.xpose.msra.mxu0 %v4197
        %4201 = vmatprep.subr.bf16.mxu0 0
        %4202 = vmatpush1.bf16.xpose.msra.mxu0 0
        %4203 = vmatprep.subr.bf16.mxu0 0
        %4204 = vmatpush1.bf16.xpose.msra.mxu0 0
        %4205 = vmatprep.subr.bf16.mxu0 0
        %4206 = vmatpush1.bf16.xpose.msra.mxu0 0
        %4207 = vmatprep.subr.bf16.mxu0 0
        %4208 = vmatpush1.bf16.xpose.msra.mxu0 0
        %4209 = vmatprep.subr.bf16.mxu0 0
        %4210 = vmatpush1.bf16.xpose.msra.mxu0 0
        %4211 = vmatprep.subr.bf16.mxu0 0
        %4212 = vmatpush1.bf16.xpose.msra.mxu0 0
        %4213 = vmatprep.subr.bf16.mxu0 0
        %4214 = vmatpush1.bf16.xpose.msra.mxu0 0
        %4215 = vmatprep.subr.bf16.mxu0 0
        %4216 = vmatpush1.bf16.xpose.msra.mxu0 0
        %4217 = vmatprep.subr.bf16.mxu0 0
        %4218 = vmatpush1.bf16.xpose.msra.mxu0 0
        %4219 = vmatprep.subr.bf16.mxu0 0
        %4220 = vmatpush1.bf16.xpose.msra.mxu0 0
        %4221 = vmatprep.subr.bf16.mxu0 0
        %4222 = vmatpush1.bf16.xpose.msra.mxu0 0
        %4223 = vmatprep.subr.bf16.mxu0 0
        %4224 = vmatpush1.bf16.xpose.msra.mxu0 0
        %4225 = vmatprep.subr.bf16.mxu0 0
        %4226 = vmatpush1.bf16.xpose.msra.mxu0 0
        %4227 = vmatprep.subr.bf16.mxu0 0
        %4228 = vmatpush1.bf16.xpose.msra.mxu0 0
        %4229 = vmatprep.subr.bf16.mxu0 0
        %4230 = vmatpush1.bf16.xpose.msra.mxu0 0
        %4231 = vmatprep.mubr.bf16.mxu0 0
        %4232 = vmatmul.mubr.bf16.gmra.mrb[0].mxu0 %v4194
        %v4233 = vpop.f32.mrb[0].mxu0
        %v4234 = vadd.f32 0.0, %v4233
        %v4235 = vpop.f32.mrb[0].mxu0
        %v4236 = vpop.f32.mrb[0].mxu0
        %v4237 = vpop.f32.mrb[0].mxu0
        %4238 = vdwg.mxu0
        %4239 = vrot.lane.b32.xlu0 %v1306, 104
        %v4240 = vpop.permute.xlu0 %4239
        %4241 = vrot.lane.b32.xlu0 %v1306, 72
        %v4242 = vpop.permute.xlu0 %4241
        %v4244 = vsel %vm936, %v4240, 0
        %v4247 = vsel %vm936, %v4242, 0
        %4249 = vmatprep.subr.bf16.mxu0 0
        %4250 = vmatpush1.bf16.xpose.msra.mxu0 %v4247
        %4251 = vmatprep.subr.bf16.mxu0 0
        %4252 = vmatpush1.bf16.xpose.msra.mxu0 0
        %4253 = vmatprep.subr.bf16.mxu0 0
        %4254 = vmatpush1.bf16.xpose.msra.mxu0 0
        %4255 = vmatprep.subr.bf16.mxu0 0
        %4256 = vmatpush1.bf16.xpose.msra.mxu0 0
        %4257 = vmatprep.subr.bf16.mxu0 0
        %4258 = vmatpush1.bf16.xpose.msra.mxu0 0
        %4259 = vmatprep.subr.bf16.mxu0 0
        %4260 = vmatpush1.bf16.xpose.msra.mxu0 0
        %4261 = vmatprep.subr.bf16.mxu0 0
        %4262 = vmatpush1.bf16.xpose.msra.mxu0 0
        %4263 = vmatprep.subr.bf16.mxu0 0
        %4264 = vmatpush1.bf16.xpose.msra.mxu0 0
        %4265 = vmatprep.subr.bf16.mxu0 0
        %4266 = vmatpush1.bf16.xpose.msra.mxu0 0
        %4267 = vmatprep.subr.bf16.mxu0 0
        %4268 = vmatpush1.bf16.xpose.msra.mxu0 0
        %4269 = vmatprep.subr.bf16.mxu0 0
        %4270 = vmatpush1.bf16.xpose.msra.mxu0 0
        %4271 = vmatprep.subr.bf16.mxu0 0
        %4272 = vmatpush1.bf16.xpose.msra.mxu0 0
        %4273 = vmatprep.subr.bf16.mxu0 0
        %4274 = vmatpush1.bf16.xpose.msra.mxu0 0
        %4275 = vmatprep.subr.bf16.mxu0 0
        %4276 = vmatpush1.bf16.xpose.msra.mxu0 0
        %4277 = vmatprep.subr.bf16.mxu0 0
        %4278 = vmatpush1.bf16.xpose.msra.mxu0 0
        %4279 = vmatprep.subr.bf16.mxu0 0
        %4280 = vmatpush1.bf16.xpose.msra.mxu0 0
        %4281 = vmatprep.mubr.bf16.mxu0 0
        %4282 = vmatmul.mubr.bf16.gmra.mrb[0].mxu0 %v4244
        %v4283 = vpop.f32.mrb[0].mxu0
        %v4284 = vadd.f32 0.0, %v4283
        %v4285 = vpop.f32.mrb[0].mxu0
        %v4286 = vpop.f32.mrb[0].mxu0
        %v4287 = vpop.f32.mrb[0].mxu0
        %4288 = vdwg.mxu0
        %4289 = vrot.lane.b32.xlu0 %v1368, 104
        %v4290 = vpop.permute.xlu0 %4289
        %4291 = vrot.lane.b32.xlu0 %v1368, 72
        %v4292 = vpop.permute.xlu0 %4291
        %v4294 = vsel %vm936, %v4290, 0
        %v4297 = vsel %vm936, %v4292, 0
        %4299 = vmatprep.subr.bf16.mxu0 0
        %4300 = vmatpush1.bf16.xpose.msra.mxu0 %v4297
        %4301 = vmatprep.subr.bf16.mxu0 0
        %4302 = vmatpush1.bf16.xpose.msra.mxu0 0
        %4303 = vmatprep.subr.bf16.mxu0 0
        %4304 = vmatpush1.bf16.xpose.msra.mxu0 0
        %4305 = vmatprep.subr.bf16.mxu0 0
        %4306 = vmatpush1.bf16.xpose.msra.mxu0 0
        %4307 = vmatprep.subr.bf16.mxu0 0
        %4308 = vmatpush1.bf16.xpose.msra.mxu0 0
        %4309 = vmatprep.subr.bf16.mxu0 0
        %4310 = vmatpush1.bf16.xpose.msra.mxu0 0
        %4311 = vmatprep.subr.bf16.mxu0 0
        %4312 = vmatpush1.bf16.xpose.msra.mxu0 0
        %4313 = vmatprep.subr.bf16.mxu0 0
        %4314 = vmatpush1.bf16.xpose.msra.mxu0 0
        %4315 = vmatprep.subr.bf16.mxu0 0
        %4316 = vmatpush1.bf16.xpose.msra.mxu0 0
        %4317 = vmatprep.subr.bf16.mxu0 0
        %4318 = vmatpush1.bf16.xpose.msra.mxu0 0
        %4319 = vmatprep.subr.bf16.mxu0 0
        %4320 = vmatpush1.bf16.xpose.msra.mxu0 0
        %4321 = vmatprep.subr.bf16.mxu0 0
        %4322 = vmatpush1.bf16.xpose.msra.mxu0 0
        %4323 = vmatprep.subr.bf16.mxu0 0
        %4324 = vmatpush1.bf16.xpose.msra.mxu0 0
        %4325 = vmatprep.subr.bf16.mxu0 0
        %4326 = vmatpush1.bf16.xpose.msra.mxu0 0
        %4327 = vmatprep.subr.bf16.mxu0 0
        %4328 = vmatpush1.bf16.xpose.msra.mxu0 0
        %4329 = vmatprep.subr.bf16.mxu0 0
        %4330 = vmatpush1.bf16.xpose.msra.mxu0 0
        %4331 = vmatprep.mubr.bf16.mxu0 0
        %4332 = vmatmul.mubr.bf16.gmra.mrb[0].mxu0 %v4294
        %v4333 = vpop.f32.mrb[0].mxu0
        %v4334 = vadd.f32 0.0, %v4333
        %v4335 = vpop.f32.mrb[0].mxu0
        %v4336 = vpop.f32.mrb[0].mxu0
        %v4337 = vpop.f32.mrb[0].mxu0
        %4338 = vdwg.mxu0
        %v4339 = vsel %vm1417, %v3984, -inf
        %4340 = vmax.xlane.f32.xlu0 %v4339
        %v4341 = vpop.xlane.xlu0 %4340
        %v4342 = vsel %vm1417, %v4034, -inf
        %4343 = vmax.xlane.f32.xlu0 %v4342
        %v4344 = vpop.xlane.xlu0 %4343
        %v4345 = vsel %vm1417, %v4084, -inf
        %4346 = vmax.xlane.f32.xlu0 %v4345
        %v4347 = vpop.xlane.xlu0 %4346
        %v4348 = vsel %vm1417, %v4134, -inf
        %4349 = vmax.xlane.f32.xlu0 %v4348
        %v4350 = vpop.xlane.xlu0 %4349
        %v4351 = vsel %vm1417, %v4184, -inf
        %4352 = vmax.xlane.f32.xlu0 %v4351
        %v4353 = vpop.xlane.xlu0 %4352
        %v4354 = vsel %vm1417, %v4234, -inf
        %4355 = vmax.xlane.f32.xlu0 %v4354
        %v4356 = vpop.xlane.xlu0 %4355
        %v4357 = vsel %vm1417, %v4284, -inf
        %4358 = vmax.xlane.f32.xlu0 %v4357
        %v4359 = vpop.xlane.xlu0 %4358
        %v4360 = vsel %vm1417, %v4334, -inf
        %4361 = vmax.xlane.f32.xlu0 %v4360
        %v4362 = vpop.xlane.xlu0 %4361
        %v4363 = vsub.f32 %v3984, %v4341
        %v4364 = vsub.f32 %v4034, %v4344
        %v4365 = vsub.f32 %v4084, %v4347
        %v4366 = vsub.f32 %v4134, %v4350
        %v4367 = vsub.f32 %v4184, %v4353
        %v4368 = vsub.f32 %v4234, %v4356
        %v4369 = vsub.f32 %v4284, %v4359
        %v4370 = vsub.f32 %v4334, %v4362
        %v4371 = vmul.f32 %v4363, 1.442695
        %v4372 = vpow.pop %v4371
        %v4373 = vmul.f32 %v4364, 1.442695
        %v4374 = vpow.pop %v4373
        %v4375 = vmul.f32 %v4365, 1.442695
        %v4376 = vpow.pop %v4375
        %v4377 = vmul.f32 %v4366, 1.442695
        %v4378 = vpow.pop %v4377
        %v4379 = vmul.f32 %v4367, 1.442695
        %v4380 = vpow.pop %v4379
        %v4381 = vmul.f32 %v4368, 1.442695
        %v4382 = vpow.pop %v4381
        %v4383 = vmul.f32 %v4369, 1.442695
        %v4384 = vpow.pop %v4383
        %v4385 = vmul.f32 %v4370, 1.442695
        %v4386 = vpow.pop %v4385
        %v4387 = vsel %vm1417, %v4372, 0.0
        %4388 = vadd.xlane.f32.xlu0 %v4387
        %v4389 = vpop.xlane.xlu0 %4388
        %v4390 = vsel %vm1417, %v4374, 0.0
        %4391 = vadd.xlane.f32.xlu0 %v4390
        %v4392 = vpop.xlane.xlu0 %4391
        %v4393 = vsel %vm1417, %v4376, 0.0
        %4394 = vadd.xlane.f32.xlu0 %v4393
        %v4395 = vpop.xlane.xlu0 %4394
        %v4396 = vsel %vm1417, %v4378, 0.0
        %4397 = vadd.xlane.f32.xlu0 %v4396
        %v4398 = vpop.xlane.xlu0 %4397
        %v4399 = vsel %vm1417, %v4380, 0.0
        %4400 = vadd.xlane.f32.xlu0 %v4399
        %v4401 = vpop.xlane.xlu0 %4400
        %v4402 = vsel %vm1417, %v4382, 0.0
        %4403 = vadd.xlane.f32.xlu0 %v4402
        %v4404 = vpop.xlane.xlu0 %4403
        %v4405 = vsel %vm1417, %v4384, 0.0
        %4406 = vadd.xlane.f32.xlu0 %v4405
        %v4407 = vpop.xlane.xlu0 %4406
        %v4408 = vsel %vm1417, %v4386, 0.0
        %4409 = vadd.xlane.f32.xlu0 %v4408
        %v4410 = vpop.xlane.xlu0 %4409
        %v4411 = vrcp.pop %v4389
        %v4412 = vrcp.pop %v4392
        %v4413 = vrcp.pop %v4395
        %v4414 = vrcp.pop %v4398
        %v4415 = vrcp.pop %v4401
        %v4416 = vrcp.pop %v4404
        %v4417 = vrcp.pop %v4407
        %v4418 = vrcp.pop %v4410
        %v4419 = vmul.f32 %v4372, %v4411
        %v4420 = vmul.f32 %v4374, %v4412
        %v4421 = vmul.f32 %v4376, %v4413
        %v4422 = vmul.f32 %v4378, %v4414
        %v4423 = vmul.f32 %v4380, %v4415
        %v4424 = vmul.f32 %v4382, %v4416
        %v4425 = vmul.f32 %v4384, %v4417
        %v4426 = vmul.f32 %v4386, %v4418
        %v4427 = vpack.c.bf16 %v4419, %v4419
        %v4428 = vpack.c.bf16 %v4420, %v4420
        %v4429 = vpack.c.bf16 %v4421, %v4421
        %v4430 = vpack.c.bf16 %v4422, %v4422
        %v4431 = vpack.c.bf16 %v4423, %v4423
        %v4432 = vpack.c.bf16 %v4424, %v4424
        %v4433 = vpack.c.bf16 %v4425, %v4425
        %v4434 = vpack.c.bf16 %v4426, %v4426
        %4435 = vrot.lane.b32.xlu0 %v933, 40
        %v4436 = vpop.permute.xlu0 %4435
        %v4438 = vsel %vm1516, %v4427, 0
        %v4441 = vsel %vm1520, %v4436, 0
        %4443 = vmatprep.subr.bf16.mxu0 0
        %4444 = vmatpush1.bf16.msra.mxu0 %v4441
        %4445 = vmatprep.subr.bf16.mxu0 0
        %4446 = vmatpush1.bf16.msra.mxu0 0
        %4447 = vmatprep.subr.bf16.mxu0 0
        %4448 = vmatpush1.bf16.msra.mxu0 0
        %4449 = vmatprep.subr.bf16.mxu0 0
        %4450 = vmatpush1.bf16.msra.mxu0 0
        %4451 = vmatprep.subr.bf16.mxu0 0
        %4452 = vmatpush1.bf16.msra.mxu0 0
        %4453 = vmatprep.subr.bf16.mxu0 0
        %4454 = vmatpush1.bf16.msra.mxu0 0
        %4455 = vmatprep.subr.bf16.mxu0 0
        %4456 = vmatpush1.bf16.msra.mxu0 0
        %4457 = vmatprep.subr.bf16.mxu0 0
        %4458 = vmatpush1.bf16.msra.mxu0 0
        %4459 = vmatprep.subr.bf16.mxu0 0
        %4460 = vmatpush1.bf16.msra.mxu0 0
        %4461 = vmatprep.subr.bf16.mxu0 0
        %4462 = vmatpush1.bf16.msra.mxu0 0
        %4463 = vmatprep.subr.bf16.mxu0 0
        %4464 = vmatpush1.bf16.msra.mxu0 0
        %4465 = vmatprep.subr.bf16.mxu0 0
        %4466 = vmatpush1.bf16.msra.mxu0 0
        %4467 = vmatprep.subr.bf16.mxu0 0
        %4468 = vmatpush1.bf16.msra.mxu0 0
        %4469 = vmatprep.subr.bf16.mxu0 0
        %4470 = vmatpush1.bf16.msra.mxu0 0
        %4471 = vmatprep.subr.bf16.mxu0 0
        %4472 = vmatpush1.bf16.msra.mxu0 0
        %4473 = vmatprep.subr.bf16.mxu0 0
        %4474 = vmatpush1.bf16.msra.mxu0 0
        %4475 = vmatprep.mubr.bf16.mxu0 0
        %4476 = vmatmul.mubr.bf16.gmra.mrb[0].mxu0 %v4438
        %v4477 = vpop.f32.mrb[0].mxu0
        %v4478 = vadd.f32 0.0, %v4477
        %v4479 = vpop.f32.mrb[0].mxu0
        %v4480 = vpop.f32.mrb[0].mxu0
        %v4481 = vpop.f32.mrb[0].mxu0
        %4482 = vdwg.mxu0
        %4483 = vrot.lane.b32.xlu0 %v996, 40
        %v4484 = vpop.permute.xlu0 %4483
        %v4486 = vsel %vm1516, %v4428, 0
        %v4489 = vsel %vm1520, %v4484, 0
        %4491 = vmatprep.subr.bf16.mxu0 0
        %4492 = vmatpush1.bf16.msra.mxu0 %v4489
        %4493 = vmatprep.subr.bf16.mxu0 0
        %4494 = vmatpush1.bf16.msra.mxu0 0
        %4495 = vmatprep.subr.bf16.mxu0 0
        %4496 = vmatpush1.bf16.msra.mxu0 0
        %4497 = vmatprep.subr.bf16.mxu0 0
        %4498 = vmatpush1.bf16.msra.mxu0 0
        %4499 = vmatprep.subr.bf16.mxu0 0
        %4500 = vmatpush1.bf16.msra.mxu0 0
        %4501 = vmatprep.subr.bf16.mxu0 0
        %4502 = vmatpush1.bf16.msra.mxu0 0
        %4503 = vmatprep.subr.bf16.mxu0 0
        %4504 = vmatpush1.bf16.msra.mxu0 0
        %4505 = vmatprep.subr.bf16.mxu0 0
        %4506 = vmatpush1.bf16.msra.mxu0 0
        %4507 = vmatprep.subr.bf16.mxu0 0
        %4508 = vmatpush1.bf16.msra.mxu0 0
        %4509 = vmatprep.subr.bf16.mxu0 0
        %4510 = vmatpush1.bf16.msra.mxu0 0
        %4511 = vmatprep.subr.bf16.mxu0 0
        %4512 = vmatpush1.bf16.msra.mxu0 0
        %4513 = vmatprep.subr.bf16.mxu0 0
        %4514 = vmatpush1.bf16.msra.mxu0 0
        %4515 = vmatprep.subr.bf16.mxu0 0
        %4516 = vmatpush1.bf16.msra.mxu0 0
        %4517 = vmatprep.subr.bf16.mxu0 0
        %4518 = vmatpush1.bf16.msra.mxu0 0
        %4519 = vmatprep.subr.bf16.mxu0 0
        %4520 = vmatpush1.bf16.msra.mxu0 0
        %4521 = vmatprep.subr.bf16.mxu0 0
        %4522 = vmatpush1.bf16.msra.mxu0 0
        %4523 = vmatprep.mubr.bf16.mxu0 0
        %4524 = vmatmul.mubr.bf16.gmra.mrb[0].mxu0 %v4486
        %v4525 = vpop.f32.mrb[0].mxu0
        %v4526 = vadd.f32 0.0, %v4525
        %v4527 = vpop.f32.mrb[0].mxu0
        %v4528 = vpop.f32.mrb[0].mxu0
        %v4529 = vpop.f32.mrb[0].mxu0
        %4530 = vdwg.mxu0
        %4531 = vrot.lane.b32.xlu0 %v1058, 40
        %v4532 = vpop.permute.xlu0 %4531
        %v4534 = vsel %vm1516, %v4429, 0
        %v4537 = vsel %vm1520, %v4532, 0
        %4539 = vmatprep.subr.bf16.mxu0 0
        %4540 = vmatpush1.bf16.msra.mxu0 %v4537
        %4541 = vmatprep.subr.bf16.mxu0 0
        %4542 = vmatpush1.bf16.msra.mxu0 0
        %4543 = vmatprep.subr.bf16.mxu0 0
        %4544 = vmatpush1.bf16.msra.mxu0 0
        %4545 = vmatprep.subr.bf16.mxu0 0
        %4546 = vmatpush1.bf16.msra.mxu0 0
        %4547 = vmatprep.subr.bf16.mxu0 0
        %4548 = vmatpush1.bf16.msra.mxu0 0
        %4549 = vmatprep.subr.bf16.mxu0 0
        %4550 = vmatpush1.bf16.msra.mxu0 0
        %4551 = vmatprep.subr.bf16.mxu0 0
        %4552 = vmatpush1.bf16.msra.mxu0 0
        %4553 = vmatprep.subr.bf16.mxu0 0
        %4554 = vmatpush1.bf16.msra.mxu0 0
        %4555 = vmatprep.subr.bf16.mxu0 0
        %4556 = vmatpush1.bf16.msra.mxu0 0
        %4557 = vmatprep.subr.bf16.mxu0 0
        %4558 = vmatpush1.bf16.msra.mxu0 0
        %4559 = vmatprep.subr.bf16.mxu0 0
        %4560 = vmatpush1.bf16.msra.mxu0 0
        %4561 = vmatprep.subr.bf16.mxu0 0
        %4562 = vmatpush1.bf16.msra.mxu0 0
        %4563 = vmatprep.subr.bf16.mxu0 0
        %4564 = vmatpush1.bf16.msra.mxu0 0
        %4565 = vmatprep.subr.bf16.mxu0 0
        %4566 = vmatpush1.bf16.msra.mxu0 0
        %4567 = vmatprep.subr.bf16.mxu0 0
        %4568 = vmatpush1.bf16.msra.mxu0 0
        %4569 = vmatprep.subr.bf16.mxu0 0
        %4570 = vmatpush1.bf16.msra.mxu0 0
        %4571 = vmatprep.mubr.bf16.mxu0 0
        %4572 = vmatmul.mubr.bf16.gmra.mrb[0].mxu0 %v4534
        %v4573 = vpop.f32.mrb[0].mxu0
        %v4574 = vadd.f32 0.0, %v4573
        %v4575 = vpop.f32.mrb[0].mxu0
        %v4576 = vpop.f32.mrb[0].mxu0
        %v4577 = vpop.f32.mrb[0].mxu0
        %4578 = vdwg.mxu0
        %4579 = vrot.lane.b32.xlu0 %v1120, 40
        %v4580 = vpop.permute.xlu0 %4579
        %v4582 = vsel %vm1516, %v4430, 0
        %v4585 = vsel %vm1520, %v4580, 0
        %4587 = vmatprep.subr.bf16.mxu0 0
        %4588 = vmatpush1.bf16.msra.mxu0 %v4585
        %4589 = vmatprep.subr.bf16.mxu0 0
        %4590 = vmatpush1.bf16.msra.mxu0 0
        %4591 = vmatprep.subr.bf16.mxu0 0
        %4592 = vmatpush1.bf16.msra.mxu0 0
        %4593 = vmatprep.subr.bf16.mxu0 0
        %4594 = vmatpush1.bf16.msra.mxu0 0
        %4595 = vmatprep.subr.bf16.mxu0 0
        %4596 = vmatpush1.bf16.msra.mxu0 0
        %4597 = vmatprep.subr.bf16.mxu0 0
        %4598 = vmatpush1.bf16.msra.mxu0 0
        %4599 = vmatprep.subr.bf16.mxu0 0
        %4600 = vmatpush1.bf16.msra.mxu0 0
        %4601 = vmatprep.subr.bf16.mxu0 0
        %4602 = vmatpush1.bf16.msra.mxu0 0
        %4603 = vmatprep.subr.bf16.mxu0 0
        %4604 = vmatpush1.bf16.msra.mxu0 0
        %4605 = vmatprep.subr.bf16.mxu0 0
        %4606 = vmatpush1.bf16.msra.mxu0 0
        %4607 = vmatprep.subr.bf16.mxu0 0
        %4608 = vmatpush1.bf16.msra.mxu0 0
        %4609 = vmatprep.subr.bf16.mxu0 0
        %4610 = vmatpush1.bf16.msra.mxu0 0
        %4611 = vmatprep.subr.bf16.mxu0 0
        %4612 = vmatpush1.bf16.msra.mxu0 0
        %4613 = vmatprep.subr.bf16.mxu0 0
        %4614 = vmatpush1.bf16.msra.mxu0 0
        %4615 = vmatprep.subr.bf16.mxu0 0
        %4616 = vmatpush1.bf16.msra.mxu0 0
        %4617 = vmatprep.subr.bf16.mxu0 0
        %4618 = vmatpush1.bf16.msra.mxu0 0
        %4619 = vmatprep.mubr.bf16.mxu0 0
        %4620 = vmatmul.mubr.bf16.gmra.mrb[0].mxu0 %v4582
        %v4621 = vpop.f32.mrb[0].mxu0
        %v4622 = vadd.f32 0.0, %v4621
        %v4623 = vpop.f32.mrb[0].mxu0
        %v4624 = vpop.f32.mrb[0].mxu0
        %v4625 = vpop.f32.mrb[0].mxu0
        %4626 = vdwg.mxu0
        %4627 = vrot.lane.b32.xlu0 %v1182, 40
        %v4628 = vpop.permute.xlu0 %4627
        %v4630 = vsel %vm1516, %v4431, 0
        %v4633 = vsel %vm1520, %v4628, 0
        %4635 = vmatprep.subr.bf16.mxu0 0
        %4636 = vmatpush1.bf16.msra.mxu0 %v4633
        %4637 = vmatprep.subr.bf16.mxu0 0
        %4638 = vmatpush1.bf16.msra.mxu0 0
        %4639 = vmatprep.subr.bf16.mxu0 0
        %4640 = vmatpush1.bf16.msra.mxu0 0
        %4641 = vmatprep.subr.bf16.mxu0 0
        %4642 = vmatpush1.bf16.msra.mxu0 0
        %4643 = vmatprep.subr.bf16.mxu0 0
        %4644 = vmatpush1.bf16.msra.mxu0 0
        %4645 = vmatprep.subr.bf16.mxu0 0
        %4646 = vmatpush1.bf16.msra.mxu0 0
        %4647 = vmatprep.subr.bf16.mxu0 0
        %4648 = vmatpush1.bf16.msra.mxu0 0
        %4649 = vmatprep.subr.bf16.mxu0 0
        %4650 = vmatpush1.bf16.msra.mxu0 0
        %4651 = vmatprep.subr.bf16.mxu0 0
        %4652 = vmatpush1.bf16.msra.mxu0 0
        %4653 = vmatprep.subr.bf16.mxu0 0
        %4654 = vmatpush1.bf16.msra.mxu0 0
        %4655 = vmatprep.subr.bf16.mxu0 0
        %4656 = vmatpush1.bf16.msra.mxu0 0
        %4657 = vmatprep.subr.bf16.mxu0 0
        %4658 = vmatpush1.bf16.msra.mxu0 0
        %4659 = vmatprep.subr.bf16.mxu0 0
        %4660 = vmatpush1.bf16.msra.mxu0 0
        %4661 = vmatprep.subr.bf16.mxu0 0
        %4662 = vmatpush1.bf16.msra.mxu0 0
        %4663 = vmatprep.subr.bf16.mxu0 0
        %4664 = vmatpush1.bf16.msra.mxu0 0
        %4665 = vmatprep.subr.bf16.mxu0 0
        %4666 = vmatpush1.bf16.msra.mxu0 0
        %4667 = vmatprep.mubr.bf16.mxu0 0
        %4668 = vmatmul.mubr.bf16.gmra.mrb[0].mxu0 %v4630
        %v4669 = vpop.f32.mrb[0].mxu0
        %v4670 = vadd.f32 0.0, %v4669
        %v4671 = vpop.f32.mrb[0].mxu0
        %v4672 = vpop.f32.mrb[0].mxu0
        %v4673 = vpop.f32.mrb[0].mxu0
        %4674 = vdwg.mxu0
        %4675 = vrot.lane.b32.xlu0 %v1244, 40
        %v4676 = vpop.permute.xlu0 %4675
        %v4678 = vsel %vm1516, %v4432, 0
        %v4681 = vsel %vm1520, %v4676, 0
        %4683 = vmatprep.subr.bf16.mxu0 0
        %4684 = vmatpush1.bf16.msra.mxu0 %v4681
        %4685 = vmatprep.subr.bf16.mxu0 0
        %4686 = vmatpush1.bf16.msra.mxu0 0
        %4687 = vmatprep.subr.bf16.mxu0 0
        %4688 = vmatpush1.bf16.msra.mxu0 0
        %4689 = vmatprep.subr.bf16.mxu0 0
        %4690 = vmatpush1.bf16.msra.mxu0 0
        %4691 = vmatprep.subr.bf16.mxu0 0
        %4692 = vmatpush1.bf16.msra.mxu0 0
        %4693 = vmatprep.subr.bf16.mxu0 0
        %4694 = vmatpush1.bf16.msra.mxu0 0
        %4695 = vmatprep.subr.bf16.mxu0 0
        %4696 = vmatpush1.bf16.msra.mxu0 0
        %4697 = vmatprep.subr.bf16.mxu0 0
        %4698 = vmatpush1.bf16.msra.mxu0 0
        %4699 = vmatprep.subr.bf16.mxu0 0
        %4700 = vmatpush1.bf16.msra.mxu0 0
        %4701 = vmatprep.subr.bf16.mxu0 0
        %4702 = vmatpush1.bf16.msra.mxu0 0
        %4703 = vmatprep.subr.bf16.mxu0 0
        %4704 = vmatpush1.bf16.msra.mxu0 0
        %4705 = vmatprep.subr.bf16.mxu0 0
        %4706 = vmatpush1.bf16.msra.mxu0 0
        %4707 = vmatprep.subr.bf16.mxu0 0
        %4708 = vmatpush1.bf16.msra.mxu0 0
        %4709 = vmatprep.subr.bf16.mxu0 0
        %4710 = vmatpush1.bf16.msra.mxu0 0
        %4711 = vmatprep.subr.bf16.mxu0 0
        %4712 = vmatpush1.bf16.msra.mxu0 0
        %4713 = vmatprep.subr.bf16.mxu0 0
        %4714 = vmatpush1.bf16.msra.mxu0 0
        %4715 = vmatprep.mubr.bf16.mxu0 0
        %4716 = vmatmul.mubr.bf16.gmra.mrb[0].mxu0 %v4678
        %v4717 = vpop.f32.mrb[0].mxu0
        %v4718 = vadd.f32 0.0, %v4717
        %v4719 = vpop.f32.mrb[0].mxu0
        %v4720 = vpop.f32.mrb[0].mxu0
        %v4721 = vpop.f32.mrb[0].mxu0
        %4722 = vdwg.mxu0
        %4723 = vrot.lane.b32.xlu0 %v1306, 40
        %v4724 = vpop.permute.xlu0 %4723
        %v4726 = vsel %vm1516, %v4433, 0
        %v4729 = vsel %vm1520, %v4724, 0
        %4731 = vmatprep.subr.bf16.mxu0 0
        %4732 = vmatpush1.bf16.msra.mxu0 %v4729
        %4733 = vmatprep.subr.bf16.mxu0 0
        %4734 = vmatpush1.bf16.msra.mxu0 0
        %4735 = vmatprep.subr.bf16.mxu0 0
        %4736 = vmatpush1.bf16.msra.mxu0 0
        %4737 = vmatprep.subr.bf16.mxu0 0
        %4738 = vmatpush1.bf16.msra.mxu0 0
        %4739 = vmatprep.subr.bf16.mxu0 0
        %4740 = vmatpush1.bf16.msra.mxu0 0
        %4741 = vmatprep.subr.bf16.mxu0 0
        %4742 = vmatpush1.bf16.msra.mxu0 0
        %4743 = vmatprep.subr.bf16.mxu0 0
        %4744 = vmatpush1.bf16.msra.mxu0 0
        %4745 = vmatprep.subr.bf16.mxu0 0
        %4746 = vmatpush1.bf16.msra.mxu0 0
        %4747 = vmatprep.subr.bf16.mxu0 0
        %4748 = vmatpush1.bf16.msra.mxu0 0
        %4749 = vmatprep.subr.bf16.mxu0 0
        %4750 = vmatpush1.bf16.msra.mxu0 0
        %4751 = vmatprep.subr.bf16.mxu0 0
        %4752 = vmatpush1.bf16.msra.mxu0 0
        %4753 = vmatprep.subr.bf16.mxu0 0
        %4754 = vmatpush1.bf16.msra.mxu0 0
        %4755 = vmatprep.subr.bf16.mxu0 0
        %4756 = vmatpush1.bf16.msra.mxu0 0
        %4757 = vmatprep.subr.bf16.mxu0 0
        %4758 = vmatpush1.bf16.msra.mxu0 0
        %4759 = vmatprep.subr.bf16.mxu0 0
        %4760 = vmatpush1.bf16.msra.mxu0 0
        %4761 = vmatprep.subr.bf16.mxu0 0
        %4762 = vmatpush1.bf16.msra.mxu0 0
        %4763 = vmatprep.mubr.bf16.mxu0 0
        %4764 = vmatmul.mubr.bf16.gmra.mrb[0].mxu0 %v4726
        %v4765 = vpop.f32.mrb[0].mxu0
        %v4766 = vadd.f32 0.0, %v4765
        %v4767 = vpop.f32.mrb[0].mxu0
        %v4768 = vpop.f32.mrb[0].mxu0
        %v4769 = vpop.f32.mrb[0].mxu0
        %4770 = vdwg.mxu0
        %4771 = vrot.lane.b32.xlu0 %v1368, 40
        %v4772 = vpop.permute.xlu0 %4771
        %v4774 = vsel %vm1516, %v4434, 0
        %v4777 = vsel %vm1520, %v4772, 0
        %4779 = vmatprep.subr.bf16.mxu0 0
        %4780 = vmatpush1.bf16.msra.mxu0 %v4777
        %4781 = vmatprep.subr.bf16.mxu0 0
        %4782 = vmatpush1.bf16.msra.mxu0 0
        %4783 = vmatprep.subr.bf16.mxu0 0
        %4784 = vmatpush1.bf16.msra.mxu0 0
        %4785 = vmatprep.subr.bf16.mxu0 0
        %4786 = vmatpush1.bf16.msra.mxu0 0
        %4787 = vmatprep.subr.bf16.mxu0 0
        %4788 = vmatpush1.bf16.msra.mxu0 0
        %4789 = vmatprep.subr.bf16.mxu0 0
        %4790 = vmatpush1.bf16.msra.mxu0 0
        %4791 = vmatprep.subr.bf16.mxu0 0
        %4792 = vmatpush1.bf16.msra.mxu0 0
        %4793 = vmatprep.subr.bf16.mxu0 0
        %4794 = vmatpush1.bf16.msra.mxu0 0
        %4795 = vmatprep.subr.bf16.mxu0 0
        %4796 = vmatpush1.bf16.msra.mxu0 0
        %4797 = vmatprep.subr.bf16.mxu0 0
        %4798 = vmatpush1.bf16.msra.mxu0 0
        %4799 = vmatprep.subr.bf16.mxu0 0
        %4800 = vmatpush1.bf16.msra.mxu0 0
        %4801 = vmatprep.subr.bf16.mxu0 0
        %4802 = vmatpush1.bf16.msra.mxu0 0
        %4803 = vmatprep.subr.bf16.mxu0 0
        %4804 = vmatpush1.bf16.msra.mxu0 0
        %4805 = vmatprep.subr.bf16.mxu0 0
        %4806 = vmatpush1.bf16.msra.mxu0 0
        %4807 = vmatprep.subr.bf16.mxu0 0
        %4808 = vmatpush1.bf16.msra.mxu0 0
        %4809 = vmatprep.subr.bf16.mxu0 0
        %4810 = vmatpush1.bf16.msra.mxu0 0
        %4811 = vmatprep.mubr.bf16.mxu0 0
        %4812 = vmatmul.mubr.bf16.gmra.mrb[0].mxu0 %v4774
        %v4813 = vpop.f32.mrb[0].mxu0
        %v4814 = vadd.f32 0.0, %v4813
        %v4815 = vpop.f32.mrb[0].mxu0
        %v4816 = vpop.f32.mrb[0].mxu0
        %v4817 = vpop.f32.mrb[0].mxu0
        %4818 = vdwg.mxu0
        %v4827 = vcombine.low %v4478, %v4526
        %v4828 = vcombine.low %v4574, %v4622
        %v4830 = vunpack.c.l.s4 1983009808
        %v4831 = vunpack.c.0.s8 %v4830
        %v4832 = vlaneseq
        %v4833 = vshrl.u32 %v4832, 7
        %v4834 = vsub.s32 %v4831, %v4833
        %v4835 = vrot.slane %v4827, %v4834
        %v4837 = vunpack.c.l.s4 1983009808
        %v4838 = vunpack.c.0.s8 %v4837
        %v4839 = vlaneseq
        %v4840 = vshrl.u32 %v4839, 7
        %v4841 = vsub.s32 %v4838, %v4840
        %v4842 = vrot.slane %v4828, %v4841
        %v4843 = vcombine.low %v4835, %v4842
        %v4844 = vcombine.low %v4670, %v4718
        %v4845 = vcombine.low %v4766, %v4814
        %v4847 = vunpack.c.l.s4 1983009808
        %v4848 = vunpack.c.0.s8 %v4847
        %v4849 = vlaneseq
        %v4850 = vshrl.u32 %v4849, 7
        %v4851 = vsub.s32 %v4848, %v4850
        %v4852 = vrot.slane %v4844, %v4851
        %v4854 = vunpack.c.l.s4 1983009808
        %v4855 = vunpack.c.0.s8 %v4854
        %v4856 = vlaneseq
        %v4857 = vshrl.u32 %v4856, 7
        %v4858 = vsub.s32 %v4855, %v4857
        %v4859 = vrot.slane %v4845, %v4858
        %v4860 = vcombine.low %v4852, %v4859
        %v4863 = vpack.c.bf16 %v4860, %v4843
        %v4865 = vsel %vm936, %v4863, 0
        %v4868 = vsel %vm2873, %v919, 0
        %4870 = vmatprep.subr.bf16.mxu0 0
        %4871 = vmatpush1.bf16.msra.mxu0 %v4868
        %4872 = vmatprep.subr.bf16.mxu0 0
        %4873 = vmatpush1.bf16.msra.mxu0 0
        %4874 = vmatprep.subr.bf16.mxu0 0
        %4875 = vmatpush1.bf16.msra.mxu0 0
        %4876 = vmatprep.subr.bf16.mxu0 0
        %4877 = vmatpush1.bf16.msra.mxu0 0
        %4878 = vmatprep.subr.bf16.mxu0 0
        %4879 = vmatpush1.bf16.msra.mxu0 0
        %4880 = vmatprep.subr.bf16.mxu0 0
        %4881 = vmatpush1.bf16.msra.mxu0 0
        %4882 = vmatprep.subr.bf16.mxu0 0
        %4883 = vmatpush1.bf16.msra.mxu0 0
        %4884 = vmatprep.subr.bf16.mxu0 0
        %4885 = vmatpush1.bf16.msra.mxu0 0
        %4886 = vmatprep.subr.bf16.mxu0 0
        %4887 = vmatpush1.bf16.msra.mxu0 0
        %4888 = vmatprep.subr.bf16.mxu0 0
        %4889 = vmatpush1.bf16.msra.mxu0 0
        %4890 = vmatprep.subr.bf16.mxu0 0
        %4891 = vmatpush1.bf16.msra.mxu0 0
        %4892 = vmatprep.subr.bf16.mxu0 0
        %4893 = vmatpush1.bf16.msra.mxu0 0
        %4894 = vmatprep.subr.bf16.mxu0 0
        %4895 = vmatpush1.bf16.msra.mxu0 0
        %4896 = vmatprep.subr.bf16.mxu0 0
        %4897 = vmatpush1.bf16.msra.mxu0 0
        %4898 = vmatprep.subr.bf16.mxu0 0
        %4899 = vmatpush1.bf16.msra.mxu0 0
        %4900 = vmatprep.subr.bf16.mxu0 0
        %4901 = vmatpush1.bf16.msra.mxu0 0
        %4902 = vmatprep.mubr.bf16.mxu0 0
        %4903 = vmatmul.mubr.bf16.gmra.mrb[0].mxu0 %v4865
        %v4904 = vpop.f32.mrb[0].mxu0
        %v4905 = vadd.f32 0.0, %v4904
        %v4906 = vpop.f32.mrb[0].mxu0
        %v4907 = vpop.f32.mrb[0].mxu0
        %v4908 = vadd.f32 0.0, %v4907
        %v4909 = vpop.f32.mrb[0].mxu0
        %4910 = vdwg.mxu0
        %v4911 = vadd.f32 %v3937, %v4905
        %v4912 = vadd.f32 %v3938, %v4908
        %v4913 = vlaneseq
        %v4914 = vshrl.u32 %v4913, 7
        %v4915 = vsub.s32 1, %v4914
        %v4916 = vrot.slane %v798, %v4915
        %v4917 = vadd.f32 %v4911, %v4916
        %v4918 = vadd.f32 %v4912, %v4916
        %v4919 = vadd.f32 %v796, %v4917
        %v4920 = vadd.f32 %v797, %v4918
        %v4921 = vsel %vm820, %v4919, 0.0
        %4922 = vadd.xlane.f32.xlu0 %v4921
        %v4923 = vpop.xlane.xlu0 %4922
        %v4924 = vsel %vm820, %v4920, 0.0
        %4925 = vadd.xlane.f32.xlu0 %v4924
        %v4926 = vpop.xlane.xlu0 %4925
        %v4927 = vrcp.pop 32.0
        %v4928 = vmul.f32 %v4923, %v4927
        %v4929 = vmul.f32 %v4926, %v4927
        %v4930 = vsub.f32 %v4919, %v4928
        %v4931 = vsub.f32 %v4920, %v4929
        %v4932 = vmul.f32 %v4930, %v4930
        %v4933 = vmul.f32 %v4931, %v4931
        %v4934 = vsel %vm820, %v4932, 0.0
        %4935 = vadd.xlane.f32.xlu0 %v4934
        %v4936 = vpop.xlane.xlu0 %4935
        %v4937 = vsel %vm820, %v4933, 0.0
        %4938 = vadd.xlane.f32.xlu0 %v4937
        %v4939 = vpop.xlane.xlu0 %4938
        %v4940 = vmul.f32 %v4936, %v4927
        %v4941 = vmul.f32 %v4939, %v4927
        %v4942 = vadd.f32 %v4940, 1e-05
        %v4943 = vadd.f32 %v4941, 1e-05
        %v4944 = vrsqrt.pop %v4942
        %v4945 = vrsqrt.pop %v4943
        %v4946 = vmul.f32 %v4930, %v4944
        %v4947 = vmul.f32 %v4931, %v4945
        %v4948 = vlaneseq
        %v4949 = vshrl.u32 %v4948, 7
        %v4950 = vsub.s32 4, %v4949
        %v4951 = vrot.slane %v798, %v4950
        %v4952 = vmul.f32 %v4946, %v4951
        %v4953 = vmul.f32 %v4947, %v4951
        %v4954 = vlaneseq
        %v4955 = vshrl.u32 %v4954, 7
        %v4956 = vsub.s32 5, %v4955
        %v4957 = vrot.slane %v798, %v4956
        %v4958 = vadd.f32 %v4952, %v4957
        %v4959 = vadd.f32 %v4953, %v4957
        %v4960 = vpack.c.bf16 %v4959, %v4958
        %v4961 = vld [vmem:[%s548] sm:$0xf]
        %v4962 = vld [vmem:[%s548 + $0x4] sm:$0xf]
        %v4963 = vld [vmem:[%s548 + $0x8] sm:$0xf]
        %v4964 = vld [vmem:[%s548 + $0xc] sm:$0xf]
        %v4965 = vlaneseq
        %v4966 = vshrl.u32 %v4965, 7
        %v4967 = vsub.s32 2, %v4966
        %v4968 = vrot.slane %v798, %v4967
        %v4973 = vunpack.c.l.b16 %v4961
        %v4974 = vunpack.c.l.b16 %v4962
        %v4975 = vunpack.c.l.b16 %v4963
        %v4976 = vunpack.c.l.b16 %v4964
        %v4977 = vpack.c.b16 %v4974, %v4973
        %v4978 = vpack.c.b16 %v4976, %v4975
        %v4982 = vsel %vm820, %v4960, 0
        %4984 = vmatprep.subr.bf16.mxu0 0
        %4985 = vmatpush1.bf16.msra.mxu0 %v4977
        %4986 = vmatprep.subr.bf16.mxu0 0
        %4987 = vmatpush1.bf16.msra.mxu0 %v4978
        %4988 = vmatprep.subr.bf16.mxu0 0
        %4989 = vmatpush1.bf16.msra.mxu0 0
        %4990 = vmatprep.subr.bf16.mxu0 0
        %4991 = vmatpush1.bf16.msra.mxu0 0
        %4992 = vmatprep.subr.bf16.mxu0 0
        %4993 = vmatpush1.bf16.msra.mxu0 0
        %4994 = vmatprep.subr.bf16.mxu0 0
        %4995 = vmatpush1.bf16.msra.mxu0 0
        %4996 = vmatprep.subr.bf16.mxu0 0
        %4997 = vmatpush1.bf16.msra.mxu0 0
        %4998 = vmatprep.subr.bf16.mxu0 0
        %4999 = vmatpush1.bf16.msra.mxu0 0
        %5000 = vmatprep.subr.bf16.mxu0 0
        %5001 = vmatpush1.bf16.msra.mxu0 0
        %5002 = vmatprep.subr.bf16.mxu0 0
        %5003 = vmatpush1.bf16.msra.mxu0 0
        %5004 = vmatprep.subr.bf16.mxu0 0
        %5005 = vmatpush1.bf16.msra.mxu0 0
        %5006 = vmatprep.subr.bf16.mxu0 0
        %5007 = vmatpush1.bf16.msra.mxu0 0
        %5008 = vmatprep.subr.bf16.mxu0 0
        %5009 = vmatpush1.bf16.msra.mxu0 0
        %5010 = vmatprep.subr.bf16.mxu0 0
        %5011 = vmatpush1.bf16.msra.mxu0 0
        %5012 = vmatprep.subr.bf16.mxu0 0
        %5013 = vmatpush1.bf16.msra.mxu0 0
        %5014 = vmatprep.subr.bf16.mxu0 0
        %5015 = vmatpush1.bf16.msra.mxu0 0
        %5016 = vmatprep.mubr.bf16.mxu0 0
        %5017 = vmatmul.mubr.bf16.gmra.mrb[0].mxu0 %v4982
        %v5018 = vpop.f32.mrb[0].mxu0
        %v5019 = vadd.f32 %v4968, %v5018
        %v5020 = vpop.f32.mrb[0].mxu0
        %v5021 = vpop.f32.mrb[0].mxu0
        %v5022 = vadd.f32 %v4968, %v5021
        %v5023 = vpop.f32.mrb[0].mxu0
        %5024 = vdwg.mxu0
        %v5025 = vmax.f32 %v5019, 0.0
        %v5026 = vmax.f32 %v5022, 0.0
        %v5027 = vpack.c.bf16 %v5026, %v5025
        %v5028 = vld [vmem:[%s553] sm:$0xf]
        %v5029 = vld [vmem:[%s553 + $0x4] sm:$0xf]
        %v5030 = vld [vmem:[%s553 + $0x8] sm:$0xf]
        %v5031 = vld [vmem:[%s553 + $0xc] sm:$0xf]
        %v5032 = vld [vmem:[%s553 + $0x10] sm:$0xf]
        %v5033 = vld [vmem:[%s553 + $0x14] sm:$0xf]
        %v5034 = vld [vmem:[%s553 + $0x18] sm:$0xf]
        %v5035 = vld [vmem:[%s553 + $0x1c] sm:$0xf]
        %v5036 = vlaneseq
        %v5037 = vshrl.u32 %v5036, 7
        %v5038 = vsub.s32 3, %v5037
        %v5039 = vrot.slane %v798, %v5038
        %v5048 = vunpack.c.l.b16 %v5028
        %v5049 = vunpack.c.l.b16 %v5029
        %v5050 = vunpack.c.l.b16 %v5030
        %v5051 = vunpack.c.l.b16 %v5031
        %v5052 = vunpack.c.l.b16 %v5032
        %v5053 = vunpack.c.l.b16 %v5033
        %v5054 = vunpack.c.l.b16 %v5034
        %v5055 = vunpack.c.l.b16 %v5035
        %v5056 = vpack.c.b16 %v5049, %v5048
        %v5057 = vpack.c.b16 %v5051, %v5050
        %v5058 = vpack.c.b16 %v5053, %v5052
        %v5059 = vpack.c.b16 %v5055, %v5054
        %vm5064 = vcmask 523264
        %v5066 = vsel %vm5064, %v5027, 0
        %5068 = vmatprep.subr.bf16.mxu0 0
        %5069 = vmatpush1.bf16.msra.mxu0 %v5056
        %5070 = vmatprep.subr.bf16.mxu0 0
        %5071 = vmatpush1.bf16.msra.mxu0 %v5057
        %5072 = vmatprep.subr.bf16.mxu0 0
        %5073 = vmatpush1.bf16.msra.mxu0 %v5058
        %5074 = vmatprep.subr.bf16.mxu0 0
        %5075 = vmatpush1.bf16.msra.mxu0 %v5059
        %5076 = vmatprep.subr.bf16.mxu0 0
        %5077 = vmatpush1.bf16.msra.mxu0 0
        %5078 = vmatprep.subr.bf16.mxu0 0
        %5079 = vmatpush1.bf16.msra.mxu0 0
        %5080 = vmatprep.subr.bf16.mxu0 0
        %5081 = vmatpush1.bf16.msra.mxu0 0
        %5082 = vmatprep.subr.bf16.mxu0 0
        %5083 = vmatpush1.bf16.msra.mxu0 0
        %5084 = vmatprep.subr.bf16.mxu0 0
        %5085 = vmatpush1.bf16.msra.mxu0 0
        %5086 = vmatprep.subr.bf16.mxu0 0
        %5087 = vmatpush1.bf16.msra.mxu0 0
        %5088 = vmatprep.subr.bf16.mxu0 0
        %5089 = vmatpush1.bf16.msra.mxu0 0
        %5090 = vmatprep.subr.bf16.mxu0 0
        %5091 = vmatpush1.bf16.msra.mxu0 0
        %5092 = vmatprep.subr.bf16.mxu0 0
        %5093 = vmatpush1.bf16.msra.mxu0 0
        %5094 = vmatprep.subr.bf16.mxu0 0
        %5095 = vmatpush1.bf16.msra.mxu0 0
        %5096 = vmatprep.subr.bf16.mxu0 0
        %5097 = vmatpush1.bf16.msra.mxu0 0
        %5098 = vmatprep.subr.bf16.mxu0 0
        %5099 = vmatpush1.bf16.msra.mxu0 0
        %5100 = vmatprep.mubr.bf16.mxu0 0
        %5101 = vmatmul.mubr.bf16.gmra.mrb[0].mxu0 %v5066
        %v5102 = vpop.f32.mrb[0].mxu0
        %v5103 = vadd.f32 %v5039, %v5102
        %v5104 = vpop.f32.mrb[0].mxu0
        %v5105 = vpop.f32.mrb[0].mxu0
        %v5106 = vadd.f32 %v5039, %v5105
        %v5107 = vpop.f32.mrb[0].mxu0
        %5108 = vdwg.mxu0
        %v5109 = vadd.f32 %v4958, %v5103
        %v5110 = vadd.f32 %v4959, %v5106
        %v5111 = vsel %vm820, %v5109, 0.0
        %5112 = vadd.xlane.f32.xlu0 %v5111
        %v5113 = vpop.xlane.xlu0 %5112
        %v5114 = vsel %vm820, %v5110, 0.0
        %5115 = vadd.xlane.f32.xlu0 %v5114
        %v5116 = vpop.xlane.xlu0 %5115
        %v5117 = vmul.f32 %v5113, %v4927
        %v5118 = vmul.f32 %v5116, %v4927
        %v5119 = vsub.f32 %v5109, %v5117
        %v5120 = vsub.f32 %v5110, %v5118
        %v5121 = vmul.f32 %v5119, %v5119
        %v5122 = vmul.f32 %v5120, %v5120
        %v5123 = vsel %vm820, %v5121, 0.0
        %5124 = vadd.xlane.f32.xlu0 %v5123
        %v5125 = vpop.xlane.xlu0 %5124
        %v5126 = vsel %vm820, %v5122, 0.0
        %5127 = vadd.xlane.f32.xlu0 %v5126
        %v5128 = vpop.xlane.xlu0 %5127
        %v5129 = vmul.f32 %v5125, %v4927
        %v5130 = vmul.f32 %v5128, %v4927
        %v5131 = vadd.f32 %v5129, 1e-05
        %v5132 = vadd.f32 %v5130, 1e-05
        %v5133 = vrsqrt.pop %v5131
        %v5134 = vrsqrt.pop %v5132
        %v5135 = vmul.f32 %v5119, %v5133
        %v5136 = vmul.f32 %v5120, %v5134
        %v5137 = vlaneseq
        %v5138 = vshrl.u32 %v5137, 7
        %v5139 = vsub.s32 6, %v5138
        %v5140 = vrot.slane %v798, %v5139
        %v5141 = vmul.f32 %v5135, %v5140
        %v5142 = vmul.f32 %v5136, %v5140
        %v5143 = vlaneseq
        %v5144 = vshrl.u32 %v5143, 7
        %v5145 = vsub.s32 7, %v5144
        %v5146 = vrot.slane %v798, %v5145
        %v5147 = vadd.f32 %v5141, %v5146
        %v5148 = vadd.f32 %v5142, %v5146
        %5149 = vst.msk [vmem:[#allocation2] sm:$0xff] %vm820, %v5147
        %5150 = vst.msk [vmem:[#allocation2 + $0x8] sm:$0xff] %vm820, %v5148
        %p5151 = scmp.eq.s32.totalorder %s31, 1
        // Predicated region
        $region81: #{tpu_custom_call.1} parent=71 // pred_check
          %p5152 = pneg %p5151
        $region82: #{tpu_custom_call.1} parent=71 // pred_check_branch
          %5154 = sbr.rel (%p5152) target = $region84
        $region83: #{tpu_custom_call.1} parent=71 // pred_region
          %v5155 = vld [vmem:[%s9] sm:$0x1]
          %v5156 = vld [vmem:[%s10] sm:$0x1]
          %v5157 = vsel %vm820, %v5147, 0.0
          %5158 = vadd.xlane.f32.xlu0 %v5157
          %v5159 = vpop.xlane.xlu0 %5158
          %v5160 = vsel %vm820, %v5148, 0.0
          %5161 = vadd.xlane.f32.xlu0 %v5160
          %v5162 = vpop.xlane.xlu0 %5161
          %v5163 = vmul.f32 %v5159, %v4927
          %v5164 = vmul.f32 %v5162, %v4927
          %v5165 = vsub.f32 %v5147, %v5163
          %v5166 = vsub.f32 %v5148, %v5164
          %v5167 = vmul.f32 %v5165, %v5165
          %v5168 = vmul.f32 %v5166, %v5166
          %v5169 = vsel %vm820, %v5167, 0.0
          %5170 = vadd.xlane.f32.xlu0 %v5169
          %v5171 = vpop.xlane.xlu0 %5170
          %v5172 = vsel %vm820, %v5168, 0.0
          %5173 = vadd.xlane.f32.xlu0 %v5172
          %v5174 = vpop.xlane.xlu0 %5173
          %v5175 = vmul.f32 %v5171, %v4927
          %v5176 = vmul.f32 %v5174, %v4927
          %v5177 = vadd.f32 %v5175, 1e-05
          %v5178 = vadd.f32 %v5176, 1e-05
          %v5179 = vrsqrt.pop %v5177
          %v5180 = vrsqrt.pop %v5178
          %v5181 = vmul.f32 %v5165, %v5179
          %v5182 = vmul.f32 %v5166, %v5180
          %v5184 = vlaneseq
          %v5185 = vshrl.u32 %v5184, 7
          %v5186 = vsub.s32 0, %v5185
          %v5187 = vrot.slane %v5155, %v5186
          %v5189 = vmul.f32 %v5181, %v5187
          %v5190 = vmul.f32 %v5182, %v5187
          %v5192 = vlaneseq
          %v5193 = vshrl.u32 %v5192, 7
          %v5194 = vsub.s32 0, %v5193
          %v5195 = vrot.slane %v5156, %v5194
          %v5197 = vadd.f32 %v5189, %v5195
          %v5198 = vadd.f32 %v5190, %v5195
          %v5201 = vcombine.high %v5197, %v5197
          %v5203 = vunpack.c.l.s4 1983009808
          %v5204 = vunpack.c.0.s8 %v5203
          %v5205 = vlaneseq
          %v5206 = vshrl.u32 %v5205, 7
          %v5207 = vsub.s32 %v5204, %v5206
          %v5208 = vrot.slane %v5197, %v5207
          %v5210 = vunpack.c.l.s4 1983009808
          %v5211 = vunpack.c.0.s8 %v5210
          %v5212 = vlaneseq
          %v5213 = vshrl.u32 %v5212, 7
          %v5214 = vsub.s32 %v5211, %v5213
          %v5215 = vrot.slane %v5201, %v5214
          %v5216 = vcombine.high %v5208, %v5208
          %v5217 = vcombine.high %v5215, %v5215
          %v5218 = vcombine.high %v5198, %v5198
          %v5220 = vunpack.c.l.s4 1983009808
          %v5221 = vunpack.c.0.s8 %v5220
          %v5222 = vlaneseq
          %v5223 = vshrl.u32 %v5222, 7
          %v5224 = vsub.s32 %v5221, %v5223
          %v5225 = vrot.slane %v5198, %v5224
          %v5227 = vunpack.c.l.s4 1983009808
          %v5228 = vunpack.c.0.s8 %v5227
          %v5229 = vlaneseq
          %v5230 = vshrl.u32 %v5229, 7
          %v5231 = vsub.s32 %v5228, %v5230
          %v5232 = vrot.slane %v5218, %v5231
          %v5233 = vcombine.high %v5225, %v5225
          %v5234 = vcombine.high %v5232, %v5232
          %vm5243 = vcmask 254976
          %v5244 = vsel %vm5243, %v5208, 0.0
          %v5245 = vsel %vm5243, %v5216, 0.0
          %v5246 = vadd.f32 %v5244, %v5245
          %v5247 = vsel %vm5243, %v5215, 0.0
          %v5248 = vadd.f32 %v5246, %v5247
          %v5249 = vsel %vm5243, %v5217, 0.0
          %v5250 = vadd.f32 %v5248, %v5249
          %v5251 = vsel %vm5243, %v5225, 0.0
          %v5252 = vadd.f32 %v5250, %v5251
          %v5253 = vsel %vm5243, %v5233, 0.0
          %v5254 = vadd.f32 %v5252, %v5253
          %v5255 = vsel %vm5243, %v5232, 0.0
          %v5256 = vadd.f32 %v5254, %v5255
          %v5257 = vsel %vm5243, %v5234, 0.0
          %v5258 = vadd.f32 %v5256, %v5257
          %v5259 = vpack.c.bf16 %v5258, %v5258
          %v5260 = vld [vmem:[%s11] sm:$0xf]
          %v5261 = vld [vmem:[%s11 + $0x4] sm:$0xf]
          %v5262 = vld [vmem:[%s11 + $0x8] sm:$0xf]
          %v5263 = vld [vmem:[%s11 + $0xc] sm:$0xf]
          %v5264 = vld [vmem:[%s12] sm:$0x1]
          %v5265 = vmul.f32 %v5264, 8.0
          %v5267 = vlaneseq
          %v5268 = vshrl.u32 %v5267, 7
          %v5269 = vsub.s32 0, %v5268
          %v5270 = vrot.slane %v5265, %v5269
          %v5276 = vunpack.c.l.b16 %v5260
          %v5277 = vunpack.c.l.b16 %v5261
          %v5278 = vunpack.c.l.b16 %v5262
          %v5279 = vunpack.c.l.b16 %v5263
          %v5280 = vpack.c.b16 %v5277, %v5276
          %v5281 = vpack.c.b16 %v5279, %v5278
          %v5285 = vsel %vm820, %v5259, 0
          %5287 = vmatprep.subr.bf16.mxu0 0
          %5288 = vmatpush1.bf16.msra.mxu0 %v5280
          %5289 = vmatprep.subr.bf16.mxu0 0
          %5290 = vmatpush1.bf16.msra.mxu0 %v5281
          %5291 = vmatprep.subr.bf16.mxu0 0
          %5292 = vmatpush1.bf16.msra.mxu0 0
          %5293 = vmatprep.subr.bf16.mxu0 0
          %5294 = vmatpush1.bf16.msra.mxu0 0
          %5295 = vmatprep.subr.bf16.mxu0 0
          %5296 = vmatpush1.bf16.msra.mxu0 0
          %5297 = vmatprep.subr.bf16.mxu0 0
          %5298 = vmatpush1.bf16.msra.mxu0 0
          %5299 = vmatprep.subr.bf16.mxu0 0
          %5300 = vmatpush1.bf16.msra.mxu0 0
          %5301 = vmatprep.subr.bf16.mxu0 0
          %5302 = vmatpush1.bf16.msra.mxu0 0
          %5303 = vmatprep.subr.bf16.mxu0 0
          %5304 = vmatpush1.bf16.msra.mxu0 0
          %5305 = vmatprep.subr.bf16.mxu0 0
          %5306 = vmatpush1.bf16.msra.mxu0 0
          %5307 = vmatprep.subr.bf16.mxu0 0
          %5308 = vmatpush1.bf16.msra.mxu0 0
          %5309 = vmatprep.subr.bf16.mxu0 0
          %5310 = vmatpush1.bf16.msra.mxu0 0
          %5311 = vmatprep.subr.bf16.mxu0 0
          %5312 = vmatpush1.bf16.msra.mxu0 0
          %5313 = vmatprep.subr.bf16.mxu0 0
          %5314 = vmatpush1.bf16.msra.mxu0 0
          %5315 = vmatprep.subr.bf16.mxu0 0
          %5316 = vmatpush1.bf16.msra.mxu0 0
          %5317 = vmatprep.subr.bf16.mxu0 0
          %5318 = vmatpush1.bf16.msra.mxu0 0
          %5319 = vmatprep.mubr.bf16.mxu0 0
          %5320 = vmatmul.mubr.bf16.gmra.mrb[0].mxu0 %v5285
          %v5321 = vpop.f32.mrb[0].mxu0
          %v5322 = vadd.f32 %v5270, %v5321
          %v5323 = vpop.f32.mrb[0].mxu0
          %v5324 = vpop.f32.mrb[0].mxu0
          %v5325 = vpop.f32.mrb[0].mxu0
          %5326 = vdwg.mxu0
          %vm5327 = vcmask 25600
          %5328 = vst.msk [vmem:[#allocation6] sm:$0x3] %vm5327, %v5322
        $region84: #{tpu_custom_call.1} parent=71 // pred_fallthru
          _
        // Predicated region
        $region85: #{tpu_custom_call.1} parent=71 // pred_check
          %p5329 = pneg %p364
        $region86: #{tpu_custom_call.1} parent=71 // pred_check_branch
          %5331 = sbr.rel (%p5329) target = $region88
        $region87: #{tpu_custom_call.1} parent=71 // pred_region
          %s5333 = ssub.s32 32, 32
          %5334 = vsyncadd [#allocation5], %s5333
          %s5335 = smul.addr %s30, 32
          %s5336 = scalar_lea.hbm %s13, %s5335
          %s5338 = sshll.u32 [#allocation6], 4
          %s5339 = int_to_ptr.vmem [resolvable:$true] %s5338
          %5341 = dma.vmem_to_hbm [thread:$0]  %s5339, 32, %s5336, [#allocation5]
        $region88: #{tpu_custom_call.1} parent=71 // pred_fallthru
          _
        // Predicated region
        $region89: #{tpu_custom_call.1} parent=71 // pred_check
          %p5342 = pneg %p364
        $region90: #{tpu_custom_call.1} parent=71 // pred_check_branch
          %5344 = sbr.rel (%p5342) target = $region92
        $region91: #{tpu_custom_call.1} parent=71 // pred_region
          %5345 = dma.done [#allocation5], 32
        $region92: #{tpu_custom_call.1} parent=71 // pred_fallthru
          _
      $region72: #{tpu_custom_call.1} parent=5 // pred_fallthru
        _
      %p5346 = scmp.le.s32.totalorder 2, %s21
      // Predicated region
      $region93: #{tpu_custom_call.1} parent=5 // pred_check
        %p5347 = pneg %p5346
      $region94: #{tpu_custom_call.1} parent=5 // pred_check_branch
        %5349 = sbr.rel (%p5347) target = $region96
      $region95: #{tpu_custom_call.1} parent=5 // pred_region
        %s5350 = ssub.s32 %s21, 2
      $region96: #{tpu_custom_call.1} parent=5 // pred_fallthru
        _
    $region6: #{tpu_custom_call.1} parent=1 // loop_footer
      %s25 = sadd.s32 1, %s21
    $region7: #{tpu_custom_call.1} parent=1 // loop_footer_branch
      %20 = sbr.rel target = $region3
    $region8: #{tpu_custom_call.1} parent=1 // loop_exit
      _
    %5351 = vsyncpa [#allocation4], 1
    %s5352 = scalar_lea.sflag [#allocation4], 1
    %5353 = vsyncpa %s5352, 1
    %5354 = vsyncpa [#allocation5], 1
    %s5355 = scalar_lea.sflag [#allocation5], 1
    %5356 = vsyncpa %s5355, 1

</llo_original>
